<compile_context>
chip_gen: v5e
topology: v5e:2x2
jax: 0.10.0
libtpu: 0.0.40
codegen_flags: <defaults>
</compile_context>

<pallas_src>
import functools

import jax
import jax.numpy as jnp
from jax.experimental import pallas as pl
from jax.experimental.pallas import tpu as pltpu

Z_DIM = 20
IN_DIM = 784
HID_DIM = 400
HEAD_DIM = 128          # fused [mu | logvar] head, zero-padded to a full lane width


def _round_up(n, m):
    return (n + m - 1) // m * m


def _vae_kernel(x_ref, eps_ref,
                w1_ref, b1_ref,
                w2_ref, b2_ref,          # fused+padded fc21|fc22: (400, 128), (1, 128)
                w3_ref, b3_ref,
                w4_ref, b4_ref,
                recon_ref, mulv_ref):
    # ---- encoder ----
    x = x_ref[...].astype(jnp.bfloat16)                                # in-kernel cast (VPU)
    h1 = jnp.dot(x, w1_ref[...], preferred_element_type=jnp.float32) + b1_ref[...]
    h1 = jnp.maximum(h1, 0.0)                                          # (bt, 400) f32

    # mu/logvar head stays fully fp32: ~1% of FLOPs, and logvar feeds exp().
    mulv = jnp.dot(h1, w2_ref[...],
                   preferred_element_type=jnp.float32) + b2_ref[...]   # (bt, 128) f32
    mu = mulv[:, :Z_DIM]
    logvar = mulv[:, Z_DIM:2 * Z_DIM]

    # ---- reparameterize (fp32) ----
    # Padded batch rows carry bias-only values here; exp() stays finite and the
    # wrapper slices them off.
    std = jnp.exp(0.5 * logvar)
    z = mu + eps_ref[...] * std                                        # (bt, Z) f32

    # ---- decoder ----
    h3 = jnp.dot(z.astype(jnp.bfloat16), w3_ref[...],
                 preferred_element_type=jnp.float32) + b3_ref[...]
    h3 = jnp.maximum(h3, 0.0)                                          # (bt, 400) f32

    logits = jnp.dot(h3.astype(jnp.bfloat16), w4_ref[...],
                     preferred_element_type=jnp.float32) + b4_ref[...]
    recon_ref[...] = jax.nn.sigmoid(logits).astype(recon_ref.dtype)    # (bt, 784) bf16
    mulv_ref[...] = mulv.astype(mulv_ref.dtype)                        # (bt, 128) f32


def pack_params(params):
    """Fuse fc21/fc22 into one 128-lane head (zero-padded).  fc1/fc3/fc4 weight
    matrices are cast to bf16; the head weights and all biases stay fp32."""
    (w1, b1, w21, b21, w22, b22, w3, b3, w4, b4) = params
    pad = HEAD_DIM - 2 * Z_DIM
    w2 = jnp.concatenate(
        [w21, w22, jnp.zeros((HID_DIM, pad), jnp.float32)], axis=1)    # (400, 128)
    b2 = jnp.concatenate(
        [b21, b22, jnp.zeros((1, pad), jnp.float32)], axis=1)          # (1, 128)
    bf = lambda w: w.astype(jnp.bfloat16)
    f32 = lambda a: a.astype(jnp.float32)
    return (bf(w1), f32(b1), f32(w2), f32(b2), bf(w3), f32(b3), bf(w4), f32(b4))


def vae_forward(x, params, eps, *, batch_tile=512):
    """x: (B, 1, 28, 28) or (B, 784). Returns (recon[bf16], mu[f32], logvar[f32])."""
    x2 = x.reshape(-1, IN_DIM).astype(jnp.float32)   # no wrapper-side bf16 copy
    eps = eps.astype(jnp.float32)
    B = x2.shape[0]

    # Batch tile: <= batch_tile, multiple of 16 (bf16 sublane packing), never
    # larger than the rounded-up batch.
    bt = max(16, _round_up(min(batch_tile, _round_up(B, 16)), 16))
    # v7x megacore: if the whole (padded) batch fits in a single tile but the
    # batch is big enough to split, use two tiles so both TensorCores get work.
    if B >= 32 and _round_up(B, bt) == bt:
        bt = _round_up((_round_up(B, 16) + 1) // 2, 16)
    B_pad = _round_up(B, bt)

    if B_pad != B:
        x2 = jnp.pad(x2, ((0, B_pad - B), (0, 0)))
        eps = jnp.pad(eps, ((0, B_pad - B), (0, 0)))

    w1, b1, w2, b2, w3, b3, w4, b4 = pack_params(params)

    # Weights/biases are replicated full-array blocks with a constant index_map,
    # so they are DMA'd once and stay resident in VMEM (~1.5 MB total).
    def rep(arr):
        return pl.BlockSpec(arr.shape, lambda i: (0,) * arr.ndim)

    grid = (B_pad // bt,)

    recon, mulv = pl.pallas_call(
        _vae_kernel,
        out_shape=(
            jax.ShapeDtypeStruct((B_pad, IN_DIM), jnp.bfloat16),
            jax.ShapeDtypeStruct((B_pad, HEAD_DIM), jnp.float32),
        ),
        grid_spec=pltpu.PrefetchScalarGridSpec(
            num_scalar_prefetch=0,
            grid=grid,
            in_specs=[
                pl.BlockSpec((bt, IN_DIM), lambda i: (i, 0)),    # x (f32)
                pl.BlockSpec((bt, Z_DIM), lambda i: (i, 0)),     # eps (f32)
                rep(w1), rep(b1),
                rep(w2), rep(b2),
                rep(w3), rep(b3),
                rep(w4), rep(b4),
            ],
            out_specs=[
                pl.BlockSpec((bt, IN_DIM), lambda i: (i, 0)),      # recon (bf16)
                pl.BlockSpec((bt, HEAD_DIM), lambda i: (i, 0)),    # [mu | logvar | 0]
            ],
        ),
        compiler_params=pltpu.CompilerParams(
            dimension_semantics=("parallel",),
            vmem_limit_bytes=32 * 1024 * 1024,
        ),
    )(x2, eps, w1, b1, w2, b2, w3, b3, w4, b4)

    recon = recon[:B]                      # bf16 (feed to downstream BCE directly)
    mu = mulv[:B, :Z_DIM]
    logvar = mulv[:B, Z_DIM:2 * Z_DIM]
    return recon, mu, logvar


def init_params(key):
    """PyTorch nn.Linear-style init (uniform(-1/sqrt(in), 1/sqrt(in))).
    Weights stored transposed: (in_features, out_features)."""
    def linear(key, fan_in, fan_out):
        kw, kb = jax.random.split(key)
        bound = 1.0 / jnp.sqrt(fan_in)
        w = jax.random.uniform(kw, (fan_in, fan_out), jnp.float32, -bound, bound)
        b = jax.random.uniform(kb, (1, fan_out), jnp.float32, -bound, bound)
        return w, b

    k1, k21, k22, k3, k4 = jax.random.split(key, 5)
    w1, b1 = linear(k1, IN_DIM, HID_DIM)       # fc1:  784 -> 400
    w21, b21 = linear(k21, HID_DIM, Z_DIM)     # fc21: 400 -> 20
    w22, b22 = linear(k22, HID_DIM, Z_DIM)     # fc22: 400 -> 20
    w3, b3 = linear(k3, Z_DIM, HID_DIM)        # fc3:  20  -> 400
    w4, b4 = linear(k4, HID_DIM, IN_DIM)       # fc4:  400 -> 784
    return (w1, b1, w21, b21, w22, b22, w3, b3, w4, b4)


def _reference_forward(x, params, eps):
    """Pure-JAX fp32 reference for correctness checking."""
    (w1, b1, w21, b21, w22, b22, w3, b3, w4, b4) = params
    x2 = x.reshape(-1, IN_DIM).astype(jnp.float32)
    h1 = jnp.maximum(x2 @ w1 + b1, 0.0)
    mu = h1 @ w21 + b21
    logvar = h1 @ w22 + b22
    z = mu + eps * jnp.exp(0.5 * logvar)
    h3 = jnp.maximum(z @ w3 + b3, 0.0)
    recon = jax.nn.sigmoid(h3 @ w4 + b4)
    return recon, mu, logvar


if __name__ == "__main__":
    key = jax.random.PRNGKey(0)
    kparam, kx, keps = jax.random.split(key, 3)

    B = 8  # small batch; MNIST image shape (B, 1, 28, 28)
    x = jax.random.uniform(kx, (B, 1, 28, 28), jnp.float32)  # pixel-like in [0,1)
    params = init_params(kparam)
    eps = jax.random.normal(keps, (B, Z_DIM), jnp.float32)   # torch.randn_like(std)

    fwd = jax.jit(functools.partial(vae_forward, batch_tile=512))
    recon, mu, logvar = jax.block_until_ready(fwd(x, params, eps))

    # Sanity check against pure-JAX fp32 reference (kernel uses bf16 matmul
    # operands for fc1/fc3/fc4 with fp32 accumulation and emits recon in bf16,
    # so tolerances are relaxed accordingly).
    r_ref, mu_ref, lv_ref = _reference_forward(x, params, eps)
    assert recon.shape == (B, IN_DIM) and recon.dtype == jnp.bfloat16
    assert mu.shape == (B, Z_DIM) and logvar.shape == (B, Z_DIM)
    recon_f32 = recon.astype(jnp.float32)
    assert bool(jnp.all(jnp.isfinite(recon_f32)))
    assert jnp.allclose(recon_f32, r_ref, atol=3e-2, rtol=3e-2)
    assert jnp.allclose(mu, mu_ref, atol=3e-2, rtol=3e-2)
    assert jnp.allclose(logvar, lv_ref, atol=3e-2, rtol=3e-2)

    print("KERNEL_OK")
</pallas_src>

<mosaic_0001>
module attributes {stable_mosaic.version = 11 : i64} {
  func.func @_vae_kernel(%arg0: i32, %arg1: memref<16x784xf32, #tpu.memory_space<vmem>>, %arg2: memref<16x20xf32, #tpu.memory_space<vmem>>, %arg3: memref<784x400xbf16, #tpu.memory_space<vmem>>, %arg4: memref<1x400xf32, #tpu.memory_space<vmem>>, %arg5: memref<400x128xf32, #tpu.memory_space<vmem>>, %arg6: memref<1x128xf32, #tpu.memory_space<vmem>>, %arg7: memref<20x400xbf16, #tpu.memory_space<vmem>>, %arg8: memref<1x400xf32, #tpu.memory_space<vmem>>, %arg9: memref<400x784xbf16, #tpu.memory_space<vmem>>, %arg10: memref<1x784xf32, #tpu.memory_space<vmem>>, %arg11: memref<16x784xbf16, #tpu.memory_space<vmem>>, %arg12: memref<16x128xf32, #tpu.memory_space<vmem>>) attributes {dimension_semantics = [#tpu.dimension_semantics<parallel>], iteration_bounds = array<i64: 1>, scalar_prefetch = 0 : i64, scratch_operands = 0 : i64, tpu.core_type = #tpu.core_type<tc>, window_params = [{transform_indices = @transform_0, window_bounds = array<i64: 16, 784>}, {transform_indices = @transform_1, window_bounds = array<i64: 16, 20>}, {pipeline_mode = #tpu.pipeline_mode<synchronous>, transform_indices = @transform_2, window_bounds = array<i64: 784, 400>}, {pipeline_mode = #tpu.pipeline_mode<synchronous>, transform_indices = @transform_3, window_bounds = array<i64: 1, 400>}, {pipeline_mode = #tpu.pipeline_mode<synchronous>, transform_indices = @transform_4, window_bounds = array<i64: 400, 128>}, {pipeline_mode = #tpu.pipeline_mode<synchronous>, transform_indices = @transform_5, window_bounds = array<i64: 1, 128>}, {pipeline_mode = #tpu.pipeline_mode<synchronous>, transform_indices = @transform_6, window_bounds = array<i64: 20, 400>}, {pipeline_mode = #tpu.pipeline_mode<synchronous>, transform_indices = @transform_7, window_bounds = array<i64: 1, 400>}, {pipeline_mode = #tpu.pipeline_mode<synchronous>, transform_indices = @transform_8, window_bounds = array<i64: 400, 784>}, {pipeline_mode = #tpu.pipeline_mode<synchronous>, transform_indices = @transform_9, window_bounds = array<i64: 1, 784>}, {transform_indices = @transform_10, window_bounds = array<i64: 16, 784>}, {transform_indices = @transform_11, window_bounds = array<i64: 16, 128>}]} {
    %c0 = arith.constant 0 : index
    %c0_0 = arith.constant 0 : index
    %0 = vector.load %arg1[%c0, %c0_0] : memref<16x784xf32, #tpu.memory_space<vmem>>, vector<16x784xf32>
    %1 = arith.truncf %0 : vector<16x784xf32> to vector<16x784xbf16>
    %c0_1 = arith.constant 0 : index
    %c0_2 = arith.constant 0 : index
    %2 = vector.load %arg3[%c0_1, %c0_2] : memref<784x400xbf16, #tpu.memory_space<vmem>>, vector<784x400xbf16>
    %cst = arith.constant dense<0.000000e+00> : vector<16x400xf32>
    %3 = tpu.matmul %1, %2, %cst {dimension_numbers = #tpu.dot_dimension_numbers<[1], [0], [0], [1], [0, 0, 1, 1], [], []>} : vector<16x784xbf16>, vector<784x400xbf16>, vector<16x400xf32> -> vector<16x400xf32>
    %c0_3 = arith.constant 0 : index
    %c0_4 = arith.constant 0 : index
    %4 = vector.load %arg4[%c0_3, %c0_4] : memref<1x400xf32, #tpu.memory_space<vmem>>, vector<1x400xf32>
    %5 = vector.broadcast %4 : vector<1x400xf32> to vector<16x400xf32>
    %6 = arith.addf %3, %5 : vector<16x400xf32>
    %cst_5 = arith.constant 0.000000e+00 : f32
    %7 = vector.broadcast %cst_5 : f32 to vector<16x400xf32>
    %8 = arith.maximumf %6, %7 : vector<16x400xf32>
    %c0_6 = arith.constant 0 : index
    %c0_7 = arith.constant 0 : index
    %9 = vector.load %arg5[%c0_6, %c0_7] : memref<400x128xf32, #tpu.memory_space<vmem>>, vector<400x128xf32>
    %cst_8 = arith.constant dense<0.000000e+00> : vector<16x128xf32>
    %10 = tpu.matmul %8, %9, %cst_8 {dimension_numbers = #tpu.dot_dimension_numbers<[1], [0], [0], [1], [0, 0, 1, 1], [], []>} : vector<16x400xf32>, vector<400x128xf32>, vector<16x128xf32> -> vector<16x128xf32>
    %c0_9 = arith.constant 0 : index
    %c0_10 = arith.constant 0 : index
    %11 = vector.load %arg6[%c0_9, %c0_10] : memref<1x128xf32, #tpu.memory_space<vmem>>, vector<1x128xf32>
    %12 = vector.broadcast %11 : vector<1x128xf32> to vector<16x128xf32>
    %13 = arith.addf %10, %12 : vector<16x128xf32>
    %14 = vector.extract_strided_slice %13 {offsets = [0, 0], sizes = [16, 20], strides = [1, 1]} : vector<16x128xf32> to vector<16x20xf32>
    %15 = vector.extract_strided_slice %13 {offsets = [0, 20], sizes = [16, 20], strides = [1, 1]} : vector<16x128xf32> to vector<16x20xf32>
    %cst_11 = arith.constant 5.000000e-01 : f32
    %16 = vector.broadcast %cst_11 : f32 to vector<16x20xf32>
    %17 = arith.mulf %16, %15 : vector<16x20xf32>
    %18 = math.exp %17 : vector<16x20xf32>
    %c0_12 = arith.constant 0 : index
    %c0_13 = arith.constant 0 : index
    %19 = vector.load %arg2[%c0_12, %c0_13] : memref<16x20xf32, #tpu.memory_space<vmem>>, vector<16x20xf32>
    %20 = arith.mulf %19, %18 : vector<16x20xf32>
    %21 = arith.addf %14, %20 : vector<16x20xf32>
    %22 = arith.truncf %21 : vector<16x20xf32> to vector<16x20xbf16>
    %c0_14 = arith.constant 0 : index
    %c0_15 = arith.constant 0 : index
    %23 = vector.load %arg7[%c0_14, %c0_15] : memref<20x400xbf16, #tpu.memory_space<vmem>>, vector<20x400xbf16>
    %cst_16 = arith.constant dense<0.000000e+00> : vector<16x400xf32>
    %24 = tpu.matmul %22, %23, %cst_16 {dimension_numbers = #tpu.dot_dimension_numbers<[1], [0], [0], [1], [0, 0, 1, 1], [], []>} : vector<16x20xbf16>, vector<20x400xbf16>, vector<16x400xf32> -> vector<16x400xf32>
    %c0_17 = arith.constant 0 : index
    %c0_18 = arith.constant 0 : index
    %25 = vector.load %arg8[%c0_17, %c0_18] : memref<1x400xf32, #tpu.memory_space<vmem>>, vector<1x400xf32>
    %26 = vector.broadcast %25 : vector<1x400xf32> to vector<16x400xf32>
    %27 = arith.addf %24, %26 : vector<16x400xf32>
    %cst_19 = arith.constant 0.000000e+00 : f32
    %28 = vector.broadcast %cst_19 : f32 to vector<16x400xf32>
    %29 = arith.maximumf %27, %28 : vector<16x400xf32>
    %30 = arith.truncf %29 : vector<16x400xf32> to vector<16x400xbf16>
    %c0_20 = arith.constant 0 : index
    %c0_21 = arith.constant 0 : index
    %31 = vector.load %arg9[%c0_20, %c0_21] : memref<400x784xbf16, #tpu.memory_space<vmem>>, vector<400x784xbf16>
    %cst_22 = arith.constant dense<0.000000e+00> : vector<16x784xf32>
    %32 = tpu.matmul %30, %31, %cst_22 {dimension_numbers = #tpu.dot_dimension_numbers<[1], [0], [0], [1], [0, 0, 1, 1], [], []>} : vector<16x400xbf16>, vector<400x784xbf16>, vector<16x784xf32> -> vector<16x784xf32>
    %c0_23 = arith.constant 0 : index
    %c0_24 = arith.constant 0 : index
    %33 = vector.load %arg10[%c0_23, %c0_24] : memref<1x784xf32, #tpu.memory_space<vmem>>, vector<1x784xf32>
    %34 = vector.broadcast %33 : vector<1x784xf32> to vector<16x784xf32>
    %35 = arith.addf %32, %34 : vector<16x784xf32>
    %36 = arith.negf %35 : vector<16x784xf32>
    %37 = math.exp %36 : vector<16x784xf32>
    %cst_25 = arith.constant 1.000000e+00 : f32
    %38 = vector.broadcast %cst_25 : f32 to vector<16x784xf32>
    %39 = arith.addf %38, %37 : vector<16x784xf32>
    %40 = arith.divf %38, %39 : vector<16x784xf32>
    %41 = arith.truncf %40 : vector<16x784xf32> to vector<16x784xbf16>
    %c0_26 = arith.constant 0 : index
    %c0_27 = arith.constant 0 : index
    %42 = vector.load %arg11[%c0_26, %c0_27] : memref<16x784xbf16, #tpu.memory_space<vmem>>, vector<16x784xbf16>
    tpu.vector_store %arg11[%c0_26, %c0_27], %41 {strides = array<i32>} : memref<16x784xbf16, #tpu.memory_space<vmem>>, vector<16x784xbf16>,
    %c0_28 = arith.constant 0 : index
    %c0_29 = arith.constant 0 : index
    %43 = vector.load %arg12[%c0_28, %c0_29] : memref<16x128xf32, #tpu.memory_space<vmem>>, vector<16x128xf32>
    tpu.vector_store %arg12[%c0_28, %c0_29], %13 {strides = array<i32>} : memref<16x128xf32, #tpu.memory_space<vmem>>, vector<16x128xf32>,
    return
  }
  func.func @transform_0(%arg0: i32) -> (i32, i32) {
    %c0_i32 = arith.constant 0 : i32
    %c0_i32_0 = arith.constant 0 : i32
    return %arg0, %c0_i32 : i32, i32
  }
  func.func @transform_1(%arg0: i32) -> (i32, i32) {
    %c0_i32 = arith.constant 0 : i32
    %c0_i32_0 = arith.constant 0 : i32
    return %arg0, %c0_i32 : i32, i32
  }
  func.func @transform_2(%arg0: i32) -> (i32, i32) {
    %c0_i32 = arith.constant 0 : i32
    %c0_i32_0 = arith.constant 0 : i32
    %c0_i32_1 = arith.constant 0 : i32
    return %c0_i32, %c0_i32_0 : i32, i32
  }
  func.func @transform_3(%arg0: i32) -> (i32, i32) {
    %c0_i32 = arith.constant 0 : i32
    %c0_i32_0 = arith.constant 0 : i32
    %c0_i32_1 = arith.constant 0 : i32
    return %c0_i32, %c0_i32_0 : i32, i32
  }
  func.func @transform_4(%arg0: i32) -> (i32, i32) {
    %c0_i32 = arith.constant 0 : i32
    %c0_i32_0 = arith.constant 0 : i32
    %c0_i32_1 = arith.constant 0 : i32
    return %c0_i32, %c0_i32_0 : i32, i32
  }
  func.func @transform_5(%arg0: i32) -> (i32, i32) {
    %c0_i32 = arith.constant 0 : i32
    %c0_i32_0 = arith.constant 0 : i32
    %c0_i32_1 = arith.constant 0 : i32
    return %c0_i32, %c0_i32_0 : i32, i32
  }
  func.func @transform_6(%arg0: i32) -> (i32, i32) {
    %c0_i32 = arith.constant 0 : i32
    %c0_i32_0 = arith.constant 0 : i32
    %c0_i32_1 = arith.constant 0 : i32
    return %c0_i32, %c0_i32_0 : i32, i32
  }
  func.func @transform_7(%arg0: i32) -> (i32, i32) {
    %c0_i32 = arith.constant 0 : i32
    %c0_i32_0 = arith.constant 0 : i32
    %c0_i32_1 = arith.constant 0 : i32
    return %c0_i32, %c0_i32_0 : i32, i32
  }
  func.func @transform_8(%arg0: i32) -> (i32, i32) {
    %c0_i32 = arith.constant 0 : i32
    %c0_i32_0 = arith.constant 0 : i32
    %c0_i32_1 = arith.constant 0 : i32
    return %c0_i32, %c0_i32_0 : i32, i32
  }
  func.func @transform_9(%arg0: i32) -> (i32, i32) {
    %c0_i32 = arith.constant 0 : i32
    %c0_i32_0 = arith.constant 0 : i32
    %c0_i32_1 = arith.constant 0 : i32
    return %c0_i32, %c0_i32_0 : i32, i32
  }
  func.func @transform_10(%arg0: i32) -> (i32, i32) {
    %c0_i32 = arith.constant 0 : i32
    %c0_i32_0 = arith.constant 0 : i32
    return %arg0, %c0_i32 : i32, i32
  }
  func.func @transform_11(%arg0: i32) -> (i32, i32) {
    %c0_i32 = arith.constant 0 : i32
    %c0_i32_0 = arith.constant 0 : i32
    return %arg0, %c0_i32 : i32, i32
  }
}

</mosaic_0001>

<llo_original>
// kernel: vae_forward.1
$region0: #{vae_forward.1}
  #allocation0 [shape = 'u32[]', space=smem, size = 0x4, offset = 0x4, fixed_abs, tag = 'smem constant byte address 0x4 - core index']
  #allocation1 [shape = 'u32[72,128]{1,0:T(1,128)}', space=vmem, size = 0x9000, scoped, tag = 'internal scratch']
  %s0 = inlined_call_operand.vmem [shape: f32[16,784], index: 0, kind: input, shape index: {}]
  %s1 = inlined_call_operand.vmem [shape: f32[16,20], index: 1, kind: input, shape index: {}]
  %s2 = inlined_call_operand.vmem [shape: bf16[784,400], index: 2, kind: input, shape index: {}]
  %s3 = inlined_call_operand.vmem [shape: f32[1,400], index: 3, kind: input, shape index: {}]
  %s4 = inlined_call_operand.vmem [shape: f32[400,128], index: 4, kind: input, shape index: {}]
  %s5 = inlined_call_operand.vmem [shape: f32[1,128], index: 5, kind: input, shape index: {}]
  %s6 = inlined_call_operand.vmem [shape: bf16[20,400], index: 6, kind: input, shape index: {}]
  %s7 = inlined_call_operand.vmem [shape: f32[1,400], index: 7, kind: input, shape index: {}]
  %s8 = inlined_call_operand.vmem [shape: bf16[400,784], index: 8, kind: input, shape index: {}]
  %s9 = inlined_call_operand.vmem [shape: f32[1,784], index: 9, kind: input, shape index: {}]
  %s10 = inlined_call_operand.vmem [shape: bf16[16,784], index: 10, kind: output, shape index: {0}]
  %s11 = inlined_call_operand.vmem [shape: f32[16,128], index: 11, kind: output, shape index: {1}]
  %12 = xla_tuple %s10, %s11
  %s13 = sld [smem:[#allocation0]]
  $region58: #{vae_forward.1} parent=0
    _
  %s15 = ssub.s32 1, %s13
  %s16 = scalar_select 0, %s15, %s13
  // Predicated region
  $region2: #{vae_forward.1} parent=0 // pred_check
    _
  $region3: #{vae_forward.1} parent=0 // pred_check_branch
    %18 = sbr.rel (0) target = $region5
  $region4: #{vae_forward.1} parent=0 // pred_region
    _
  $region5: #{vae_forward.1} parent=0 // pred_fallthru
    _
  // Predicated region
  $region6: #{vae_forward.1} parent=0 // pred_check
    _
  $region7: #{vae_forward.1} parent=0 // pred_check_branch
    %20 = sbr.rel (0) target = $region9
  $region8: #{vae_forward.1} parent=0 // pred_region
    _
  $region9: #{vae_forward.1} parent=0 // pred_fallthru
    _
  // Predicated region
  $region10: #{vae_forward.1} parent=0 // pred_check
    _
  $region11: #{vae_forward.1} parent=0 // pred_check_branch
    %22 = sbr.rel (0) target = $region13
  $region12: #{vae_forward.1} parent=0 // pred_region
    _
  $region13: #{vae_forward.1} parent=0 // pred_fallthru
    _
  // Predicated region
  $region14: #{vae_forward.1} parent=0 // pred_check
    _
  $region15: #{vae_forward.1} parent=0 // pred_check_branch
    %24 = sbr.rel (0) target = $region17
  $region16: #{vae_forward.1} parent=0 // pred_region
    _
  $region17: #{vae_forward.1} parent=0 // pred_fallthru
    _
  // Predicated region
  $region18: #{vae_forward.1} parent=0 // pred_check
    _
  $region19: #{vae_forward.1} parent=0 // pred_check_branch
    %26 = sbr.rel (0) target = $region21
  $region20: #{vae_forward.1} parent=0 // pred_region
    _
  $region21: #{vae_forward.1} parent=0 // pred_fallthru
    _
  // Predicated region
  $region22: #{vae_forward.1} parent=0 // pred_check
    _
  $region23: #{vae_forward.1} parent=0 // pred_check_branch
    %28 = sbr.rel (0) target = $region25
  $region24: #{vae_forward.1} parent=0 // pred_region
    _
  $region25: #{vae_forward.1} parent=0 // pred_fallthru
    _
  // Predicated region
  $region26: #{vae_forward.1} parent=0 // pred_check
    _
  $region27: #{vae_forward.1} parent=0 // pred_check_branch
    %30 = sbr.rel (0) target = $region29
  $region28: #{vae_forward.1} parent=0 // pred_region
    _
  $region29: #{vae_forward.1} parent=0 // pred_fallthru
    _
  // Predicated region
  $region30: #{vae_forward.1} parent=0 // pred_check
    _
  $region31: #{vae_forward.1} parent=0 // pred_check_branch
    %32 = sbr.rel (0) target = $region33
  $region32: #{vae_forward.1} parent=0 // pred_region
    _
  $region33: #{vae_forward.1} parent=0 // pred_fallthru
    _
  // Predicated region
  $region34: #{vae_forward.1} parent=0 // pred_check
    _
  $region35: #{vae_forward.1} parent=0 // pred_check_branch
    %34 = sbr.rel (0) target = $region37
  $region36: #{vae_forward.1} parent=0 // pred_region
    _
  $region37: #{vae_forward.1} parent=0 // pred_fallthru
    _
  // Predicated region
  $region38: #{vae_forward.1} parent=0 // pred_check
    _
  $region39: #{vae_forward.1} parent=0 // pred_check_branch
    %36 = sbr.rel (0) target = $region41
  $region40: #{vae_forward.1} parent=0 // pred_region
    _
  $region41: #{vae_forward.1} parent=0 // pred_fallthru
    _
  %v38 = vld [vmem:[%s0] sm:$0xff]
  %v39 = vld [vmem:[%s0 + $0x8] sm:$0xff]
  %v40 = vld [vmem:[%s0 + $0x10] sm:$0xff]
  %v41 = vld [vmem:[%s0 + $0x18] sm:$0xff]
  %v42 = vld [vmem:[%s0 + $0x20] sm:$0xff]
  %v43 = vld [vmem:[%s0 + $0x28] sm:$0xff]
  %v44 = vld [vmem:[%s0 + $0x30] sm:$0xff]
  %v45 = vld [vmem:[%s0 + $0x38] sm:$0xff]
  %v46 = vld [vmem:[%s0 + $0x40] sm:$0xff]
  %v47 = vld [vmem:[%s0 + $0x48] sm:$0xff]
  %v48 = vld [vmem:[%s0 + $0x50] sm:$0xff]
  %v49 = vld [vmem:[%s0 + $0x58] sm:$0xff]
  %v50 = vld [vmem:[%s0 + $0x60] sm:$0xff]
  %v51 = vld [vmem:[%s0 + $0x68] sm:$0xff]
  %v52 = vpack.c.bf16 %v45, %v38
  %v53 = vpack.c.bf16 %v46, %v39
  %v54 = vpack.c.bf16 %v47, %v40
  %v55 = vpack.c.bf16 %v48, %v41
  %v56 = vpack.c.bf16 %v49, %v42
  %v57 = vpack.c.bf16 %v50, %v43
  %v58 = vpack.c.bf16 %v51, %v44
  %v59 = vld [vmem:[%s2] sm:$0xff]
  %v60 = vld [vmem:[%s2 + $0x8] sm:$0xff]
  %v61 = vld [vmem:[%s2 + $0x10] sm:$0xff]
  %v62 = vld [vmem:[%s2 + $0x18] sm:$0xff]
  %v63 = vld [vmem:[%s2 + $0x20] sm:$0xff]
  %v64 = vld [vmem:[%s2 + $0x28] sm:$0xff]
  %v65 = vld [vmem:[%s2 + $0x30] sm:$0xff]
  %v66 = vld [vmem:[%s2 + $0x38] sm:$0xff]
  %v67 = vld [vmem:[%s2 + $0x40] sm:$0xff]
  %v68 = vld [vmem:[%s2 + $0x48] sm:$0xff]
  %v69 = vld [vmem:[%s2 + $0x50] sm:$0xff]
  %v70 = vld [vmem:[%s2 + $0x58] sm:$0xff]
  %v71 = vld [vmem:[%s2 + $0x60] sm:$0xff]
  %v72 = vld [vmem:[%s2 + $0x68] sm:$0xff]
  %v73 = vld [vmem:[%s2 + $0x70] sm:$0xff]
  %v74 = vld [vmem:[%s2 + $0x78] sm:$0xff]
  %v75 = vld [vmem:[%s2 + $0x80] sm:$0xff]
  %v76 = vld [vmem:[%s2 + $0x88] sm:$0xff]
  %v77 = vld [vmem:[%s2 + $0x90] sm:$0xff]
  %v78 = vld [vmem:[%s2 + $0x98] sm:$0xff]
  %v79 = vld [vmem:[%s2 + $0xa0] sm:$0xff]
  %v80 = vld [vmem:[%s2 + $0xa8] sm:$0xff]
  %v81 = vld [vmem:[%s2 + $0xb0] sm:$0xff]
  %v82 = vld [vmem:[%s2 + $0xb8] sm:$0xff]
  %v83 = vld [vmem:[%s2 + $0xc0] sm:$0xff]
  %v84 = vld [vmem:[%s2 + $0xc8] sm:$0xff]
  %v85 = vld [vmem:[%s2 + $0xd0] sm:$0xff]
  %v86 = vld [vmem:[%s2 + $0xd8] sm:$0xff]
  %v87 = vld [vmem:[%s2 + $0xe0] sm:$0xff]
  %v88 = vld [vmem:[%s2 + $0xe8] sm:$0xff]
  %v89 = vld [vmem:[%s2 + $0xf0] sm:$0xff]
  %v90 = vld [vmem:[%s2 + $0xf8] sm:$0xff]
  %v91 = vld [vmem:[%s2 + $0x100] sm:$0xff]
  %v92 = vld [vmem:[%s2 + $0x108] sm:$0xff]
  %v93 = vld [vmem:[%s2 + $0x110] sm:$0xff]
  %v94 = vld [vmem:[%s2 + $0x118] sm:$0xff]
  %v95 = vld [vmem:[%s2 + $0x120] sm:$0xff]
  %v96 = vld [vmem:[%s2 + $0x128] sm:$0xff]
  %v97 = vld [vmem:[%s2 + $0x130] sm:$0xff]
  %v98 = vld [vmem:[%s2 + $0x138] sm:$0xff]
  %v99 = vld [vmem:[%s2 + $0x140] sm:$0xff]
  %v100 = vld [vmem:[%s2 + $0x148] sm:$0xff]
  %v101 = vld [vmem:[%s2 + $0x150] sm:$0xff]
  %v102 = vld [vmem:[%s2 + $0x158] sm:$0xff]
  %v103 = vld [vmem:[%s2 + $0x160] sm:$0xff]
  %v104 = vld [vmem:[%s2 + $0x168] sm:$0xff]
  %v105 = vld [vmem:[%s2 + $0x170] sm:$0xff]
  %v106 = vld [vmem:[%s2 + $0x178] sm:$0xff]
  %v107 = vld [vmem:[%s2 + $0x180] sm:$0xff]
  %v108 = vld [vmem:[%s2 + $0x188] sm:$0xff]
  %v109 = vld [vmem:[%s2 + $0x190] sm:$0xff]
  %v110 = vld [vmem:[%s2 + $0x198] sm:$0xff]
  %v111 = vld [vmem:[%s2 + $0x1a0] sm:$0xff]
  %v112 = vld [vmem:[%s2 + $0x1a8] sm:$0xff]
  %v113 = vld [vmem:[%s2 + $0x1b0] sm:$0xff]
  %v114 = vld [vmem:[%s2 + $0x1b8] sm:$0xff]
  %v115 = vld [vmem:[%s2 + $0x1c0] sm:$0xff]
  %v116 = vld [vmem:[%s2 + $0x1c8] sm:$0xff]
  %v117 = vld [vmem:[%s2 + $0x1d0] sm:$0xff]
  %v118 = vld [vmem:[%s2 + $0x1d8] sm:$0xff]
  %v119 = vld [vmem:[%s2 + $0x1e0] sm:$0xff]
  %v120 = vld [vmem:[%s2 + $0x1e8] sm:$0xff]
  %v121 = vld [vmem:[%s2 + $0x1f0] sm:$0xff]
  %v122 = vld [vmem:[%s2 + $0x1f8] sm:$0xff]
  %v123 = vld [vmem:[%s2 + $0x200] sm:$0xff]
  %v124 = vld [vmem:[%s2 + $0x208] sm:$0xff]
  %v125 = vld [vmem:[%s2 + $0x210] sm:$0xff]
  %v126 = vld [vmem:[%s2 + $0x218] sm:$0xff]
  %v127 = vld [vmem:[%s2 + $0x220] sm:$0xff]
  %v128 = vld [vmem:[%s2 + $0x228] sm:$0xff]
  %v129 = vld [vmem:[%s2 + $0x230] sm:$0xff]
  %v130 = vld [vmem:[%s2 + $0x238] sm:$0xff]
  %v131 = vld [vmem:[%s2 + $0x240] sm:$0xff]
  %v132 = vld [vmem:[%s2 + $0x248] sm:$0xff]
  %v133 = vld [vmem:[%s2 + $0x250] sm:$0xff]
  %v134 = vld [vmem:[%s2 + $0x258] sm:$0xff]
  %v135 = vld [vmem:[%s2 + $0x260] sm:$0xff]
  %v136 = vld [vmem:[%s2 + $0x268] sm:$0xff]
  %v137 = vld [vmem:[%s2 + $0x270] sm:$0xff]
  %v138 = vld [vmem:[%s2 + $0x278] sm:$0xff]
  %v139 = vld [vmem:[%s2 + $0x280] sm:$0xff]
  %v140 = vld [vmem:[%s2 + $0x288] sm:$0xff]
  %v141 = vld [vmem:[%s2 + $0x290] sm:$0xff]
  %v142 = vld [vmem:[%s2 + $0x298] sm:$0xff]
  %v143 = vld [vmem:[%s2 + $0x2a0] sm:$0xff]
  %v144 = vld [vmem:[%s2 + $0x2a8] sm:$0xff]
  %v145 = vld [vmem:[%s2 + $0x2b0] sm:$0xff]
  %v146 = vld [vmem:[%s2 + $0x2b8] sm:$0xff]
  %v147 = vld [vmem:[%s2 + $0x2c0] sm:$0xff]
  %v148 = vld [vmem:[%s2 + $0x2c8] sm:$0xff]
  %v149 = vld [vmem:[%s2 + $0x2d0] sm:$0xff]
  %v150 = vld [vmem:[%s2 + $0x2d8] sm:$0xff]
  %v151 = vld [vmem:[%s2 + $0x2e0] sm:$0xff]
  %v152 = vld [vmem:[%s2 + $0x2e8] sm:$0xff]
  %v153 = vld [vmem:[%s2 + $0x2f0] sm:$0xff]
  %v154 = vld [vmem:[%s2 + $0x2f8] sm:$0xff]
  %v155 = vld [vmem:[%s2 + $0x300] sm:$0xff]
  %v156 = vld [vmem:[%s2 + $0x308] sm:$0xff]
  %v157 = vld [vmem:[%s2 + $0x310] sm:$0xff]
  %v158 = vld [vmem:[%s2 + $0x318] sm:$0xff]
  %v159 = vld [vmem:[%s2 + $0x320] sm:$0xff]
  %v160 = vld [vmem:[%s2 + $0x328] sm:$0xff]
  %v161 = vld [vmem:[%s2 + $0x330] sm:$0xff]
  %v162 = vld [vmem:[%s2 + $0x338] sm:$0xff]
  %v163 = vld [vmem:[%s2 + $0x340] sm:$0xff]
  %v164 = vld [vmem:[%s2 + $0x348] sm:$0xff]
  %v165 = vld [vmem:[%s2 + $0x350] sm:$0xff]
  %v166 = vld [vmem:[%s2 + $0x358] sm:$0xff]
  %v167 = vld [vmem:[%s2 + $0x360] sm:$0xff]
  %v168 = vld [vmem:[%s2 + $0x368] sm:$0xff]
  %v169 = vld [vmem:[%s2 + $0x370] sm:$0xff]
  %v170 = vld [vmem:[%s2 + $0x378] sm:$0xff]
  %v171 = vld [vmem:[%s2 + $0x380] sm:$0xff]
  %v172 = vld [vmem:[%s2 + $0x388] sm:$0xff]
  %v173 = vld [vmem:[%s2 + $0x390] sm:$0xff]
  %v174 = vld [vmem:[%s2 + $0x398] sm:$0xff]
  %v175 = vld [vmem:[%s2 + $0x3a0] sm:$0xff]
  %v176 = vld [vmem:[%s2 + $0x3a8] sm:$0xff]
  %v177 = vld [vmem:[%s2 + $0x3b0] sm:$0xff]
  %v178 = vld [vmem:[%s2 + $0x3b8] sm:$0xff]
  %v179 = vld [vmem:[%s2 + $0x3c0] sm:$0xff]
  %v180 = vld [vmem:[%s2 + $0x3c8] sm:$0xff]
  %v181 = vld [vmem:[%s2 + $0x3d0] sm:$0xff]
  %v182 = vld [vmem:[%s2 + $0x3d8] sm:$0xff]
  %v183 = vld [vmem:[%s2 + $0x3e0] sm:$0xff]
  %v184 = vld [vmem:[%s2 + $0x3e8] sm:$0xff]
  %v185 = vld [vmem:[%s2 + $0x3f0] sm:$0xff]
  %v186 = vld [vmem:[%s2 + $0x3f8] sm:$0xff]
  %v187 = vld [vmem:[%s2 + $0x400] sm:$0xff]
  %v188 = vld [vmem:[%s2 + $0x408] sm:$0xff]
  %v189 = vld [vmem:[%s2 + $0x410] sm:$0xff]
  %v190 = vld [vmem:[%s2 + $0x418] sm:$0xff]
  %v191 = vld [vmem:[%s2 + $0x420] sm:$0xff]
  %v192 = vld [vmem:[%s2 + $0x428] sm:$0xff]
  %v193 = vld [vmem:[%s2 + $0x430] sm:$0xff]
  %v194 = vld [vmem:[%s2 + $0x438] sm:$0xff]
  %v195 = vld [vmem:[%s2 + $0x440] sm:$0xff]
  %v196 = vld [vmem:[%s2 + $0x448] sm:$0xff]
  %v197 = vld [vmem:[%s2 + $0x450] sm:$0xff]
  %v198 = vld [vmem:[%s2 + $0x458] sm:$0xff]
  %v199 = vld [vmem:[%s2 + $0x460] sm:$0xff]
  %v200 = vld [vmem:[%s2 + $0x468] sm:$0xff]
  %v201 = vld [vmem:[%s2 + $0x470] sm:$0xff]
  %v202 = vld [vmem:[%s2 + $0x478] sm:$0xff]
  %v203 = vld [vmem:[%s2 + $0x480] sm:$0xff]
  %v204 = vld [vmem:[%s2 + $0x488] sm:$0xff]
  %v205 = vld [vmem:[%s2 + $0x490] sm:$0xff]
  %v206 = vld [vmem:[%s2 + $0x498] sm:$0xff]
  %v207 = vld [vmem:[%s2 + $0x4a0] sm:$0xff]
  %v208 = vld [vmem:[%s2 + $0x4a8] sm:$0xff]
  %v209 = vld [vmem:[%s2 + $0x4b0] sm:$0xff]
  %v210 = vld [vmem:[%s2 + $0x4b8] sm:$0xff]
  %v211 = vld [vmem:[%s2 + $0x4c0] sm:$0xff]
  %v212 = vld [vmem:[%s2 + $0x4c8] sm:$0xff]
  %v213 = vld [vmem:[%s2 + $0x4d0] sm:$0xff]
  %v214 = vld [vmem:[%s2 + $0x4d8] sm:$0xff]
  %v215 = vld [vmem:[%s2 + $0x4e0] sm:$0xff]
  %v216 = vld [vmem:[%s2 + $0x4e8] sm:$0xff]
  %v217 = vld [vmem:[%s2 + $0x4f0] sm:$0xff]
  %v218 = vld [vmem:[%s2 + $0x4f8] sm:$0xff]
  %v219 = vld [vmem:[%s2 + $0x500] sm:$0xff]
  %v220 = vld [vmem:[%s2 + $0x508] sm:$0xff]
  %v221 = vld [vmem:[%s2 + $0x510] sm:$0xff]
  %v222 = vld [vmem:[%s2 + $0x518] sm:$0xff]
  %v223 = vld [vmem:[%s2 + $0x520] sm:$0xff]
  %v224 = vld [vmem:[%s2 + $0x528] sm:$0xff]
  %v225 = vld [vmem:[%s2 + $0x530] sm:$0xff]
  %v226 = vld [vmem:[%s2 + $0x538] sm:$0xff]
  %v227 = vld [vmem:[%s2 + $0x540] sm:$0xff]
  %v228 = vld [vmem:[%s2 + $0x548] sm:$0xff]
  %v229 = vld [vmem:[%s2 + $0x550] sm:$0xff]
  %v230 = vld [vmem:[%s2 + $0x558] sm:$0xff]
  %v231 = vld [vmem:[%s2 + $0x560] sm:$0xff]
  %v232 = vld [vmem:[%s2 + $0x568] sm:$0xff]
  %v233 = vld [vmem:[%s2 + $0x570] sm:$0xff]
  %v234 = vld [vmem:[%s2 + $0x578] sm:$0xff]
  %v235 = vld [vmem:[%s2 + $0x580] sm:$0xff]
  %v236 = vld [vmem:[%s2 + $0x588] sm:$0xff]
  %v237 = vld [vmem:[%s2 + $0x590] sm:$0xff]
  %v238 = vld [vmem:[%s2 + $0x598] sm:$0xff]
  %v239 = vld [vmem:[%s2 + $0x5a0] sm:$0xff]
  %v240 = vld [vmem:[%s2 + $0x5a8] sm:$0xff]
  %v241 = vld [vmem:[%s2 + $0x5b0] sm:$0xff]
  %v242 = vld [vmem:[%s2 + $0x5b8] sm:$0xff]
  %v243 = vld [vmem:[%s2 + $0x5c0] sm:$0xff]
  %v244 = vld [vmem:[%s2 + $0x5c8] sm:$0xff]
  %v245 = vld [vmem:[%s2 + $0x5d0] sm:$0xff]
  %v246 = vld [vmem:[%s2 + $0x5d8] sm:$0xff]
  %v247 = vld [vmem:[%s2 + $0x5e0] sm:$0xff]
  %v248 = vld [vmem:[%s2 + $0x5e8] sm:$0xff]
  %v249 = vld [vmem:[%s2 + $0x5f0] sm:$0xff]
  %v250 = vld [vmem:[%s2 + $0x5f8] sm:$0xff]
  %v251 = vld [vmem:[%s2 + $0x600] sm:$0xff]
  %v252 = vld [vmem:[%s2 + $0x608] sm:$0xff]
  %v253 = vld [vmem:[%s2 + $0x610] sm:$0xff]
  %v254 = vld [vmem:[%s2 + $0x618] sm:$0xff]
  %v255 = vld [vmem:[%s3] sm:$0xf]
  %v257 = vperm.slane %v255, 0
  %v258 = vperm.slane %v255, 1
  %v259 = vperm.slane %v255, 2
  %v260 = vperm.slane %v255, 3
  %v461 = vunpack.c.l.b16 %v59
  %v462 = vunpack.c.h.b16 %v59
  %v463 = vunpack.c.l.b16 %v60
  %v464 = vunpack.c.h.b16 %v60
  %v465 = vunpack.c.l.b16 %v61
  %v466 = vunpack.c.h.b16 %v61
  %v467 = vunpack.c.l.b16 %v62
  %v468 = vunpack.c.h.b16 %v62
  %v469 = vunpack.c.l.b16 %v63
  %v470 = vunpack.c.h.b16 %v63
  %v471 = vunpack.c.l.b16 %v64
  %v472 = vunpack.c.h.b16 %v64
  %v473 = vunpack.c.l.b16 %v65
  %v474 = vunpack.c.h.b16 %v65
  %v475 = vunpack.c.l.b16 %v66
  %v476 = vunpack.c.h.b16 %v66
  %v477 = vunpack.c.l.b16 %v67
  %v478 = vunpack.c.h.b16 %v67
  %v479 = vunpack.c.l.b16 %v68
  %v480 = vunpack.c.h.b16 %v68
  %v481 = vunpack.c.l.b16 %v69
  %v482 = vunpack.c.h.b16 %v69
  %v483 = vunpack.c.l.b16 %v70
  %v484 = vunpack.c.h.b16 %v70
  %v485 = vunpack.c.l.b16 %v71
  %v486 = vunpack.c.h.b16 %v71
  %v487 = vunpack.c.l.b16 %v72
  %v488 = vunpack.c.h.b16 %v72
  %v489 = vunpack.c.l.b16 %v73
  %v490 = vunpack.c.h.b16 %v73
  %v491 = vunpack.c.l.b16 %v74
  %v492 = vunpack.c.h.b16 %v74
  %v493 = vunpack.c.l.b16 %v75
  %v494 = vunpack.c.h.b16 %v75
  %v495 = vunpack.c.l.b16 %v76
  %v496 = vunpack.c.h.b16 %v76
  %v497 = vunpack.c.l.b16 %v77
  %v498 = vunpack.c.h.b16 %v77
  %v499 = vunpack.c.l.b16 %v78
  %v500 = vunpack.c.h.b16 %v78
  %v501 = vunpack.c.l.b16 %v79
  %v502 = vunpack.c.h.b16 %v79
  %v503 = vunpack.c.l.b16 %v80
  %v504 = vunpack.c.h.b16 %v80
  %v505 = vunpack.c.l.b16 %v81
  %v506 = vunpack.c.h.b16 %v81
  %v507 = vunpack.c.l.b16 %v82
  %v508 = vunpack.c.h.b16 %v82
  %v509 = vunpack.c.l.b16 %v83
  %v510 = vunpack.c.h.b16 %v83
  %v511 = vunpack.c.l.b16 %v84
  %v512 = vunpack.c.h.b16 %v84
  %v513 = vunpack.c.l.b16 %v85
  %v514 = vunpack.c.h.b16 %v85
  %v515 = vunpack.c.l.b16 %v86
  %v516 = vunpack.c.h.b16 %v86
  %v517 = vunpack.c.l.b16 %v87
  %v518 = vunpack.c.h.b16 %v87
  %v519 = vunpack.c.l.b16 %v88
  %v520 = vunpack.c.h.b16 %v88
  %v521 = vunpack.c.l.b16 %v89
  %v522 = vunpack.c.h.b16 %v89
  %v523 = vunpack.c.l.b16 %v90
  %v524 = vunpack.c.h.b16 %v90
  %v525 = vunpack.c.l.b16 %v91
  %v526 = vunpack.c.h.b16 %v91
  %v527 = vunpack.c.l.b16 %v92
  %v528 = vunpack.c.h.b16 %v92
  %v529 = vunpack.c.l.b16 %v93
  %v530 = vunpack.c.h.b16 %v93
  %v531 = vunpack.c.l.b16 %v94
  %v532 = vunpack.c.h.b16 %v94
  %v533 = vunpack.c.l.b16 %v95
  %v534 = vunpack.c.h.b16 %v95
  %v535 = vunpack.c.l.b16 %v96
  %v536 = vunpack.c.h.b16 %v96
  %v537 = vunpack.c.l.b16 %v97
  %v538 = vunpack.c.h.b16 %v97
  %v539 = vunpack.c.l.b16 %v98
  %v540 = vunpack.c.h.b16 %v98
  %v541 = vunpack.c.l.b16 %v99
  %v542 = vunpack.c.h.b16 %v99
  %v543 = vunpack.c.l.b16 %v100
  %v544 = vunpack.c.h.b16 %v100
  %v545 = vunpack.c.l.b16 %v101
  %v546 = vunpack.c.h.b16 %v101
  %v547 = vunpack.c.l.b16 %v102
  %v548 = vunpack.c.h.b16 %v102
  %v549 = vunpack.c.l.b16 %v103
  %v550 = vunpack.c.h.b16 %v103
  %v551 = vunpack.c.l.b16 %v104
  %v552 = vunpack.c.h.b16 %v104
  %v553 = vunpack.c.l.b16 %v105
  %v554 = vunpack.c.h.b16 %v105
  %v555 = vunpack.c.l.b16 %v106
  %v556 = vunpack.c.h.b16 %v106
  %v557 = vunpack.c.l.b16 %v107
  %v558 = vunpack.c.h.b16 %v107
  %v559 = vunpack.c.l.b16 %v108
  %v560 = vunpack.c.h.b16 %v108
  %v561 = vunpack.c.l.b16 %v109
  %v562 = vunpack.c.h.b16 %v109
  %v563 = vunpack.c.l.b16 %v110
  %v564 = vunpack.c.h.b16 %v110
  %v565 = vunpack.c.l.b16 %v111
  %v566 = vunpack.c.h.b16 %v111
  %v567 = vunpack.c.l.b16 %v112
  %v568 = vunpack.c.h.b16 %v112
  %v569 = vunpack.c.l.b16 %v113
  %v570 = vunpack.c.h.b16 %v113
  %v571 = vunpack.c.l.b16 %v114
  %v572 = vunpack.c.h.b16 %v114
  %v573 = vunpack.c.l.b16 %v115
  %v574 = vunpack.c.h.b16 %v115
  %v575 = vunpack.c.l.b16 %v116
  %v576 = vunpack.c.h.b16 %v116
  %v577 = vunpack.c.l.b16 %v117
  %v578 = vunpack.c.h.b16 %v117
  %v579 = vunpack.c.l.b16 %v118
  %v580 = vunpack.c.h.b16 %v118
  %v581 = vunpack.c.l.b16 %v119
  %v582 = vunpack.c.h.b16 %v119
  %v583 = vunpack.c.l.b16 %v120
  %v584 = vunpack.c.h.b16 %v120
  %v585 = vunpack.c.l.b16 %v121
  %v586 = vunpack.c.h.b16 %v121
  %v587 = vunpack.c.l.b16 %v122
  %v588 = vunpack.c.h.b16 %v122
  %v589 = vunpack.c.l.b16 %v123
  %v590 = vunpack.c.h.b16 %v123
  %v591 = vunpack.c.l.b16 %v124
  %v592 = vunpack.c.h.b16 %v124
  %v593 = vunpack.c.l.b16 %v125
  %v594 = vunpack.c.h.b16 %v125
  %v595 = vunpack.c.l.b16 %v126
  %v596 = vunpack.c.h.b16 %v126
  %v597 = vunpack.c.l.b16 %v127
  %v598 = vunpack.c.h.b16 %v127
  %v599 = vunpack.c.l.b16 %v128
  %v600 = vunpack.c.h.b16 %v128
  %v601 = vunpack.c.l.b16 %v129
  %v602 = vunpack.c.h.b16 %v129
  %v603 = vunpack.c.l.b16 %v130
  %v604 = vunpack.c.h.b16 %v130
  %v605 = vunpack.c.l.b16 %v131
  %v606 = vunpack.c.h.b16 %v131
  %v607 = vunpack.c.l.b16 %v132
  %v608 = vunpack.c.h.b16 %v132
  %v609 = vunpack.c.l.b16 %v133
  %v610 = vunpack.c.h.b16 %v133
  %v611 = vunpack.c.l.b16 %v134
  %v612 = vunpack.c.h.b16 %v134
  %v613 = vunpack.c.l.b16 %v135
  %v614 = vunpack.c.h.b16 %v135
  %v615 = vunpack.c.l.b16 %v136
  %v616 = vunpack.c.h.b16 %v136
  %v617 = vunpack.c.l.b16 %v137
  %v618 = vunpack.c.h.b16 %v137
  %v619 = vunpack.c.l.b16 %v138
  %v620 = vunpack.c.h.b16 %v138
  %v621 = vunpack.c.l.b16 %v139
  %v622 = vunpack.c.h.b16 %v139
  %v623 = vunpack.c.l.b16 %v140
  %v624 = vunpack.c.h.b16 %v140
  %v625 = vunpack.c.l.b16 %v141
  %v626 = vunpack.c.h.b16 %v141
  %v627 = vunpack.c.l.b16 %v142
  %v628 = vunpack.c.h.b16 %v142
  %v629 = vunpack.c.l.b16 %v143
  %v630 = vunpack.c.h.b16 %v143
  %v631 = vunpack.c.l.b16 %v144
  %v632 = vunpack.c.h.b16 %v144
  %v633 = vunpack.c.l.b16 %v145
  %v634 = vunpack.c.h.b16 %v145
  %v635 = vunpack.c.l.b16 %v146
  %v636 = vunpack.c.h.b16 %v146
  %v637 = vunpack.c.l.b16 %v147
  %v638 = vunpack.c.h.b16 %v147
  %v639 = vunpack.c.l.b16 %v148
  %v640 = vunpack.c.h.b16 %v148
  %v641 = vunpack.c.l.b16 %v149
  %v642 = vunpack.c.h.b16 %v149
  %v643 = vunpack.c.l.b16 %v150
  %v644 = vunpack.c.h.b16 %v150
  %v645 = vunpack.c.l.b16 %v151
  %v646 = vunpack.c.h.b16 %v151
  %v647 = vunpack.c.l.b16 %v152
  %v648 = vunpack.c.h.b16 %v152
  %v649 = vunpack.c.l.b16 %v153
  %v650 = vunpack.c.h.b16 %v153
  %v651 = vunpack.c.l.b16 %v154
  %v652 = vunpack.c.h.b16 %v154
  %v653 = vunpack.c.l.b16 %v155
  %v654 = vunpack.c.h.b16 %v155
  %v655 = vunpack.c.l.b16 %v156
  %v656 = vunpack.c.h.b16 %v156
  %v657 = vunpack.c.l.b16 %v157
  %v658 = vunpack.c.h.b16 %v157
  %v659 = vunpack.c.l.b16 %v158
  %v660 = vunpack.c.h.b16 %v158
  %v661 = vunpack.c.l.b16 %v159
  %v662 = vunpack.c.h.b16 %v159
  %v663 = vunpack.c.l.b16 %v160
  %v664 = vunpack.c.h.b16 %v160
  %v665 = vunpack.c.l.b16 %v161
  %v666 = vunpack.c.h.b16 %v161
  %v667 = vunpack.c.l.b16 %v162
  %v668 = vunpack.c.h.b16 %v162
  %v669 = vunpack.c.l.b16 %v163
  %v670 = vunpack.c.h.b16 %v163
  %v671 = vunpack.c.l.b16 %v164
  %v672 = vunpack.c.h.b16 %v164
  %v673 = vunpack.c.l.b16 %v165
  %v674 = vunpack.c.h.b16 %v165
  %v675 = vunpack.c.l.b16 %v166
  %v676 = vunpack.c.h.b16 %v166
  %v677 = vunpack.c.l.b16 %v167
  %v678 = vunpack.c.h.b16 %v167
  %v679 = vunpack.c.l.b16 %v168
  %v680 = vunpack.c.h.b16 %v168
  %v681 = vunpack.c.l.b16 %v169
  %v682 = vunpack.c.h.b16 %v169
  %v683 = vunpack.c.l.b16 %v170
  %v684 = vunpack.c.h.b16 %v170
  %v685 = vunpack.c.l.b16 %v171
  %v686 = vunpack.c.h.b16 %v171
  %v687 = vunpack.c.l.b16 %v172
  %v688 = vunpack.c.h.b16 %v172
  %v689 = vunpack.c.l.b16 %v173
  %v690 = vunpack.c.h.b16 %v173
  %v691 = vunpack.c.l.b16 %v174
  %v692 = vunpack.c.h.b16 %v174
  %v693 = vunpack.c.l.b16 %v175
  %v694 = vunpack.c.h.b16 %v175
  %v695 = vunpack.c.l.b16 %v176
  %v696 = vunpack.c.h.b16 %v176
  %v697 = vunpack.c.l.b16 %v177
  %v698 = vunpack.c.h.b16 %v177
  %v699 = vunpack.c.l.b16 %v178
  %v700 = vunpack.c.h.b16 %v178
  %v701 = vunpack.c.l.b16 %v179
  %v702 = vunpack.c.h.b16 %v179
  %v703 = vunpack.c.l.b16 %v180
  %v704 = vunpack.c.h.b16 %v180
  %v705 = vunpack.c.l.b16 %v181
  %v706 = vunpack.c.h.b16 %v181
  %v707 = vunpack.c.l.b16 %v182
  %v708 = vunpack.c.h.b16 %v182
  %v709 = vunpack.c.l.b16 %v183
  %v710 = vunpack.c.h.b16 %v183
  %v711 = vunpack.c.l.b16 %v184
  %v712 = vunpack.c.h.b16 %v184
  %v713 = vunpack.c.l.b16 %v185
  %v714 = vunpack.c.h.b16 %v185
  %v715 = vunpack.c.l.b16 %v186
  %v716 = vunpack.c.h.b16 %v186
  %v717 = vunpack.c.l.b16 %v187
  %v718 = vunpack.c.h.b16 %v187
  %v719 = vunpack.c.l.b16 %v188
  %v720 = vunpack.c.h.b16 %v188
  %v721 = vunpack.c.l.b16 %v189
  %v722 = vunpack.c.h.b16 %v189
  %v723 = vunpack.c.l.b16 %v190
  %v724 = vunpack.c.h.b16 %v190
  %v725 = vunpack.c.l.b16 %v191
  %v726 = vunpack.c.h.b16 %v191
  %v727 = vunpack.c.l.b16 %v192
  %v728 = vunpack.c.h.b16 %v192
  %v729 = vunpack.c.l.b16 %v193
  %v730 = vunpack.c.h.b16 %v193
  %v731 = vunpack.c.l.b16 %v194
  %v732 = vunpack.c.h.b16 %v194
  %v733 = vunpack.c.l.b16 %v195
  %v734 = vunpack.c.h.b16 %v195
  %v735 = vunpack.c.l.b16 %v196
  %v736 = vunpack.c.h.b16 %v196
  %v737 = vunpack.c.l.b16 %v197
  %v738 = vunpack.c.h.b16 %v197
  %v739 = vunpack.c.l.b16 %v198
  %v740 = vunpack.c.h.b16 %v198
  %v741 = vunpack.c.l.b16 %v199
  %v742 = vunpack.c.h.b16 %v199
  %v743 = vunpack.c.l.b16 %v200
  %v744 = vunpack.c.h.b16 %v200
  %v745 = vunpack.c.l.b16 %v201
  %v746 = vunpack.c.h.b16 %v201
  %v747 = vunpack.c.l.b16 %v202
  %v748 = vunpack.c.h.b16 %v202
  %v749 = vunpack.c.l.b16 %v203
  %v750 = vunpack.c.h.b16 %v203
  %v751 = vunpack.c.l.b16 %v204
  %v752 = vunpack.c.h.b16 %v204
  %v753 = vunpack.c.l.b16 %v205
  %v754 = vunpack.c.h.b16 %v205
  %v755 = vunpack.c.l.b16 %v206
  %v756 = vunpack.c.h.b16 %v206
  %v757 = vunpack.c.l.b16 %v207
  %v758 = vunpack.c.h.b16 %v207
  %v759 = vunpack.c.l.b16 %v208
  %v760 = vunpack.c.h.b16 %v208
  %v761 = vunpack.c.l.b16 %v209
  %v762 = vunpack.c.h.b16 %v209
  %v763 = vunpack.c.l.b16 %v210
  %v764 = vunpack.c.h.b16 %v210
  %v765 = vunpack.c.l.b16 %v211
  %v766 = vunpack.c.h.b16 %v211
  %v767 = vunpack.c.l.b16 %v212
  %v768 = vunpack.c.h.b16 %v212
  %v769 = vunpack.c.l.b16 %v213
  %v770 = vunpack.c.h.b16 %v213
  %v771 = vunpack.c.l.b16 %v214
  %v772 = vunpack.c.h.b16 %v214
  %v773 = vunpack.c.l.b16 %v215
  %v774 = vunpack.c.h.b16 %v215
  %v775 = vunpack.c.l.b16 %v216
  %v776 = vunpack.c.h.b16 %v216
  %v777 = vunpack.c.l.b16 %v217
  %v778 = vunpack.c.h.b16 %v217
  %v779 = vunpack.c.l.b16 %v218
  %v780 = vunpack.c.h.b16 %v218
  %v781 = vunpack.c.l.b16 %v219
  %v782 = vunpack.c.h.b16 %v219
  %v783 = vunpack.c.l.b16 %v220
  %v784 = vunpack.c.h.b16 %v220
  %v785 = vunpack.c.l.b16 %v221
  %v786 = vunpack.c.h.b16 %v221
  %v787 = vunpack.c.l.b16 %v222
  %v788 = vunpack.c.h.b16 %v222
  %v789 = vunpack.c.l.b16 %v223
  %v790 = vunpack.c.h.b16 %v223
  %v791 = vunpack.c.l.b16 %v224
  %v792 = vunpack.c.h.b16 %v224
  %v793 = vunpack.c.l.b16 %v225
  %v794 = vunpack.c.h.b16 %v225
  %v795 = vunpack.c.l.b16 %v226
  %v796 = vunpack.c.h.b16 %v226
  %v797 = vunpack.c.l.b16 %v227
  %v798 = vunpack.c.h.b16 %v227
  %v799 = vunpack.c.l.b16 %v228
  %v800 = vunpack.c.h.b16 %v228
  %v801 = vunpack.c.l.b16 %v229
  %v802 = vunpack.c.h.b16 %v229
  %v803 = vunpack.c.l.b16 %v230
  %v804 = vunpack.c.h.b16 %v230
  %v805 = vunpack.c.l.b16 %v231
  %v806 = vunpack.c.h.b16 %v231
  %v807 = vunpack.c.l.b16 %v232
  %v808 = vunpack.c.h.b16 %v232
  %v809 = vunpack.c.l.b16 %v233
  %v810 = vunpack.c.h.b16 %v233
  %v811 = vunpack.c.l.b16 %v234
  %v812 = vunpack.c.h.b16 %v234
  %v813 = vunpack.c.l.b16 %v235
  %v814 = vunpack.c.h.b16 %v235
  %v815 = vunpack.c.l.b16 %v236
  %v816 = vunpack.c.h.b16 %v236
  %v817 = vunpack.c.l.b16 %v237
  %v818 = vunpack.c.h.b16 %v237
  %v819 = vunpack.c.l.b16 %v238
  %v820 = vunpack.c.h.b16 %v238
  %v821 = vunpack.c.l.b16 %v239
  %v822 = vunpack.c.h.b16 %v239
  %v823 = vunpack.c.l.b16 %v240
  %v824 = vunpack.c.h.b16 %v240
  %v825 = vunpack.c.l.b16 %v241
  %v826 = vunpack.c.h.b16 %v241
  %v827 = vunpack.c.l.b16 %v242
  %v828 = vunpack.c.h.b16 %v242
  %v829 = vunpack.c.l.b16 %v243
  %v830 = vunpack.c.h.b16 %v243
  %v831 = vunpack.c.l.b16 %v244
  %v832 = vunpack.c.h.b16 %v244
  %v833 = vunpack.c.l.b16 %v245
  %v834 = vunpack.c.h.b16 %v245
  %v835 = vunpack.c.l.b16 %v246
  %v836 = vunpack.c.h.b16 %v246
  %v837 = vunpack.c.l.b16 %v247
  %v838 = vunpack.c.h.b16 %v247
  %v839 = vunpack.c.l.b16 %v248
  %v840 = vunpack.c.h.b16 %v248
  %v841 = vunpack.c.l.b16 %v249
  %v842 = vunpack.c.h.b16 %v249
  %v843 = vunpack.c.l.b16 %v250
  %v844 = vunpack.c.h.b16 %v250
  %v845 = vunpack.c.l.b16 %v251
  %v846 = vunpack.c.h.b16 %v251
  %v847 = vunpack.c.l.b16 %v252
  %v848 = vunpack.c.h.b16 %v252
  %v849 = vunpack.c.l.b16 %v253
  %v850 = vunpack.c.h.b16 %v253
  %v851 = vunpack.c.l.b16 %v254
  %v852 = vunpack.c.h.b16 %v254
  %v853 = vpack.c.b16 %v465, %v461
  %v854 = vpack.c.b16 %v466, %v462
  %v855 = vpack.c.b16 %v467, %v463
  %v856 = vpack.c.b16 %v468, %v464
  %v857 = vpack.c.b16 %v473, %v469
  %v858 = vpack.c.b16 %v474, %v470
  %v859 = vpack.c.b16 %v475, %v471
  %v860 = vpack.c.b16 %v476, %v472
  %v861 = vpack.c.b16 %v481, %v477
  %v862 = vpack.c.b16 %v482, %v478
  %v863 = vpack.c.b16 %v483, %v479
  %v864 = vpack.c.b16 %v484, %v480
  %v865 = vpack.c.b16 %v489, %v485
  %v866 = vpack.c.b16 %v490, %v486
  %v867 = vpack.c.b16 %v491, %v487
  %v868 = vpack.c.b16 %v492, %v488
  %v869 = vpack.c.b16 %v497, %v493
  %v870 = vpack.c.b16 %v498, %v494
  %v871 = vpack.c.b16 %v499, %v495
  %v872 = vpack.c.b16 %v500, %v496
  %v873 = vpack.c.b16 %v505, %v501
  %v874 = vpack.c.b16 %v506, %v502
  %v875 = vpack.c.b16 %v507, %v503
  %v876 = vpack.c.b16 %v508, %v504
  %v877 = vpack.c.b16 %v513, %v509
  %v878 = vpack.c.b16 %v514, %v510
  %v879 = vpack.c.b16 %v515, %v511
  %v880 = vpack.c.b16 %v516, %v512
  %v881 = vpack.c.b16 %v521, %v517
  %v882 = vpack.c.b16 %v522, %v518
  %v883 = vpack.c.b16 %v523, %v519
  %v884 = vpack.c.b16 %v524, %v520
  %v885 = vpack.c.b16 %v529, %v525
  %v886 = vpack.c.b16 %v530, %v526
  %v887 = vpack.c.b16 %v531, %v527
  %v888 = vpack.c.b16 %v532, %v528
  %v889 = vpack.c.b16 %v537, %v533
  %v890 = vpack.c.b16 %v538, %v534
  %v891 = vpack.c.b16 %v539, %v535
  %v892 = vpack.c.b16 %v540, %v536
  %v893 = vpack.c.b16 %v545, %v541
  %v894 = vpack.c.b16 %v546, %v542
  %v895 = vpack.c.b16 %v547, %v543
  %v896 = vpack.c.b16 %v548, %v544
  %v897 = vpack.c.b16 %v553, %v549
  %v898 = vpack.c.b16 %v554, %v550
  %v899 = vpack.c.b16 %v555, %v551
  %v900 = vpack.c.b16 %v556, %v552
  %v901 = vpack.c.b16 %v561, %v557
  %v902 = vpack.c.b16 %v562, %v558
  %v903 = vpack.c.b16 %v563, %v559
  %v904 = vpack.c.b16 %v564, %v560
  %v905 = vpack.c.b16 %v569, %v565
  %v906 = vpack.c.b16 %v570, %v566
  %v907 = vpack.c.b16 %v571, %v567
  %v908 = vpack.c.b16 %v572, %v568
  %v909 = vpack.c.b16 %v577, %v573
  %v910 = vpack.c.b16 %v578, %v574
  %v911 = vpack.c.b16 %v579, %v575
  %v912 = vpack.c.b16 %v580, %v576
  %v913 = vpack.c.b16 %v585, %v581
  %v914 = vpack.c.b16 %v586, %v582
  %v915 = vpack.c.b16 %v587, %v583
  %v916 = vpack.c.b16 %v588, %v584
  %v917 = vpack.c.b16 %v593, %v589
  %v918 = vpack.c.b16 %v594, %v590
  %v919 = vpack.c.b16 %v595, %v591
  %v920 = vpack.c.b16 %v596, %v592
  %v921 = vpack.c.b16 %v601, %v597
  %v922 = vpack.c.b16 %v602, %v598
  %v923 = vpack.c.b16 %v603, %v599
  %v924 = vpack.c.b16 %v604, %v600
  %v925 = vpack.c.b16 %v609, %v605
  %v926 = vpack.c.b16 %v610, %v606
  %v927 = vpack.c.b16 %v611, %v607
  %v928 = vpack.c.b16 %v612, %v608
  %v929 = vpack.c.b16 %v617, %v613
  %v930 = vpack.c.b16 %v618, %v614
  %v931 = vpack.c.b16 %v619, %v615
  %v932 = vpack.c.b16 %v620, %v616
  %v933 = vpack.c.b16 %v625, %v621
  %v934 = vpack.c.b16 %v626, %v622
  %v935 = vpack.c.b16 %v627, %v623
  %v936 = vpack.c.b16 %v628, %v624
  %v937 = vpack.c.b16 %v633, %v629
  %v938 = vpack.c.b16 %v634, %v630
  %v939 = vpack.c.b16 %v635, %v631
  %v940 = vpack.c.b16 %v636, %v632
  %v941 = vpack.c.b16 %v641, %v637
  %v942 = vpack.c.b16 %v642, %v638
  %v943 = vpack.c.b16 %v643, %v639
  %v944 = vpack.c.b16 %v644, %v640
  %v945 = vpack.c.b16 %v649, %v645
  %v946 = vpack.c.b16 %v650, %v646
  %v947 = vpack.c.b16 %v651, %v647
  %v948 = vpack.c.b16 %v652, %v648
  %v949 = vpack.c.b16 %v657, %v653
  %v950 = vpack.c.b16 %v658, %v654
  %v951 = vpack.c.b16 %v659, %v655
  %v952 = vpack.c.b16 %v660, %v656
  %v953 = vpack.c.b16 %v665, %v661
  %v954 = vpack.c.b16 %v666, %v662
  %v955 = vpack.c.b16 %v667, %v663
  %v956 = vpack.c.b16 %v668, %v664
  %v957 = vpack.c.b16 %v673, %v669
  %v958 = vpack.c.b16 %v674, %v670
  %v959 = vpack.c.b16 %v675, %v671
  %v960 = vpack.c.b16 %v676, %v672
  %v961 = vpack.c.b16 %v681, %v677
  %v962 = vpack.c.b16 %v682, %v678
  %v963 = vpack.c.b16 %v683, %v679
  %v964 = vpack.c.b16 %v684, %v680
  %v965 = vpack.c.b16 %v689, %v685
  %v966 = vpack.c.b16 %v690, %v686
  %v967 = vpack.c.b16 %v691, %v687
  %v968 = vpack.c.b16 %v692, %v688
  %v969 = vpack.c.b16 %v697, %v693
  %v970 = vpack.c.b16 %v698, %v694
  %v971 = vpack.c.b16 %v699, %v695
  %v972 = vpack.c.b16 %v700, %v696
  %v973 = vpack.c.b16 %v705, %v701
  %v974 = vpack.c.b16 %v706, %v702
  %v975 = vpack.c.b16 %v707, %v703
  %v976 = vpack.c.b16 %v708, %v704
  %v977 = vpack.c.b16 %v713, %v709
  %v978 = vpack.c.b16 %v714, %v710
  %v979 = vpack.c.b16 %v715, %v711
  %v980 = vpack.c.b16 %v716, %v712
  %v981 = vpack.c.b16 %v721, %v717
  %v982 = vpack.c.b16 %v722, %v718
  %v983 = vpack.c.b16 %v723, %v719
  %v984 = vpack.c.b16 %v724, %v720
  %v985 = vpack.c.b16 %v729, %v725
  %v986 = vpack.c.b16 %v730, %v726
  %v987 = vpack.c.b16 %v731, %v727
  %v988 = vpack.c.b16 %v732, %v728
  %v989 = vpack.c.b16 %v737, %v733
  %v990 = vpack.c.b16 %v738, %v734
  %v991 = vpack.c.b16 %v739, %v735
  %v992 = vpack.c.b16 %v740, %v736
  %v993 = vpack.c.b16 %v745, %v741
  %v994 = vpack.c.b16 %v746, %v742
  %v995 = vpack.c.b16 %v747, %v743
  %v996 = vpack.c.b16 %v748, %v744
  %v997 = vpack.c.b16 %v753, %v749
  %v998 = vpack.c.b16 %v754, %v750
  %v999 = vpack.c.b16 %v755, %v751
  %v1000 = vpack.c.b16 %v756, %v752
  %v1001 = vpack.c.b16 %v761, %v757
  %v1002 = vpack.c.b16 %v762, %v758
  %v1003 = vpack.c.b16 %v763, %v759
  %v1004 = vpack.c.b16 %v764, %v760
  %v1005 = vpack.c.b16 %v769, %v765
  %v1006 = vpack.c.b16 %v770, %v766
  %v1007 = vpack.c.b16 %v771, %v767
  %v1008 = vpack.c.b16 %v772, %v768
  %v1009 = vpack.c.b16 %v777, %v773
  %v1010 = vpack.c.b16 %v778, %v774
  %v1011 = vpack.c.b16 %v779, %v775
  %v1012 = vpack.c.b16 %v780, %v776
  %v1013 = vpack.c.b16 %v785, %v781
  %v1014 = vpack.c.b16 %v786, %v782
  %v1015 = vpack.c.b16 %v787, %v783
  %v1016 = vpack.c.b16 %v788, %v784
  %v1017 = vpack.c.b16 %v793, %v789
  %v1018 = vpack.c.b16 %v794, %v790
  %v1019 = vpack.c.b16 %v795, %v791
  %v1020 = vpack.c.b16 %v796, %v792
  %v1021 = vpack.c.b16 %v801, %v797
  %v1022 = vpack.c.b16 %v802, %v798
  %v1023 = vpack.c.b16 %v803, %v799
  %v1024 = vpack.c.b16 %v804, %v800
  %v1025 = vpack.c.b16 %v809, %v805
  %v1026 = vpack.c.b16 %v810, %v806
  %v1027 = vpack.c.b16 %v811, %v807
  %v1028 = vpack.c.b16 %v812, %v808
  %v1029 = vpack.c.b16 %v817, %v813
  %v1030 = vpack.c.b16 %v818, %v814
  %v1031 = vpack.c.b16 %v819, %v815
  %v1032 = vpack.c.b16 %v820, %v816
  %v1033 = vpack.c.b16 %v825, %v821
  %v1034 = vpack.c.b16 %v826, %v822
  %v1035 = vpack.c.b16 %v827, %v823
  %v1036 = vpack.c.b16 %v828, %v824
  %v1037 = vpack.c.b16 %v833, %v829
  %v1038 = vpack.c.b16 %v834, %v830
  %v1039 = vpack.c.b16 %v835, %v831
  %v1040 = vpack.c.b16 %v836, %v832
  %v1041 = vpack.c.b16 %v841, %v837
  %v1042 = vpack.c.b16 %v842, %v838
  %v1043 = vpack.c.b16 %v843, %v839
  %v1044 = vpack.c.b16 %v844, %v840
  %v1045 = vpack.c.b16 %v849, %v845
  %v1046 = vpack.c.b16 %v850, %v846
  %v1047 = vpack.c.b16 %v851, %v847
  %v1048 = vpack.c.b16 %v852, %v848
  %vm1245 = vcmask 130048
  %v1247 = vsel %vm1245, %v58, 0
  %1249 = vmatpush.bf16.msra.mxu0 %v881
  %1250 = vmatpush.bf16.msra.mxu0 %v877
  %1251 = vmatpush.bf16.msra.mxu0 %v873
  %1252 = vmatpush.bf16.msra.mxu0 %v869
  %1253 = vmatpush.bf16.msra.mxu0 %v865
  %1254 = vmatpush.bf16.msra.mxu0 %v861
  %1255 = vmatpush.bf16.msra.mxu0 %v857
  %1256 = vmatpush.bf16.msra.mxu0 %v853
  %1257 = vmatmul.bf16.gmra.mxu0 %v52
  %v1258 = vpop.f32.mrf.mxu0
  %v1259 = vadd.f32 %v257, %v1258
  %v1260 = vpop.f32.mrf.mxu0
  %v1261 = vadd.f32 %v257, %v1260
  %1262 = vdwg.mxu0
  %1263 = vmatpush.bf16.msra.mxu0 %v913
  %1264 = vmatpush.bf16.msra.mxu0 %v909
  %1265 = vmatpush.bf16.msra.mxu0 %v905
  %1266 = vmatpush.bf16.msra.mxu0 %v901
  %1267 = vmatpush.bf16.msra.mxu0 %v897
  %1268 = vmatpush.bf16.msra.mxu0 %v893
  %1269 = vmatpush.bf16.msra.mxu0 %v889
  %1270 = vmatpush.bf16.msra.mxu0 %v885
  %1271 = vmatmul.bf16.gmra.mxu0 %v53
  %v1272 = vpop.f32.mrf.mxu0
  %v1273 = vadd.f32 %v1259, %v1272
  %v1274 = vpop.f32.mrf.mxu0
  %v1275 = vadd.f32 %v1261, %v1274
  %1276 = vdwg.mxu0
  %1277 = vmatpush.bf16.msra.mxu0 %v945
  %1278 = vmatpush.bf16.msra.mxu0 %v941
  %1279 = vmatpush.bf16.msra.mxu0 %v937
  %1280 = vmatpush.bf16.msra.mxu0 %v933
  %1281 = vmatpush.bf16.msra.mxu0 %v929
  %1282 = vmatpush.bf16.msra.mxu0 %v925
  %1283 = vmatpush.bf16.msra.mxu0 %v921
  %1284 = vmatpush.bf16.msra.mxu0 %v917
  %1285 = vmatmul.bf16.gmra.mxu0 %v54
  %v1286 = vpop.f32.mrf.mxu0
  %v1287 = vadd.f32 %v1273, %v1286
  %v1288 = vpop.f32.mrf.mxu0
  %v1289 = vadd.f32 %v1275, %v1288
  %1290 = vdwg.mxu0
  %1291 = vmatpush.bf16.msra.mxu0 %v977
  %1292 = vmatpush.bf16.msra.mxu0 %v973
  %1293 = vmatpush.bf16.msra.mxu0 %v969
  %1294 = vmatpush.bf16.msra.mxu0 %v965
  %1295 = vmatpush.bf16.msra.mxu0 %v961
  %1296 = vmatpush.bf16.msra.mxu0 %v957
  %1297 = vmatpush.bf16.msra.mxu0 %v953
  %1298 = vmatpush.bf16.msra.mxu0 %v949
  %1299 = vmatmul.bf16.gmra.mxu0 %v55
  %v1300 = vpop.f32.mrf.mxu0
  %v1301 = vadd.f32 %v1287, %v1300
  %v1302 = vpop.f32.mrf.mxu0
  %v1303 = vadd.f32 %v1289, %v1302
  %1304 = vdwg.mxu0
  %1305 = vmatpush.bf16.msra.mxu0 %v1009
  %1306 = vmatpush.bf16.msra.mxu0 %v1005
  %1307 = vmatpush.bf16.msra.mxu0 %v1001
  %1308 = vmatpush.bf16.msra.mxu0 %v997
  %1309 = vmatpush.bf16.msra.mxu0 %v993
  %1310 = vmatpush.bf16.msra.mxu0 %v989
  %1311 = vmatpush.bf16.msra.mxu0 %v985
  %1312 = vmatpush.bf16.msra.mxu0 %v981
  %1313 = vmatmul.bf16.gmra.mxu0 %v56
  %v1314 = vpop.f32.mrf.mxu0
  %v1315 = vadd.f32 %v1301, %v1314
  %v1316 = vpop.f32.mrf.mxu0
  %v1317 = vadd.f32 %v1303, %v1316
  %1318 = vdwg.mxu0
  %1319 = vmatpush.bf16.msra.mxu0 %v1041
  %1320 = vmatpush.bf16.msra.mxu0 %v1037
  %1321 = vmatpush.bf16.msra.mxu0 %v1033
  %1322 = vmatpush.bf16.msra.mxu0 %v1029
  %1323 = vmatpush.bf16.msra.mxu0 %v1025
  %1324 = vmatpush.bf16.msra.mxu0 %v1021
  %1325 = vmatpush.bf16.msra.mxu0 %v1017
  %1326 = vmatpush.bf16.msra.mxu0 %v1013
  %1327 = vmatmul.bf16.gmra.mxu0 %v57
  %v1328 = vpop.f32.mrf.mxu0
  %v1329 = vadd.f32 %v1315, %v1328
  %v1330 = vpop.f32.mrf.mxu0
  %v1331 = vadd.f32 %v1317, %v1330
  %1332 = vdwg.mxu0
  %1333 = vmatpush.bf16.msra.mxu0 0
  %1334 = vmatpush.bf16.msra.mxu0 0
  %1335 = vmatpush.bf16.msra.mxu0 0
  %1336 = vmatpush.bf16.msra.mxu0 0
  %1337 = vmatpush.bf16.msra.mxu0 0
  %1338 = vmatpush.bf16.msra.mxu0 0
  %1339 = vmatpush.bf16.msra.mxu0 0
  %1340 = vmatpush.bf16.msra.mxu0 %v1045
  %1341 = vmatmul.bf16.gmra.mxu0 %v1247
  %v1342 = vpop.f32.mrf.mxu0
  %v1343 = vadd.f32 %v1329, %v1342
  %v1344 = vpop.f32.mrf.mxu0
  %v1345 = vadd.f32 %v1331, %v1344
  %1346 = vdwg.mxu0
  %1347 = vmatpush.bf16.msra.mxu0 %v882
  %1348 = vmatpush.bf16.msra.mxu0 %v878
  %1349 = vmatpush.bf16.msra.mxu0 %v874
  %1350 = vmatpush.bf16.msra.mxu0 %v870
  %1351 = vmatpush.bf16.msra.mxu0 %v866
  %1352 = vmatpush.bf16.msra.mxu0 %v862
  %1353 = vmatpush.bf16.msra.mxu0 %v858
  %1354 = vmatpush.bf16.msra.mxu0 %v854
  %1355 = vmatmul.bf16.gmra.mxu0 %v52
  %v1356 = vpop.f32.mrf.mxu0
  %v1357 = vadd.f32 %v258, %v1356
  %v1358 = vpop.f32.mrf.mxu0
  %v1359 = vadd.f32 %v258, %v1358
  %1360 = vdwg.mxu0
  %1361 = vmatpush.bf16.msra.mxu0 %v914
  %1362 = vmatpush.bf16.msra.mxu0 %v910
  %1363 = vmatpush.bf16.msra.mxu0 %v906
  %1364 = vmatpush.bf16.msra.mxu0 %v902
  %1365 = vmatpush.bf16.msra.mxu0 %v898
  %1366 = vmatpush.bf16.msra.mxu0 %v894
  %1367 = vmatpush.bf16.msra.mxu0 %v890
  %1368 = vmatpush.bf16.msra.mxu0 %v886
  %1369 = vmatmul.bf16.gmra.mxu0 %v53
  %v1370 = vpop.f32.mrf.mxu0
  %v1371 = vadd.f32 %v1357, %v1370
  %v1372 = vpop.f32.mrf.mxu0
  %v1373 = vadd.f32 %v1359, %v1372
  %1374 = vdwg.mxu0
  %1375 = vmatpush.bf16.msra.mxu0 %v946
  %1376 = vmatpush.bf16.msra.mxu0 %v942
  %1377 = vmatpush.bf16.msra.mxu0 %v938
  %1378 = vmatpush.bf16.msra.mxu0 %v934
  %1379 = vmatpush.bf16.msra.mxu0 %v930
  %1380 = vmatpush.bf16.msra.mxu0 %v926
  %1381 = vmatpush.bf16.msra.mxu0 %v922
  %1382 = vmatpush.bf16.msra.mxu0 %v918
  %1383 = vmatmul.bf16.gmra.mxu0 %v54
  %v1384 = vpop.f32.mrf.mxu0
  %v1385 = vadd.f32 %v1371, %v1384
  %v1386 = vpop.f32.mrf.mxu0
  %v1387 = vadd.f32 %v1373, %v1386
  %1388 = vdwg.mxu0
  %1389 = vmatpush.bf16.msra.mxu0 %v978
  %1390 = vmatpush.bf16.msra.mxu0 %v974
  %1391 = vmatpush.bf16.msra.mxu0 %v970
  %1392 = vmatpush.bf16.msra.mxu0 %v966
  %1393 = vmatpush.bf16.msra.mxu0 %v962
  %1394 = vmatpush.bf16.msra.mxu0 %v958
  %1395 = vmatpush.bf16.msra.mxu0 %v954
  %1396 = vmatpush.bf16.msra.mxu0 %v950
  %1397 = vmatmul.bf16.gmra.mxu0 %v55
  %v1398 = vpop.f32.mrf.mxu0
  %v1399 = vadd.f32 %v1385, %v1398
  %v1400 = vpop.f32.mrf.mxu0
  %v1401 = vadd.f32 %v1387, %v1400
  %1402 = vdwg.mxu0
  %1403 = vmatpush.bf16.msra.mxu0 %v1010
  %1404 = vmatpush.bf16.msra.mxu0 %v1006
  %1405 = vmatpush.bf16.msra.mxu0 %v1002
  %1406 = vmatpush.bf16.msra.mxu0 %v998
  %1407 = vmatpush.bf16.msra.mxu0 %v994
  %1408 = vmatpush.bf16.msra.mxu0 %v990
  %1409 = vmatpush.bf16.msra.mxu0 %v986
  %1410 = vmatpush.bf16.msra.mxu0 %v982
  %1411 = vmatmul.bf16.gmra.mxu0 %v56
  %v1412 = vpop.f32.mrf.mxu0
  %v1413 = vadd.f32 %v1399, %v1412
  %v1414 = vpop.f32.mrf.mxu0
  %v1415 = vadd.f32 %v1401, %v1414
  %1416 = vdwg.mxu0
  %1417 = vmatpush.bf16.msra.mxu0 %v1042
  %1418 = vmatpush.bf16.msra.mxu0 %v1038
  %1419 = vmatpush.bf16.msra.mxu0 %v1034
  %1420 = vmatpush.bf16.msra.mxu0 %v1030
  %1421 = vmatpush.bf16.msra.mxu0 %v1026
  %1422 = vmatpush.bf16.msra.mxu0 %v1022
  %1423 = vmatpush.bf16.msra.mxu0 %v1018
  %1424 = vmatpush.bf16.msra.mxu0 %v1014
  %1425 = vmatmul.bf16.gmra.mxu0 %v57
  %v1426 = vpop.f32.mrf.mxu0
  %v1427 = vadd.f32 %v1413, %v1426
  %v1428 = vpop.f32.mrf.mxu0
  %v1429 = vadd.f32 %v1415, %v1428
  %1430 = vdwg.mxu0
  %1431 = vmatpush.bf16.msra.mxu0 0
  %1432 = vmatpush.bf16.msra.mxu0 0
  %1433 = vmatpush.bf16.msra.mxu0 0
  %1434 = vmatpush.bf16.msra.mxu0 0
  %1435 = vmatpush.bf16.msra.mxu0 0
  %1436 = vmatpush.bf16.msra.mxu0 0
  %1437 = vmatpush.bf16.msra.mxu0 0
  %1438 = vmatpush.bf16.msra.mxu0 %v1046
  %1439 = vmatmul.bf16.gmra.mxu0 %v1247
  %v1440 = vpop.f32.mrf.mxu0
  %v1441 = vadd.f32 %v1427, %v1440
  %v1442 = vpop.f32.mrf.mxu0
  %v1443 = vadd.f32 %v1429, %v1442
  %1444 = vdwg.mxu0
  %1445 = vmatpush.bf16.msra.mxu0 %v883
  %1446 = vmatpush.bf16.msra.mxu0 %v879
  %1447 = vmatpush.bf16.msra.mxu0 %v875
  %1448 = vmatpush.bf16.msra.mxu0 %v871
  %1449 = vmatpush.bf16.msra.mxu0 %v867
  %1450 = vmatpush.bf16.msra.mxu0 %v863
  %1451 = vmatpush.bf16.msra.mxu0 %v859
  %1452 = vmatpush.bf16.msra.mxu0 %v855
  %1453 = vmatmul.bf16.gmra.mxu0 %v52
  %v1454 = vpop.f32.mrf.mxu0
  %v1455 = vadd.f32 %v259, %v1454
  %v1456 = vpop.f32.mrf.mxu0
  %v1457 = vadd.f32 %v259, %v1456
  %1458 = vdwg.mxu0
  %1459 = vmatpush.bf16.msra.mxu0 %v915
  %1460 = vmatpush.bf16.msra.mxu0 %v911
  %1461 = vmatpush.bf16.msra.mxu0 %v907
  %1462 = vmatpush.bf16.msra.mxu0 %v903
  %1463 = vmatpush.bf16.msra.mxu0 %v899
  %1464 = vmatpush.bf16.msra.mxu0 %v895
  %1465 = vmatpush.bf16.msra.mxu0 %v891
  %1466 = vmatpush.bf16.msra.mxu0 %v887
  %1467 = vmatmul.bf16.gmra.mxu0 %v53
  %v1468 = vpop.f32.mrf.mxu0
  %v1469 = vadd.f32 %v1455, %v1468
  %v1470 = vpop.f32.mrf.mxu0
  %v1471 = vadd.f32 %v1457, %v1470
  %1472 = vdwg.mxu0
  %1473 = vmatpush.bf16.msra.mxu0 %v947
  %1474 = vmatpush.bf16.msra.mxu0 %v943
  %1475 = vmatpush.bf16.msra.mxu0 %v939
  %1476 = vmatpush.bf16.msra.mxu0 %v935
  %1477 = vmatpush.bf16.msra.mxu0 %v931
  %1478 = vmatpush.bf16.msra.mxu0 %v927
  %1479 = vmatpush.bf16.msra.mxu0 %v923
  %1480 = vmatpush.bf16.msra.mxu0 %v919
  %1481 = vmatmul.bf16.gmra.mxu0 %v54
  %v1482 = vpop.f32.mrf.mxu0
  %v1483 = vadd.f32 %v1469, %v1482
  %v1484 = vpop.f32.mrf.mxu0
  %v1485 = vadd.f32 %v1471, %v1484
  %1486 = vdwg.mxu0
  %1487 = vmatpush.bf16.msra.mxu0 %v979
  %1488 = vmatpush.bf16.msra.mxu0 %v975
  %1489 = vmatpush.bf16.msra.mxu0 %v971
  %1490 = vmatpush.bf16.msra.mxu0 %v967
  %1491 = vmatpush.bf16.msra.mxu0 %v963
  %1492 = vmatpush.bf16.msra.mxu0 %v959
  %1493 = vmatpush.bf16.msra.mxu0 %v955
  %1494 = vmatpush.bf16.msra.mxu0 %v951
  %1495 = vmatmul.bf16.gmra.mxu0 %v55
  %v1496 = vpop.f32.mrf.mxu0
  %v1497 = vadd.f32 %v1483, %v1496
  %v1498 = vpop.f32.mrf.mxu0
  %v1499 = vadd.f32 %v1485, %v1498
  %1500 = vdwg.mxu0
  %1501 = vmatpush.bf16.msra.mxu0 %v1011
  %1502 = vmatpush.bf16.msra.mxu0 %v1007
  %1503 = vmatpush.bf16.msra.mxu0 %v1003
  %1504 = vmatpush.bf16.msra.mxu0 %v999
  %1505 = vmatpush.bf16.msra.mxu0 %v995
  %1506 = vmatpush.bf16.msra.mxu0 %v991
  %1507 = vmatpush.bf16.msra.mxu0 %v987
  %1508 = vmatpush.bf16.msra.mxu0 %v983
  %1509 = vmatmul.bf16.gmra.mxu0 %v56
  %v1510 = vpop.f32.mrf.mxu0
  %v1511 = vadd.f32 %v1497, %v1510
  %v1512 = vpop.f32.mrf.mxu0
  %v1513 = vadd.f32 %v1499, %v1512
  %1514 = vdwg.mxu0
  %1515 = vmatpush.bf16.msra.mxu0 %v1043
  %1516 = vmatpush.bf16.msra.mxu0 %v1039
  %1517 = vmatpush.bf16.msra.mxu0 %v1035
  %1518 = vmatpush.bf16.msra.mxu0 %v1031
  %1519 = vmatpush.bf16.msra.mxu0 %v1027
  %1520 = vmatpush.bf16.msra.mxu0 %v1023
  %1521 = vmatpush.bf16.msra.mxu0 %v1019
  %1522 = vmatpush.bf16.msra.mxu0 %v1015
  %1523 = vmatmul.bf16.gmra.mxu0 %v57
  %v1524 = vpop.f32.mrf.mxu0
  %v1525 = vadd.f32 %v1511, %v1524
  %v1526 = vpop.f32.mrf.mxu0
  %v1527 = vadd.f32 %v1513, %v1526
  %1528 = vdwg.mxu0
  %1529 = vmatpush.bf16.msra.mxu0 0
  %1530 = vmatpush.bf16.msra.mxu0 0
  %1531 = vmatpush.bf16.msra.mxu0 0
  %1532 = vmatpush.bf16.msra.mxu0 0
  %1533 = vmatpush.bf16.msra.mxu0 0
  %1534 = vmatpush.bf16.msra.mxu0 0
  %1535 = vmatpush.bf16.msra.mxu0 0
  %1536 = vmatpush.bf16.msra.mxu0 %v1047
  %1537 = vmatmul.bf16.gmra.mxu0 %v1247
  %v1538 = vpop.f32.mrf.mxu0
  %v1539 = vadd.f32 %v1525, %v1538
  %v1540 = vpop.f32.mrf.mxu0
  %v1541 = vadd.f32 %v1527, %v1540
  %1542 = vdwg.mxu0
  %1543 = vmatpush.bf16.msra.mxu0 %v884
  %1544 = vmatpush.bf16.msra.mxu0 %v880
  %1545 = vmatpush.bf16.msra.mxu0 %v876
  %1546 = vmatpush.bf16.msra.mxu0 %v872
  %1547 = vmatpush.bf16.msra.mxu0 %v868
  %1548 = vmatpush.bf16.msra.mxu0 %v864
  %1549 = vmatpush.bf16.msra.mxu0 %v860
  %1550 = vmatpush.bf16.msra.mxu0 %v856
  %1551 = vmatmul.bf16.gmra.mxu0 %v52
  %v1552 = vpop.f32.mrf.mxu0
  %v1553 = vadd.f32 %v260, %v1552
  %v1554 = vpop.f32.mrf.mxu0
  %v1555 = vadd.f32 %v260, %v1554
  %1556 = vdwg.mxu0
  %1557 = vmatpush.bf16.msra.mxu0 %v916
  %1558 = vmatpush.bf16.msra.mxu0 %v912
  %1559 = vmatpush.bf16.msra.mxu0 %v908
  %1560 = vmatpush.bf16.msra.mxu0 %v904
  %1561 = vmatpush.bf16.msra.mxu0 %v900
  %1562 = vmatpush.bf16.msra.mxu0 %v896
  %1563 = vmatpush.bf16.msra.mxu0 %v892
  %1564 = vmatpush.bf16.msra.mxu0 %v888
  %1565 = vmatmul.bf16.gmra.mxu0 %v53
  %v1566 = vpop.f32.mrf.mxu0
  %v1567 = vadd.f32 %v1553, %v1566
  %v1568 = vpop.f32.mrf.mxu0
  %v1569 = vadd.f32 %v1555, %v1568
  %1570 = vdwg.mxu0
  %1571 = vmatpush.bf16.msra.mxu0 %v948
  %1572 = vmatpush.bf16.msra.mxu0 %v944
  %1573 = vmatpush.bf16.msra.mxu0 %v940
  %1574 = vmatpush.bf16.msra.mxu0 %v936
  %1575 = vmatpush.bf16.msra.mxu0 %v932
  %1576 = vmatpush.bf16.msra.mxu0 %v928
  %1577 = vmatpush.bf16.msra.mxu0 %v924
  %1578 = vmatpush.bf16.msra.mxu0 %v920
  %1579 = vmatmul.bf16.gmra.mxu0 %v54
  %v1580 = vpop.f32.mrf.mxu0
  %v1581 = vadd.f32 %v1567, %v1580
  %v1582 = vpop.f32.mrf.mxu0
  %v1583 = vadd.f32 %v1569, %v1582
  %1584 = vdwg.mxu0
  %1585 = vmatpush.bf16.msra.mxu0 %v980
  %1586 = vmatpush.bf16.msra.mxu0 %v976
  %1587 = vmatpush.bf16.msra.mxu0 %v972
  %1588 = vmatpush.bf16.msra.mxu0 %v968
  %1589 = vmatpush.bf16.msra.mxu0 %v964
  %1590 = vmatpush.bf16.msra.mxu0 %v960
  %1591 = vmatpush.bf16.msra.mxu0 %v956
  %1592 = vmatpush.bf16.msra.mxu0 %v952
  %1593 = vmatmul.bf16.gmra.mxu0 %v55
  %v1594 = vpop.f32.mrf.mxu0
  %v1595 = vadd.f32 %v1581, %v1594
  %v1596 = vpop.f32.mrf.mxu0
  %v1597 = vadd.f32 %v1583, %v1596
  %1598 = vdwg.mxu0
  %1599 = vmatpush.bf16.msra.mxu0 %v1012
  %1600 = vmatpush.bf16.msra.mxu0 %v1008
  %1601 = vmatpush.bf16.msra.mxu0 %v1004
  %1602 = vmatpush.bf16.msra.mxu0 %v1000
  %1603 = vmatpush.bf16.msra.mxu0 %v996
  %1604 = vmatpush.bf16.msra.mxu0 %v992
  %1605 = vmatpush.bf16.msra.mxu0 %v988
  %1606 = vmatpush.bf16.msra.mxu0 %v984
  %1607 = vmatmul.bf16.gmra.mxu0 %v56
  %v1608 = vpop.f32.mrf.mxu0
  %v1609 = vadd.f32 %v1595, %v1608
  %v1610 = vpop.f32.mrf.mxu0
  %v1611 = vadd.f32 %v1597, %v1610
  %1612 = vdwg.mxu0
  %1613 = vmatpush.bf16.msra.mxu0 %v1044
  %1614 = vmatpush.bf16.msra.mxu0 %v1040
  %1615 = vmatpush.bf16.msra.mxu0 %v1036
  %1616 = vmatpush.bf16.msra.mxu0 %v1032
  %1617 = vmatpush.bf16.msra.mxu0 %v1028
  %1618 = vmatpush.bf16.msra.mxu0 %v1024
  %1619 = vmatpush.bf16.msra.mxu0 %v1020
  %1620 = vmatpush.bf16.msra.mxu0 %v1016
  %1621 = vmatmul.bf16.gmra.mxu0 %v57
  %v1622 = vpop.f32.mrf.mxu0
  %v1623 = vadd.f32 %v1609, %v1622
  %v1624 = vpop.f32.mrf.mxu0
  %v1625 = vadd.f32 %v1611, %v1624
  %1626 = vdwg.mxu0
  %1627 = vmatpush.bf16.msra.mxu0 0
  %1628 = vmatpush.bf16.msra.mxu0 0
  %1629 = vmatpush.bf16.msra.mxu0 0
  %1630 = vmatpush.bf16.msra.mxu0 0
  %1631 = vmatpush.bf16.msra.mxu0 0
  %1632 = vmatpush.bf16.msra.mxu0 0
  %1633 = vmatpush.bf16.msra.mxu0 0
  %1634 = vmatpush.bf16.msra.mxu0 %v1048
  %1635 = vmatmul.bf16.gmra.mxu0 %v1247
  %v1636 = vpop.f32.mrf.mxu0
  %v1637 = vadd.f32 %v1623, %v1636
  %v1638 = vpop.f32.mrf.mxu0
  %v1639 = vadd.f32 %v1625, %v1638
  %1640 = vdwg.mxu0
  %v1641 = vmax.f32 %v1343, 0.0
  %v1642 = vmax.f32 %v1441, 0.0
  %v1643 = vmax.f32 %v1539, 0.0
  %v1644 = vmax.f32 %v1637, 0.0
  %v1645 = vmax.f32 %v1345, 0.0
  %v1646 = vmax.f32 %v1443, 0.0
  %v1647 = vmax.f32 %v1541, 0.0
  %v1648 = vmax.f32 %v1639, 0.0
  %v1649 = vld [vmem:[%s4] sm:$0xff]
  %v1650 = vld [vmem:[%s4 + $0x8] sm:$0xff]
  %v1651 = vld [vmem:[%s4 + $0x10] sm:$0xff]
  %v1652 = vld [vmem:[%s4 + $0x18] sm:$0xff]
  %v1653 = vld [vmem:[%s4 + $0x20] sm:$0xff]
  %v1654 = vld [vmem:[%s4 + $0x28] sm:$0xff]
  %v1655 = vld [vmem:[%s4 + $0x30] sm:$0xff]
  %v1656 = vld [vmem:[%s4 + $0x38] sm:$0xff]
  %v1657 = vld [vmem:[%s4 + $0x40] sm:$0xff]
  %v1658 = vld [vmem:[%s4 + $0x48] sm:$0xff]
  %v1659 = vld [vmem:[%s4 + $0x50] sm:$0xff]
  %v1660 = vld [vmem:[%s4 + $0x58] sm:$0xff]
  %v1661 = vld [vmem:[%s4 + $0x60] sm:$0xff]
  %v1662 = vld [vmem:[%s4 + $0x68] sm:$0xff]
  %v1663 = vld [vmem:[%s4 + $0x70] sm:$0xff]
  %v1664 = vld [vmem:[%s4 + $0x78] sm:$0xff]
  %v1665 = vld [vmem:[%s4 + $0x80] sm:$0xff]
  %v1666 = vld [vmem:[%s4 + $0x88] sm:$0xff]
  %v1667 = vld [vmem:[%s4 + $0x90] sm:$0xff]
  %v1668 = vld [vmem:[%s4 + $0x98] sm:$0xff]
  %v1669 = vld [vmem:[%s4 + $0xa0] sm:$0xff]
  %v1670 = vld [vmem:[%s4 + $0xa8] sm:$0xff]
  %v1671 = vld [vmem:[%s4 + $0xb0] sm:$0xff]
  %v1672 = vld [vmem:[%s4 + $0xb8] sm:$0xff]
  %v1673 = vld [vmem:[%s4 + $0xc0] sm:$0xff]
  %v1674 = vld [vmem:[%s4 + $0xc8] sm:$0xff]
  %v1675 = vld [vmem:[%s4 + $0xd0] sm:$0xff]
  %v1676 = vld [vmem:[%s4 + $0xd8] sm:$0xff]
  %v1677 = vld [vmem:[%s4 + $0xe0] sm:$0xff]
  %v1678 = vld [vmem:[%s4 + $0xe8] sm:$0xff]
  %v1679 = vld [vmem:[%s4 + $0xf0] sm:$0xff]
  %v1680 = vld [vmem:[%s4 + $0xf8] sm:$0xff]
  %v1681 = vld [vmem:[%s4 + $0x100] sm:$0xff]
  %v1682 = vld [vmem:[%s4 + $0x108] sm:$0xff]
  %v1683 = vld [vmem:[%s4 + $0x110] sm:$0xff]
  %v1684 = vld [vmem:[%s4 + $0x118] sm:$0xff]
  %v1685 = vld [vmem:[%s4 + $0x120] sm:$0xff]
  %v1686 = vld [vmem:[%s4 + $0x128] sm:$0xff]
  %v1687 = vld [vmem:[%s4 + $0x130] sm:$0xff]
  %v1688 = vld [vmem:[%s4 + $0x138] sm:$0xff]
  %v1689 = vld [vmem:[%s4 + $0x140] sm:$0xff]
  %v1690 = vld [vmem:[%s4 + $0x148] sm:$0xff]
  %v1691 = vld [vmem:[%s4 + $0x150] sm:$0xff]
  %v1692 = vld [vmem:[%s4 + $0x158] sm:$0xff]
  %v1693 = vld [vmem:[%s4 + $0x160] sm:$0xff]
  %v1694 = vld [vmem:[%s4 + $0x168] sm:$0xff]
  %v1695 = vld [vmem:[%s4 + $0x170] sm:$0xff]
  %v1696 = vld [vmem:[%s4 + $0x178] sm:$0xff]
  %v1697 = vld [vmem:[%s4 + $0x180] sm:$0xff]
  %v1698 = vld [vmem:[%s4 + $0x188] sm:$0xff]
  %v1699 = vld [vmem:[%s5] sm:$0x1]
  %v1701 = vperm.slane %v1699, 0
  %v1704 = vsel %vm1245, %v1644, 0
  %v1707 = vsel %vm1245, %v1648, 0
  %1709 = vmatpush.msra.mxu0 %v1664
  %1710 = vmatpush.msra.mxu0 %v1663
  %1711 = vmatpush.msra.mxu0 %v1662
  %1712 = vmatpush.msra.mxu0 %v1661
  %1713 = vmatpush.msra.mxu0 %v1660
  %1714 = vmatpush.msra.mxu0 %v1659
  %1715 = vmatpush.msra.mxu0 %v1658
  %1716 = vmatpush.msra.mxu0 %v1657
  %1717 = vmatpush.msra.mxu0 %v1656
  %1718 = vmatpush.msra.mxu0 %v1655
  %1719 = vmatpush.msra.mxu0 %v1654
  %1720 = vmatpush.msra.mxu0 %v1653
  %1721 = vmatpush.msra.mxu0 %v1652
  %1722 = vmatpush.msra.mxu0 %v1651
  %1723 = vmatpush.msra.mxu0 %v1650
  %1724 = vmatpush.msra.mxu0 %v1649
  %1725 = vmatmul.f32.gmra.mxu0 %v1641
  %v1726 = vpop.f32.mrf.mxu0
  %v1727 = vadd.f32 %v1701, %v1726
  %1728 = vmatmul.f32.gmra.mxu0 %v1645
  %v1729 = vpop.f32.mrf.mxu0
  %v1730 = vadd.f32 %v1701, %v1729
  %1731 = vdwg.mxu0
  %1732 = vmatpush.msra.mxu0 %v1680
  %1733 = vmatpush.msra.mxu0 %v1679
  %1734 = vmatpush.msra.mxu0 %v1678
  %1735 = vmatpush.msra.mxu0 %v1677
  %1736 = vmatpush.msra.mxu0 %v1676
  %1737 = vmatpush.msra.mxu0 %v1675
  %1738 = vmatpush.msra.mxu0 %v1674
  %1739 = vmatpush.msra.mxu0 %v1673
  %1740 = vmatpush.msra.mxu0 %v1672
  %1741 = vmatpush.msra.mxu0 %v1671
  %1742 = vmatpush.msra.mxu0 %v1670
  %1743 = vmatpush.msra.mxu0 %v1669
  %1744 = vmatpush.msra.mxu0 %v1668
  %1745 = vmatpush.msra.mxu0 %v1667
  %1746 = vmatpush.msra.mxu0 %v1666
  %1747 = vmatpush.msra.mxu0 %v1665
  %1748 = vmatmul.f32.gmra.mxu0 %v1642
  %v1749 = vpop.f32.mrf.mxu0
  %v1750 = vadd.f32 %v1727, %v1749
  %1751 = vmatmul.f32.gmra.mxu0 %v1646
  %v1752 = vpop.f32.mrf.mxu0
  %v1753 = vadd.f32 %v1730, %v1752
  %1754 = vdwg.mxu0
  %1755 = vmatpush.msra.mxu0 %v1696
  %1756 = vmatpush.msra.mxu0 %v1695
  %1757 = vmatpush.msra.mxu0 %v1694
  %1758 = vmatpush.msra.mxu0 %v1693
  %1759 = vmatpush.msra.mxu0 %v1692
  %1760 = vmatpush.msra.mxu0 %v1691
  %1761 = vmatpush.msra.mxu0 %v1690
  %1762 = vmatpush.msra.mxu0 %v1689
  %1763 = vmatpush.msra.mxu0 %v1688
  %1764 = vmatpush.msra.mxu0 %v1687
  %1765 = vmatpush.msra.mxu0 %v1686
  %1766 = vmatpush.msra.mxu0 %v1685
  %1767 = vmatpush.msra.mxu0 %v1684
  %1768 = vmatpush.msra.mxu0 %v1683
  %1769 = vmatpush.msra.mxu0 %v1682
  %1770 = vmatpush.msra.mxu0 %v1681
  %1771 = vmatmul.f32.gmra.mxu0 %v1643
  %v1772 = vpop.f32.mrf.mxu0
  %v1773 = vadd.f32 %v1750, %v1772
  %1774 = vmatmul.f32.gmra.mxu0 %v1647
  %v1775 = vpop.f32.mrf.mxu0
  %v1776 = vadd.f32 %v1753, %v1775
  %1777 = vdwg.mxu0
  %1778 = vmatpush.msra.mxu0 0.0
  %1779 = vmatpush.msra.mxu0 0.0
  %1780 = vmatpush.msra.mxu0 0.0
  %1781 = vmatpush.msra.mxu0 0.0
  %1782 = vmatpush.msra.mxu0 0.0
  %1783 = vmatpush.msra.mxu0 0.0
  %1784 = vmatpush.msra.mxu0 0.0
  %1785 = vmatpush.msra.mxu0 0.0
  %1786 = vmatpush.msra.mxu0 0.0
  %1787 = vmatpush.msra.mxu0 0.0
  %1788 = vmatpush.msra.mxu0 0.0
  %1789 = vmatpush.msra.mxu0 0.0
  %1790 = vmatpush.msra.mxu0 0.0
  %1791 = vmatpush.msra.mxu0 0.0
  %1792 = vmatpush.msra.mxu0 %v1698
  %1793 = vmatpush.msra.mxu0 %v1697
  %1794 = vmatmul.f32.gmra.mxu0 %v1704
  %v1795 = vpop.f32.mrf.mxu0
  %v1796 = vadd.f32 %v1773, %v1795
  %1797 = vmatmul.f32.gmra.mxu0 %v1707
  %v1798 = vpop.f32.mrf.mxu0
  %v1799 = vadd.f32 %v1776, %v1798
  %1800 = vdwg.mxu0
  %v1801 = vmul.f32 %v1796, 0.5
  %v1802 = vmul.f32 %v1799, 0.5
  %v1803 = vmul.f32 %v1801, 1.442695
  %v1804 = vpow.pop %v1803
  %v1805 = vmul.f32 %v1802, 1.442695
  %v1806 = vpow.pop %v1805
  %v1807 = vld [vmem:[%s1] sm:$0xff]
  %v1808 = vld [vmem:[%s1 + $0x8] sm:$0xff]
  %1811 = vrot.lane.b32.xlu0 %v1804, 108
  %v1812 = vpop.permute.xlu0 %1811
  %1813 = vrot.lane.b32.xlu0 %v1806, 108
  %v1814 = vpop.permute.xlu0 %1813
  %v1817 = vmul.f32 %v1807, %v1812
  %v1818 = vmul.f32 %v1808, %v1814
  %v1819 = vadd.f32 %v1796, %v1817
  %v1820 = vadd.f32 %v1799, %v1818
  %v1821 = vpack.c.bf16 %v1820, %v1819
  %v1822 = vld [vmem:[%s6] sm:$0xff]
  %v1823 = vld [vmem:[%s6 + $0x8] sm:$0xff]
  %v1824 = vld [vmem:[%s6 + $0x10] sm:$0xff]
  %v1825 = vld [vmem:[%s6 + $0x18] sm:$0xff]
  %v1826 = vld [vmem:[%s6 + $0x20] sm:$0x33]
  %v1827 = vld [vmem:[%s6 + $0x28] sm:$0x33]
  %v1828 = vld [vmem:[%s7] sm:$0xf]
  %v1830 = vperm.slane %v1828, 0
  %v1831 = vperm.slane %v1828, 1
  %v1832 = vperm.slane %v1828, 2
  %v1833 = vperm.slane %v1828, 3
  %v1844 = vunpack.c.l.b16 %v1822
  %v1845 = vunpack.c.h.b16 %v1822
  %v1846 = vunpack.c.l.b16 %v1823
  %v1847 = vunpack.c.h.b16 %v1823
  %v1848 = vunpack.c.l.b16 %v1824
  %v1849 = vunpack.c.h.b16 %v1824
  %v1850 = vunpack.c.l.b16 %v1825
  %v1851 = vunpack.c.h.b16 %v1825
  %v1852 = vunpack.c.l.b16 %v1826
  %v1853 = vunpack.c.h.b16 %v1826
  %v1854 = vunpack.c.l.b16 %v1827
  %v1855 = vunpack.c.h.b16 %v1827
  %v1856 = vpack.c.b16 %v1848, %v1844
  %v1857 = vpack.c.b16 %v1849, %v1845
  %v1858 = vpack.c.b16 %v1850, %v1846
  %v1859 = vpack.c.b16 %v1851, %v1847
  %v1860 = vpack.c.b16 %v1852, %v1852
  %v1861 = vpack.c.b16 %v1853, %v1853
  %v1862 = vpack.c.b16 %v1854, %v1854
  %v1863 = vpack.c.b16 %v1855, %v1855
  %vm1868 = vcmask 162816
  %v1870 = vsel %vm1868, %v1821, 0
  %vm1872 = vcmask 1041408
  %v1874 = vsel %vm1872, %v1860, 0
  %v1877 = vsel %vm1872, %v1861, 0
  %v1880 = vsel %vm1872, %v1862, 0
  %v1883 = vsel %vm1872, %v1863, 0
  %1885 = vmatpush.bf16.msra.mxu0 0
  %1886 = vmatpush.bf16.msra.mxu0 0
  %1887 = vmatpush.bf16.msra.mxu0 0
  %1888 = vmatpush.bf16.msra.mxu0 0
  %1889 = vmatpush.bf16.msra.mxu0 0
  %1890 = vmatpush.bf16.msra.mxu0 0
  %1891 = vmatpush.bf16.msra.mxu0 %v1874
  %1892 = vmatpush.bf16.msra.mxu0 %v1856
  %1893 = vmatmul.bf16.gmra.mxu0 %v1870
  %v1894 = vpop.f32.mrf.mxu0
  %v1895 = vadd.f32 %v1830, %v1894
  %v1896 = vpop.f32.mrf.mxu0
  %v1897 = vadd.f32 %v1830, %v1896
  %1898 = vdwg.mxu0
  %1899 = vmatpush.bf16.msra.mxu0 0
  %1900 = vmatpush.bf16.msra.mxu0 0
  %1901 = vmatpush.bf16.msra.mxu0 0
  %1902 = vmatpush.bf16.msra.mxu0 0
  %1903 = vmatpush.bf16.msra.mxu0 0
  %1904 = vmatpush.bf16.msra.mxu0 0
  %1905 = vmatpush.bf16.msra.mxu0 %v1877
  %1906 = vmatpush.bf16.msra.mxu0 %v1857
  %1907 = vmatmul.bf16.gmra.mxu0 %v1870
  %v1908 = vpop.f32.mrf.mxu0
  %v1909 = vadd.f32 %v1831, %v1908
  %v1910 = vpop.f32.mrf.mxu0
  %v1911 = vadd.f32 %v1831, %v1910
  %1912 = vdwg.mxu0
  %1913 = vmatpush.bf16.msra.mxu0 0
  %1914 = vmatpush.bf16.msra.mxu0 0
  %1915 = vmatpush.bf16.msra.mxu0 0
  %1916 = vmatpush.bf16.msra.mxu0 0
  %1917 = vmatpush.bf16.msra.mxu0 0
  %1918 = vmatpush.bf16.msra.mxu0 0
  %1919 = vmatpush.bf16.msra.mxu0 %v1880
  %1920 = vmatpush.bf16.msra.mxu0 %v1858
  %1921 = vmatmul.bf16.gmra.mxu0 %v1870
  %v1922 = vpop.f32.mrf.mxu0
  %v1923 = vadd.f32 %v1832, %v1922
  %v1924 = vpop.f32.mrf.mxu0
  %v1925 = vadd.f32 %v1832, %v1924
  %1926 = vdwg.mxu0
  %1927 = vmatpush.bf16.msra.mxu0 0
  %1928 = vmatpush.bf16.msra.mxu0 0
  %1929 = vmatpush.bf16.msra.mxu0 0
  %1930 = vmatpush.bf16.msra.mxu0 0
  %1931 = vmatpush.bf16.msra.mxu0 0
  %1932 = vmatpush.bf16.msra.mxu0 0
  %1933 = vmatpush.bf16.msra.mxu0 %v1883
  %1934 = vmatpush.bf16.msra.mxu0 %v1859
  %1935 = vmatmul.bf16.gmra.mxu0 %v1870
  %v1936 = vpop.f32.mrf.mxu0
  %v1937 = vadd.f32 %v1833, %v1936
  %v1938 = vpop.f32.mrf.mxu0
  %v1939 = vadd.f32 %v1833, %v1938
  %1940 = vdwg.mxu0
  %v1941 = vmax.f32 %v1895, 0.0
  %v1942 = vmax.f32 %v1909, 0.0
  %v1943 = vmax.f32 %v1923, 0.0
  %v1944 = vmax.f32 %v1937, 0.0
  %v1945 = vmax.f32 %v1897, 0.0
  %v1946 = vmax.f32 %v1911, 0.0
  %v1947 = vmax.f32 %v1925, 0.0
  %v1948 = vmax.f32 %v1939, 0.0
  %v1949 = vpack.c.bf16 %v1945, %v1941
  %v1950 = vpack.c.bf16 %v1946, %v1942
  %v1951 = vpack.c.bf16 %v1947, %v1943
  %v1952 = vpack.c.bf16 %v1948, %v1944
  %v1953 = vld [vmem:[%s8] sm:$0xff]
  %v1954 = vld [vmem:[%s8 + $0x8] sm:$0xff]
  %v1955 = vld [vmem:[%s8 + $0x10] sm:$0xff]
  %v1956 = vld [vmem:[%s8 + $0x18] sm:$0xf]
  %v1957 = vld [vmem:[%s8 + $0x1c] sm:$0xff]
  %v1958 = vld [vmem:[%s8 + $0x24] sm:$0xff]
  %v1959 = vld [vmem:[%s8 + $0x2c] sm:$0xff]
  %v1960 = vld [vmem:[%s8 + $0x34] sm:$0xf]
  %v1961 = vld [vmem:[%s8 + $0x38] sm:$0xff]
  %v1962 = vld [vmem:[%s8 + $0x40] sm:$0xff]
  %v1963 = vld [vmem:[%s8 + $0x48] sm:$0xff]
  %v1964 = vld [vmem:[%s8 + $0x50] sm:$0xf]
  %v1965 = vld [vmem:[%s8 + $0x54] sm:$0xff]
  %v1966 = vld [vmem:[%s8 + $0x5c] sm:$0xff]
  %v1967 = vld [vmem:[%s8 + $0x64] sm:$0xff]
  %v1968 = vld [vmem:[%s8 + $0x6c] sm:$0xf]
  %v1969 = vld [vmem:[%s8 + $0x70] sm:$0xff]
  %v1970 = vld [vmem:[%s8 + $0x78] sm:$0xff]
  %v1971 = vld [vmem:[%s8 + $0x80] sm:$0xff]
  %v1972 = vld [vmem:[%s8 + $0x88] sm:$0xf]
  %v1973 = vld [vmem:[%s8 + $0x8c] sm:$0xff]
  %v1974 = vld [vmem:[%s8 + $0x94] sm:$0xff]
  %v1975 = vld [vmem:[%s8 + $0x9c] sm:$0xff]
  %v1976 = vld [vmem:[%s8 + $0xa4] sm:$0xf]
  %v1977 = vld [vmem:[%s8 + $0xa8] sm:$0xff]
  %v1978 = vld [vmem:[%s8 + $0xb0] sm:$0xff]
  %v1979 = vld [vmem:[%s8 + $0xb8] sm:$0xff]
  %v1980 = vld [vmem:[%s8 + $0xc0] sm:$0xf]
  %v1981 = vld [vmem:[%s8 + $0xc4] sm:$0xff]
  %v1982 = vld [vmem:[%s8 + $0xcc] sm:$0xff]
  %v1983 = vld [vmem:[%s8 + $0xd4] sm:$0xff]
  %v1984 = vld [vmem:[%s8 + $0xdc] sm:$0xf]
  %v1985 = vld [vmem:[%s8 + $0xe0] sm:$0xff]
  %v1986 = vld [vmem:[%s8 + $0xe8] sm:$0xff]
  %v1987 = vld [vmem:[%s8 + $0xf0] sm:$0xff]
  %v1988 = vld [vmem:[%s8 + $0xf8] sm:$0xf]
  %v1989 = vld [vmem:[%s8 + $0xfc] sm:$0xff]
  %v1990 = vld [vmem:[%s8 + $0x104] sm:$0xff]
  %v1991 = vld [vmem:[%s8 + $0x10c] sm:$0xff]
  %v1992 = vld [vmem:[%s8 + $0x114] sm:$0xf]
  %v1993 = vld [vmem:[%s8 + $0x118] sm:$0xff]
  %v1994 = vld [vmem:[%s8 + $0x120] sm:$0xff]
  %v1995 = vld [vmem:[%s8 + $0x128] sm:$0xff]
  %v1996 = vld [vmem:[%s8 + $0x130] sm:$0xf]
  %v1997 = vld [vmem:[%s8 + $0x134] sm:$0xff]
  %v1998 = vld [vmem:[%s8 + $0x13c] sm:$0xff]
  %v1999 = vld [vmem:[%s8 + $0x144] sm:$0xff]
  %v2000 = vld [vmem:[%s8 + $0x14c] sm:$0xf]
  %v2001 = vld [vmem:[%s8 + $0x150] sm:$0xff]
  %v2002 = vld [vmem:[%s8 + $0x158] sm:$0xff]
  %v2003 = vld [vmem:[%s8 + $0x160] sm:$0xff]
  %v2004 = vld [vmem:[%s8 + $0x168] sm:$0xf]
  %v2005 = vld [vmem:[%s8 + $0x16c] sm:$0xff]
  %v2006 = vld [vmem:[%s8 + $0x174] sm:$0xff]
  %v2007 = vld [vmem:[%s8 + $0x17c] sm:$0xff]
  %v2008 = vld [vmem:[%s8 + $0x184] sm:$0xf]
  %v2009 = vld [vmem:[%s8 + $0x188] sm:$0xff]
  %v2010 = vld [vmem:[%s8 + $0x190] sm:$0xff]
  %v2011 = vld [vmem:[%s8 + $0x198] sm:$0xff]
  %v2012 = vld [vmem:[%s8 + $0x1a0] sm:$0xf]
  %v2013 = vld [vmem:[%s8 + $0x1a4] sm:$0xff]
  %v2014 = vld [vmem:[%s8 + $0x1ac] sm:$0xff]
  %v2015 = vld [vmem:[%s8 + $0x1b4] sm:$0xff]
  %v2016 = vld [vmem:[%s8 + $0x1bc] sm:$0xf]
  %v2017 = vld [vmem:[%s8 + $0x1c0] sm:$0xff]
  %v2018 = vld [vmem:[%s8 + $0x1c8] sm:$0xff]
  %v2019 = vld [vmem:[%s8 + $0x1d0] sm:$0xff]
  %v2020 = vld [vmem:[%s8 + $0x1d8] sm:$0xf]
  %v2021 = vld [vmem:[%s8 + $0x1dc] sm:$0xff]
  %v2022 = vld [vmem:[%s8 + $0x1e4] sm:$0xff]
  %v2023 = vld [vmem:[%s8 + $0x1ec] sm:$0xff]
  %v2024 = vld [vmem:[%s8 + $0x1f4] sm:$0xf]
  %v2025 = vld [vmem:[%s8 + $0x1f8] sm:$0xff]
  %v2026 = vld [vmem:[%s8 + $0x200] sm:$0xff]
  %v2027 = vld [vmem:[%s8 + $0x208] sm:$0xff]
  %v2028 = vld [vmem:[%s8 + $0x210] sm:$0xf]
  %v2029 = vld [vmem:[%s8 + $0x214] sm:$0xff]
  %v2030 = vld [vmem:[%s8 + $0x21c] sm:$0xff]
  %v2031 = vld [vmem:[%s8 + $0x224] sm:$0xff]
  %v2032 = vld [vmem:[%s8 + $0x22c] sm:$0xf]
  %v2033 = vld [vmem:[%s8 + $0x230] sm:$0xff]
  %v2034 = vld [vmem:[%s8 + $0x238] sm:$0xff]
  %v2035 = vld [vmem:[%s8 + $0x240] sm:$0xff]
  %v2036 = vld [vmem:[%s8 + $0x248] sm:$0xf]
  %v2037 = vld [vmem:[%s8 + $0x24c] sm:$0xff]
  %v2038 = vld [vmem:[%s8 + $0x254] sm:$0xff]
  %v2039 = vld [vmem:[%s8 + $0x25c] sm:$0xff]
  %v2040 = vld [vmem:[%s8 + $0x264] sm:$0xf]
  %v2041 = vld [vmem:[%s8 + $0x268] sm:$0xff]
  %v2042 = vld [vmem:[%s8 + $0x270] sm:$0xff]
  %v2043 = vld [vmem:[%s8 + $0x278] sm:$0xff]
  %v2044 = vld [vmem:[%s8 + $0x280] sm:$0xf]
  %v2045 = vld [vmem:[%s8 + $0x284] sm:$0xff]
  %v2046 = vld [vmem:[%s8 + $0x28c] sm:$0xff]
  %v2047 = vld [vmem:[%s8 + $0x294] sm:$0xff]
  %v2048 = vld [vmem:[%s8 + $0x29c] sm:$0xf]
  %v2049 = vld [vmem:[%s8 + $0x2a0] sm:$0xff]
  %v2050 = vld [vmem:[%s8 + $0x2a8] sm:$0xff]
  %v2051 = vld [vmem:[%s8 + $0x2b0] sm:$0xff]
  %v2052 = vld [vmem:[%s8 + $0x2b8] sm:$0xf]
  %v2053 = vld [vmem:[%s8 + $0x2bc] sm:$0xff]
  %v2054 = vld [vmem:[%s8 + $0x2c4] sm:$0xff]
  %v2055 = vld [vmem:[%s8 + $0x2cc] sm:$0xff]
  %v2056 = vld [vmem:[%s8 + $0x2d4] sm:$0xf]
  %v2057 = vld [vmem:[%s8 + $0x2d8] sm:$0xff]
  %v2058 = vld [vmem:[%s8 + $0x2e0] sm:$0xff]
  %v2059 = vld [vmem:[%s8 + $0x2e8] sm:$0xff]
  %v2060 = vld [vmem:[%s8 + $0x2f0] sm:$0xf]
  %v2061 = vld [vmem:[%s8 + $0x2f4] sm:$0xff]
  %v2062 = vld [vmem:[%s8 + $0x2fc] sm:$0xff]
  %v2063 = vld [vmem:[%s8 + $0x304] sm:$0xff]
  %v2064 = vld [vmem:[%s8 + $0x30c] sm:$0xf]
  %v2065 = vld [vmem:[%s8 + $0x310] sm:$0xff]
  %v2066 = vld [vmem:[%s8 + $0x318] sm:$0xff]
  %v2067 = vld [vmem:[%s8 + $0x320] sm:$0xff]
  %v2068 = vld [vmem:[%s8 + $0x328] sm:$0xf]
  %v2069 = vld [vmem:[%s8 + $0x32c] sm:$0xff]
  %v2070 = vld [vmem:[%s8 + $0x334] sm:$0xff]
  %v2071 = vld [vmem:[%s8 + $0x33c] sm:$0xff]
  %v2072 = vld [vmem:[%s8 + $0x344] sm:$0xf]
  %v2073 = vld [vmem:[%s8 + $0x348] sm:$0xff]
  %v2074 = vld [vmem:[%s8 + $0x350] sm:$0xff]
  %v2075 = vld [vmem:[%s8 + $0x358] sm:$0xff]
  %v2076 = vld [vmem:[%s8 + $0x360] sm:$0xf]
  %v2077 = vld [vmem:[%s8 + $0x364] sm:$0xff]
  %v2078 = vld [vmem:[%s8 + $0x36c] sm:$0xff]
  %v2079 = vld [vmem:[%s8 + $0x374] sm:$0xff]
  %v2080 = vld [vmem:[%s8 + $0x37c] sm:$0xf]
  %v2081 = vld [vmem:[%s8 + $0x380] sm:$0xff]
  %v2082 = vld [vmem:[%s8 + $0x388] sm:$0xff]
  %v2083 = vld [vmem:[%s8 + $0x390] sm:$0xff]
  %v2084 = vld [vmem:[%s8 + $0x398] sm:$0xf]
  %v2085 = vld [vmem:[%s8 + $0x39c] sm:$0xff]
  %v2086 = vld [vmem:[%s8 + $0x3a4] sm:$0xff]
  %v2087 = vld [vmem:[%s8 + $0x3ac] sm:$0xff]
  %v2088 = vld [vmem:[%s8 + $0x3b4] sm:$0xf]
  %v2089 = vld [vmem:[%s8 + $0x3b8] sm:$0xff]
  %v2090 = vld [vmem:[%s8 + $0x3c0] sm:$0xff]
  %v2091 = vld [vmem:[%s8 + $0x3c8] sm:$0xff]
  %v2092 = vld [vmem:[%s8 + $0x3d0] sm:$0xf]
  %v2093 = vld [vmem:[%s8 + $0x3d4] sm:$0xff]
  %v2094 = vld [vmem:[%s8 + $0x3dc] sm:$0xff]
  %v2095 = vld [vmem:[%s8 + $0x3e4] sm:$0xff]
  %v2096 = vld [vmem:[%s8 + $0x3ec] sm:$0xf]
  %v2097 = vld [vmem:[%s8 + $0x3f0] sm:$0xff]
  %v2098 = vld [vmem:[%s8 + $0x3f8] sm:$0xff]
  %v2099 = vld [vmem:[%s8 + $0x400] sm:$0xff]
  %v2100 = vld [vmem:[%s8 + $0x408] sm:$0xf]
  %v2101 = vld [vmem:[%s8 + $0x40c] sm:$0xff]
  %v2102 = vld [vmem:[%s8 + $0x414] sm:$0xff]
  %v2103 = vld [vmem:[%s8 + $0x41c] sm:$0xff]
  %v2104 = vld [vmem:[%s8 + $0x424] sm:$0xf]
  %v2105 = vld [vmem:[%s8 + $0x428] sm:$0xff]
  %v2106 = vld [vmem:[%s8 + $0x430] sm:$0xff]
  %v2107 = vld [vmem:[%s8 + $0x438] sm:$0xff]
  %v2108 = vld [vmem:[%s8 + $0x440] sm:$0xf]
  %v2109 = vld [vmem:[%s8 + $0x444] sm:$0xff]
  %v2110 = vld [vmem:[%s8 + $0x44c] sm:$0xff]
  %v2111 = vld [vmem:[%s8 + $0x454] sm:$0xff]
  %v2112 = vld [vmem:[%s8 + $0x45c] sm:$0xf]
  %v2113 = vld [vmem:[%s8 + $0x460] sm:$0xff]
  %v2114 = vld [vmem:[%s8 + $0x468] sm:$0xff]
  %v2115 = vld [vmem:[%s8 + $0x470] sm:$0xff]
  %v2116 = vld [vmem:[%s8 + $0x478] sm:$0xf]
  %v2117 = vld [vmem:[%s8 + $0x47c] sm:$0xff]
  %v2118 = vld [vmem:[%s8 + $0x484] sm:$0xff]
  %v2119 = vld [vmem:[%s8 + $0x48c] sm:$0xff]
  %v2120 = vld [vmem:[%s8 + $0x494] sm:$0xf]
  %v2121 = vld [vmem:[%s8 + $0x498] sm:$0xff]
  %v2122 = vld [vmem:[%s8 + $0x4a0] sm:$0xff]
  %v2123 = vld [vmem:[%s8 + $0x4a8] sm:$0xff]
  %v2124 = vld [vmem:[%s8 + $0x4b0] sm:$0xf]
  %v2125 = vld [vmem:[%s8 + $0x4b4] sm:$0xff]
  %v2126 = vld [vmem:[%s8 + $0x4bc] sm:$0xff]
  %v2127 = vld [vmem:[%s8 + $0x4c4] sm:$0xff]
  %v2128 = vld [vmem:[%s8 + $0x4cc] sm:$0xf]
  %v2129 = vld [vmem:[%s8 + $0x4d0] sm:$0xff]
  %v2130 = vld [vmem:[%s8 + $0x4d8] sm:$0xff]
  %v2131 = vld [vmem:[%s8 + $0x4e0] sm:$0xff]
  %v2132 = vld [vmem:[%s8 + $0x4e8] sm:$0xf]
  %v2133 = vld [vmem:[%s8 + $0x4ec] sm:$0xff]
  %v2134 = vld [vmem:[%s8 + $0x4f4] sm:$0xff]
  %v2135 = vld [vmem:[%s8 + $0x4fc] sm:$0xff]
  %v2136 = vld [vmem:[%s8 + $0x504] sm:$0xf]
  %v2137 = vld [vmem:[%s8 + $0x508] sm:$0xff]
  %v2138 = vld [vmem:[%s8 + $0x510] sm:$0xff]
  %v2139 = vld [vmem:[%s8 + $0x518] sm:$0xff]
  %v2140 = vld [vmem:[%s8 + $0x520] sm:$0xf]
  %v2141 = vld [vmem:[%s8 + $0x524] sm:$0xff]
  %v2142 = vld [vmem:[%s8 + $0x52c] sm:$0xff]
  %v2143 = vld [vmem:[%s8 + $0x534] sm:$0xff]
  %v2144 = vld [vmem:[%s8 + $0x53c] sm:$0xf]
  %v2145 = vld [vmem:[%s8 + $0x540] sm:$0xff]
  %v2146 = vld [vmem:[%s8 + $0x548] sm:$0xff]
  %v2147 = vld [vmem:[%s8 + $0x550] sm:$0xff]
  %v2148 = vld [vmem:[%s8 + $0x558] sm:$0xf]
  %v2149 = vld [vmem:[%s8 + $0x55c] sm:$0xff]
  %v2150 = vld [vmem:[%s8 + $0x564] sm:$0xff]
  %v2151 = vld [vmem:[%s8 + $0x56c] sm:$0xff]
  %v2152 = vld [vmem:[%s8 + $0x574] sm:$0xf]
  %v2153 = vld [vmem:[%s9] sm:$0x7f]
  %v2155 = vperm.slane %v2153, 0
  %v2156 = vperm.slane %v2153, 1
  %v2157 = vperm.slane %v2153, 2
  %v2158 = vperm.slane %v2153, 3
  %v2159 = vperm.slane %v2153, 4
  %v2160 = vperm.slane %v2153, 5
  %v2161 = vperm.slane %v2153, 6
  %v2369 = vunpack.c.l.b16 %v1953
  %v2370 = vunpack.c.h.b16 %v1953
  %v2371 = vunpack.c.l.b16 %v1954
  %v2372 = vunpack.c.h.b16 %v1954
  %v2373 = vunpack.c.l.b16 %v1955
  %v2374 = vunpack.c.h.b16 %v1955
  %v2375 = vunpack.c.l.b16 %v1956
  %v2376 = vunpack.c.l.b16 %v1957
  %v2377 = vunpack.c.h.b16 %v1957
  %v2378 = vunpack.c.l.b16 %v1958
  %v2379 = vunpack.c.h.b16 %v1958
  %v2380 = vunpack.c.l.b16 %v1959
  %v2381 = vunpack.c.h.b16 %v1959
  %v2382 = vunpack.c.l.b16 %v1960
  %v2383 = vunpack.c.l.b16 %v1961
  %v2384 = vunpack.c.h.b16 %v1961
  %v2385 = vunpack.c.l.b16 %v1962
  %v2386 = vunpack.c.h.b16 %v1962
  %v2387 = vunpack.c.l.b16 %v1963
  %v2388 = vunpack.c.h.b16 %v1963
  %v2389 = vunpack.c.l.b16 %v1964
  %v2390 = vunpack.c.l.b16 %v1965
  %v2391 = vunpack.c.h.b16 %v1965
  %v2392 = vunpack.c.l.b16 %v1966
  %v2393 = vunpack.c.h.b16 %v1966
  %v2394 = vunpack.c.l.b16 %v1967
  %v2395 = vunpack.c.h.b16 %v1967
  %v2396 = vunpack.c.l.b16 %v1968
  %v2397 = vunpack.c.l.b16 %v1969
  %v2398 = vunpack.c.h.b16 %v1969
  %v2399 = vunpack.c.l.b16 %v1970
  %v2400 = vunpack.c.h.b16 %v1970
  %v2401 = vunpack.c.l.b16 %v1971
  %v2402 = vunpack.c.h.b16 %v1971
  %v2403 = vunpack.c.l.b16 %v1972
  %v2404 = vunpack.c.l.b16 %v1973
  %v2405 = vunpack.c.h.b16 %v1973
  %v2406 = vunpack.c.l.b16 %v1974
  %v2407 = vunpack.c.h.b16 %v1974
  %v2408 = vunpack.c.l.b16 %v1975
  %v2409 = vunpack.c.h.b16 %v1975
  %v2410 = vunpack.c.l.b16 %v1976
  %v2411 = vunpack.c.l.b16 %v1977
  %v2412 = vunpack.c.h.b16 %v1977
  %v2413 = vunpack.c.l.b16 %v1978
  %v2414 = vunpack.c.h.b16 %v1978
  %v2415 = vunpack.c.l.b16 %v1979
  %v2416 = vunpack.c.h.b16 %v1979
  %v2417 = vunpack.c.l.b16 %v1980
  %v2418 = vunpack.c.l.b16 %v1981
  %v2419 = vunpack.c.h.b16 %v1981
  %v2420 = vunpack.c.l.b16 %v1982
  %v2421 = vunpack.c.h.b16 %v1982
  %v2422 = vunpack.c.l.b16 %v1983
  %v2423 = vunpack.c.h.b16 %v1983
  %v2424 = vunpack.c.l.b16 %v1984
  %v2425 = vunpack.c.l.b16 %v1985
  %v2426 = vunpack.c.h.b16 %v1985
  %v2427 = vunpack.c.l.b16 %v1986
  %v2428 = vunpack.c.h.b16 %v1986
  %v2429 = vunpack.c.l.b16 %v1987
  %v2430 = vunpack.c.h.b16 %v1987
  %v2431 = vunpack.c.l.b16 %v1988
  %v2432 = vunpack.c.l.b16 %v1989
  %v2433 = vunpack.c.h.b16 %v1989
  %v2434 = vunpack.c.l.b16 %v1990
  %v2435 = vunpack.c.h.b16 %v1990
  %v2436 = vunpack.c.l.b16 %v1991
  %v2437 = vunpack.c.h.b16 %v1991
  %v2438 = vunpack.c.l.b16 %v1992
  %v2439 = vunpack.c.l.b16 %v1993
  %v2440 = vunpack.c.h.b16 %v1993
  %v2441 = vunpack.c.l.b16 %v1994
  %v2442 = vunpack.c.h.b16 %v1994
  %v2443 = vunpack.c.l.b16 %v1995
  %v2444 = vunpack.c.h.b16 %v1995
  %v2445 = vunpack.c.l.b16 %v1996
  %v2446 = vunpack.c.l.b16 %v1997
  %v2447 = vunpack.c.h.b16 %v1997
  %v2448 = vunpack.c.l.b16 %v1998
  %v2449 = vunpack.c.h.b16 %v1998
  %v2450 = vunpack.c.l.b16 %v1999
  %v2451 = vunpack.c.h.b16 %v1999
  %v2452 = vunpack.c.l.b16 %v2000
  %v2453 = vunpack.c.l.b16 %v2001
  %v2454 = vunpack.c.h.b16 %v2001
  %v2455 = vunpack.c.l.b16 %v2002
  %v2456 = vunpack.c.h.b16 %v2002
  %v2457 = vunpack.c.l.b16 %v2003
  %v2458 = vunpack.c.h.b16 %v2003
  %v2459 = vunpack.c.l.b16 %v2004
  %v2460 = vunpack.c.l.b16 %v2005
  %v2461 = vunpack.c.h.b16 %v2005
  %v2462 = vunpack.c.l.b16 %v2006
  %v2463 = vunpack.c.h.b16 %v2006
  %v2464 = vunpack.c.l.b16 %v2007
  %v2465 = vunpack.c.h.b16 %v2007
  %v2466 = vunpack.c.l.b16 %v2008
  %v2467 = vunpack.c.l.b16 %v2009
  %v2468 = vunpack.c.h.b16 %v2009
  %v2469 = vunpack.c.l.b16 %v2010
  %v2470 = vunpack.c.h.b16 %v2010
  %v2471 = vunpack.c.l.b16 %v2011
  %v2472 = vunpack.c.h.b16 %v2011
  %v2473 = vunpack.c.l.b16 %v2012
  %v2474 = vunpack.c.l.b16 %v2013
  %v2475 = vunpack.c.h.b16 %v2013
  %v2476 = vunpack.c.l.b16 %v2014
  %v2477 = vunpack.c.h.b16 %v2014
  %v2478 = vunpack.c.l.b16 %v2015
  %v2479 = vunpack.c.h.b16 %v2015
  %v2480 = vunpack.c.l.b16 %v2016
  %v2481 = vunpack.c.l.b16 %v2017
  %v2482 = vunpack.c.h.b16 %v2017
  %v2483 = vunpack.c.l.b16 %v2018
  %v2484 = vunpack.c.h.b16 %v2018
  %v2485 = vunpack.c.l.b16 %v2019
  %v2486 = vunpack.c.h.b16 %v2019
  %v2487 = vunpack.c.l.b16 %v2020
  %v2488 = vunpack.c.l.b16 %v2021
  %v2489 = vunpack.c.h.b16 %v2021
  %v2490 = vunpack.c.l.b16 %v2022
  %v2491 = vunpack.c.h.b16 %v2022
  %v2492 = vunpack.c.l.b16 %v2023
  %v2493 = vunpack.c.h.b16 %v2023
  %v2494 = vunpack.c.l.b16 %v2024
  %v2495 = vunpack.c.l.b16 %v2025
  %v2496 = vunpack.c.h.b16 %v2025
  %v2497 = vunpack.c.l.b16 %v2026
  %v2498 = vunpack.c.h.b16 %v2026
  %v2499 = vunpack.c.l.b16 %v2027
  %v2500 = vunpack.c.h.b16 %v2027
  %v2501 = vunpack.c.l.b16 %v2028
  %v2502 = vunpack.c.l.b16 %v2029
  %v2503 = vunpack.c.h.b16 %v2029
  %v2504 = vunpack.c.l.b16 %v2030
  %v2505 = vunpack.c.h.b16 %v2030
  %v2506 = vunpack.c.l.b16 %v2031
  %v2507 = vunpack.c.h.b16 %v2031
  %v2508 = vunpack.c.l.b16 %v2032
  %v2509 = vunpack.c.l.b16 %v2033
  %v2510 = vunpack.c.h.b16 %v2033
  %v2511 = vunpack.c.l.b16 %v2034
  %v2512 = vunpack.c.h.b16 %v2034
  %v2513 = vunpack.c.l.b16 %v2035
  %v2514 = vunpack.c.h.b16 %v2035
  %v2515 = vunpack.c.l.b16 %v2036
  %v2516 = vunpack.c.l.b16 %v2037
  %v2517 = vunpack.c.h.b16 %v2037
  %v2518 = vunpack.c.l.b16 %v2038
  %v2519 = vunpack.c.h.b16 %v2038
  %v2520 = vunpack.c.l.b16 %v2039
  %v2521 = vunpack.c.h.b16 %v2039
  %v2522 = vunpack.c.l.b16 %v2040
  %v2523 = vunpack.c.l.b16 %v2041
  %v2524 = vunpack.c.h.b16 %v2041
  %v2525 = vunpack.c.l.b16 %v2042
  %v2526 = vunpack.c.h.b16 %v2042
  %v2527 = vunpack.c.l.b16 %v2043
  %v2528 = vunpack.c.h.b16 %v2043
  %v2529 = vunpack.c.l.b16 %v2044
  %v2530 = vunpack.c.l.b16 %v2045
  %v2531 = vunpack.c.h.b16 %v2045
  %v2532 = vunpack.c.l.b16 %v2046
  %v2533 = vunpack.c.h.b16 %v2046
  %v2534 = vunpack.c.l.b16 %v2047
  %v2535 = vunpack.c.h.b16 %v2047
  %v2536 = vunpack.c.l.b16 %v2048
  %v2537 = vunpack.c.l.b16 %v2049
  %v2538 = vunpack.c.h.b16 %v2049
  %v2539 = vunpack.c.l.b16 %v2050
  %v2540 = vunpack.c.h.b16 %v2050
  %v2541 = vunpack.c.l.b16 %v2051
  %v2542 = vunpack.c.h.b16 %v2051
  %v2543 = vunpack.c.l.b16 %v2052
  %v2544 = vunpack.c.l.b16 %v2053
  %v2545 = vunpack.c.h.b16 %v2053
  %v2546 = vunpack.c.l.b16 %v2054
  %v2547 = vunpack.c.h.b16 %v2054
  %v2548 = vunpack.c.l.b16 %v2055
  %v2549 = vunpack.c.h.b16 %v2055
  %v2550 = vunpack.c.l.b16 %v2056
  %v2551 = vunpack.c.l.b16 %v2057
  %v2552 = vunpack.c.h.b16 %v2057
  %v2553 = vunpack.c.l.b16 %v2058
  %v2554 = vunpack.c.h.b16 %v2058
  %v2555 = vunpack.c.l.b16 %v2059
  %v2556 = vunpack.c.h.b16 %v2059
  %v2557 = vunpack.c.l.b16 %v2060
  %v2558 = vunpack.c.l.b16 %v2061
  %v2559 = vunpack.c.h.b16 %v2061
  %v2560 = vunpack.c.l.b16 %v2062
  %v2561 = vunpack.c.h.b16 %v2062
  %v2562 = vunpack.c.l.b16 %v2063
  %v2563 = vunpack.c.h.b16 %v2063
  %v2564 = vunpack.c.l.b16 %v2064
  %v2565 = vunpack.c.l.b16 %v2065
  %v2566 = vunpack.c.h.b16 %v2065
  %v2567 = vunpack.c.l.b16 %v2066
  %v2568 = vunpack.c.h.b16 %v2066
  %v2569 = vunpack.c.l.b16 %v2067
  %v2570 = vunpack.c.h.b16 %v2067
  %v2571 = vunpack.c.l.b16 %v2068
  %v2572 = vunpack.c.l.b16 %v2069
  %v2573 = vunpack.c.h.b16 %v2069
  %v2574 = vunpack.c.l.b16 %v2070
  %v2575 = vunpack.c.h.b16 %v2070
  %v2576 = vunpack.c.l.b16 %v2071
  %v2577 = vunpack.c.h.b16 %v2071
  %v2578 = vunpack.c.l.b16 %v2072
  %v2579 = vunpack.c.l.b16 %v2073
  %v2580 = vunpack.c.h.b16 %v2073
  %v2581 = vunpack.c.l.b16 %v2074
  %v2582 = vunpack.c.h.b16 %v2074
  %v2583 = vunpack.c.l.b16 %v2075
  %v2584 = vunpack.c.h.b16 %v2075
  %v2585 = vunpack.c.l.b16 %v2076
  %v2586 = vunpack.c.l.b16 %v2077
  %v2587 = vunpack.c.h.b16 %v2077
  %v2588 = vunpack.c.l.b16 %v2078
  %v2589 = vunpack.c.h.b16 %v2078
  %v2590 = vunpack.c.l.b16 %v2079
  %v2591 = vunpack.c.h.b16 %v2079
  %v2592 = vunpack.c.l.b16 %v2080
  %v2593 = vunpack.c.l.b16 %v2081
  %v2594 = vunpack.c.h.b16 %v2081
  %v2595 = vunpack.c.l.b16 %v2082
  %v2596 = vunpack.c.h.b16 %v2082
  %v2597 = vunpack.c.l.b16 %v2083
  %v2598 = vunpack.c.h.b16 %v2083
  %v2599 = vunpack.c.l.b16 %v2084
  %v2600 = vunpack.c.l.b16 %v2085
  %v2601 = vunpack.c.h.b16 %v2085
  %v2602 = vunpack.c.l.b16 %v2086
  %v2603 = vunpack.c.h.b16 %v2086
  %v2604 = vunpack.c.l.b16 %v2087
  %v2605 = vunpack.c.h.b16 %v2087
  %v2606 = vunpack.c.l.b16 %v2088
  %v2607 = vunpack.c.l.b16 %v2089
  %v2608 = vunpack.c.h.b16 %v2089
  %v2609 = vunpack.c.l.b16 %v2090
  %v2610 = vunpack.c.h.b16 %v2090
  %v2611 = vunpack.c.l.b16 %v2091
  %v2612 = vunpack.c.h.b16 %v2091
  %v2613 = vunpack.c.l.b16 %v2092
  %v2614 = vunpack.c.l.b16 %v2093
  %v2615 = vunpack.c.h.b16 %v2093
  %v2616 = vunpack.c.l.b16 %v2094
  %v2617 = vunpack.c.h.b16 %v2094
  %v2618 = vunpack.c.l.b16 %v2095
  %v2619 = vunpack.c.h.b16 %v2095
  %v2620 = vunpack.c.l.b16 %v2096
  %v2621 = vunpack.c.l.b16 %v2097
  %v2622 = vunpack.c.h.b16 %v2097
  %v2623 = vunpack.c.l.b16 %v2098
  %v2624 = vunpack.c.h.b16 %v2098
  %v2625 = vunpack.c.l.b16 %v2099
  %v2626 = vunpack.c.h.b16 %v2099
  %v2627 = vunpack.c.l.b16 %v2100
  %v2628 = vunpack.c.l.b16 %v2101
  %v2629 = vunpack.c.h.b16 %v2101
  %v2630 = vunpack.c.l.b16 %v2102
  %v2631 = vunpack.c.h.b16 %v2102
  %v2632 = vunpack.c.l.b16 %v2103
  %v2633 = vunpack.c.h.b16 %v2103
  %v2634 = vunpack.c.l.b16 %v2104
  %v2635 = vunpack.c.l.b16 %v2105
  %v2636 = vunpack.c.h.b16 %v2105
  %v2637 = vunpack.c.l.b16 %v2106
  %v2638 = vunpack.c.h.b16 %v2106
  %v2639 = vunpack.c.l.b16 %v2107
  %v2640 = vunpack.c.h.b16 %v2107
  %v2641 = vunpack.c.l.b16 %v2108
  %v2642 = vunpack.c.l.b16 %v2109
  %v2643 = vunpack.c.h.b16 %v2109
  %v2644 = vunpack.c.l.b16 %v2110
  %v2645 = vunpack.c.h.b16 %v2110
  %v2646 = vunpack.c.l.b16 %v2111
  %v2647 = vunpack.c.h.b16 %v2111
  %v2648 = vunpack.c.l.b16 %v2112
  %v2649 = vunpack.c.l.b16 %v2113
  %v2650 = vunpack.c.h.b16 %v2113
  %v2651 = vunpack.c.l.b16 %v2114
  %v2652 = vunpack.c.h.b16 %v2114
  %v2653 = vunpack.c.l.b16 %v2115
  %v2654 = vunpack.c.h.b16 %v2115
  %v2655 = vunpack.c.l.b16 %v2116
  %v2656 = vunpack.c.l.b16 %v2117
  %v2657 = vunpack.c.h.b16 %v2117
  %v2658 = vunpack.c.l.b16 %v2118
  %v2659 = vunpack.c.h.b16 %v2118
  %v2660 = vunpack.c.l.b16 %v2119
  %v2661 = vunpack.c.h.b16 %v2119
  %v2662 = vunpack.c.l.b16 %v2120
  %v2663 = vunpack.c.l.b16 %v2121
  %v2664 = vunpack.c.h.b16 %v2121
  %v2665 = vunpack.c.l.b16 %v2122
  %v2666 = vunpack.c.h.b16 %v2122
  %v2667 = vunpack.c.l.b16 %v2123
  %v2668 = vunpack.c.h.b16 %v2123
  %v2669 = vunpack.c.l.b16 %v2124
  %v2670 = vunpack.c.l.b16 %v2125
  %v2671 = vunpack.c.h.b16 %v2125
  %v2672 = vunpack.c.l.b16 %v2126
  %v2673 = vunpack.c.h.b16 %v2126
  %v2674 = vunpack.c.l.b16 %v2127
  %v2675 = vunpack.c.h.b16 %v2127
  %v2676 = vunpack.c.l.b16 %v2128
  %v2677 = vunpack.c.l.b16 %v2129
  %v2678 = vunpack.c.h.b16 %v2129
  %v2679 = vunpack.c.l.b16 %v2130
  %v2680 = vunpack.c.h.b16 %v2130
  %v2681 = vunpack.c.l.b16 %v2131
  %v2682 = vunpack.c.h.b16 %v2131
  %v2683 = vunpack.c.l.b16 %v2132
  %v2684 = vunpack.c.l.b16 %v2133
  %v2685 = vunpack.c.h.b16 %v2133
  %v2686 = vunpack.c.l.b16 %v2134
  %v2687 = vunpack.c.h.b16 %v2134
  %v2688 = vunpack.c.l.b16 %v2135
  %v2689 = vunpack.c.h.b16 %v2135
  %v2690 = vunpack.c.l.b16 %v2136
  %v2691 = vunpack.c.l.b16 %v2137
  %v2692 = vunpack.c.h.b16 %v2137
  %v2693 = vunpack.c.l.b16 %v2138
  %v2694 = vunpack.c.h.b16 %v2138
  %v2695 = vunpack.c.l.b16 %v2139
  %v2696 = vunpack.c.h.b16 %v2139
  %v2697 = vunpack.c.l.b16 %v2140
  %v2698 = vunpack.c.l.b16 %v2141
  %v2699 = vunpack.c.h.b16 %v2141
  %v2700 = vunpack.c.l.b16 %v2142
  %v2701 = vunpack.c.h.b16 %v2142
  %v2702 = vunpack.c.l.b16 %v2143
  %v2703 = vunpack.c.h.b16 %v2143
  %v2704 = vunpack.c.l.b16 %v2144
  %v2705 = vunpack.c.l.b16 %v2145
  %v2706 = vunpack.c.h.b16 %v2145
  %v2707 = vunpack.c.l.b16 %v2146
  %v2708 = vunpack.c.h.b16 %v2146
  %v2709 = vunpack.c.l.b16 %v2147
  %v2710 = vunpack.c.h.b16 %v2147
  %v2711 = vunpack.c.l.b16 %v2148
  %v2712 = vunpack.c.l.b16 %v2149
  %v2713 = vunpack.c.h.b16 %v2149
  %v2714 = vunpack.c.l.b16 %v2150
  %v2715 = vunpack.c.h.b16 %v2150
  %v2716 = vunpack.c.l.b16 %v2151
  %v2717 = vunpack.c.h.b16 %v2151
  %v2718 = vunpack.c.l.b16 %v2152
  %v2719 = vpack.c.b16 %v2376, %v2369
  %v2720 = vpack.c.b16 %v2377, %v2370
  %v2721 = vpack.c.b16 %v2378, %v2371
  %v2722 = vpack.c.b16 %v2379, %v2372
  %v2723 = vpack.c.b16 %v2380, %v2373
  %v2724 = vpack.c.b16 %v2381, %v2374
  %v2725 = vpack.c.b16 %v2382, %v2375
  %v2726 = vpack.c.b16 %v2390, %v2383
  %v2727 = vpack.c.b16 %v2391, %v2384
  %v2728 = vpack.c.b16 %v2392, %v2385
  %v2729 = vpack.c.b16 %v2393, %v2386
  %v2730 = vpack.c.b16 %v2394, %v2387
  %v2731 = vpack.c.b16 %v2395, %v2388
  %v2732 = vpack.c.b16 %v2396, %v2389
  %v2733 = vpack.c.b16 %v2404, %v2397
  %v2734 = vpack.c.b16 %v2405, %v2398
  %v2735 = vpack.c.b16 %v2406, %v2399
  %v2736 = vpack.c.b16 %v2407, %v2400
  %v2737 = vpack.c.b16 %v2408, %v2401
  %v2738 = vpack.c.b16 %v2409, %v2402
  %v2739 = vpack.c.b16 %v2410, %v2403
  %v2740 = vpack.c.b16 %v2418, %v2411
  %v2741 = vpack.c.b16 %v2419, %v2412
  %v2742 = vpack.c.b16 %v2420, %v2413
  %v2743 = vpack.c.b16 %v2421, %v2414
  %v2744 = vpack.c.b16 %v2422, %v2415
  %v2745 = vpack.c.b16 %v2423, %v2416
  %v2746 = vpack.c.b16 %v2424, %v2417
  %v2747 = vpack.c.b16 %v2432, %v2425
  %v2748 = vpack.c.b16 %v2433, %v2426
  %v2749 = vpack.c.b16 %v2434, %v2427
  %v2750 = vpack.c.b16 %v2435, %v2428
  %v2751 = vpack.c.b16 %v2436, %v2429
  %v2752 = vpack.c.b16 %v2437, %v2430
  %v2753 = vpack.c.b16 %v2438, %v2431
  %v2754 = vpack.c.b16 %v2446, %v2439
  %v2755 = vpack.c.b16 %v2447, %v2440
  %v2756 = vpack.c.b16 %v2448, %v2441
  %v2757 = vpack.c.b16 %v2449, %v2442
  %v2758 = vpack.c.b16 %v2450, %v2443
  %v2759 = vpack.c.b16 %v2451, %v2444
  %v2760 = vpack.c.b16 %v2452, %v2445
  %v2761 = vpack.c.b16 %v2460, %v2453
  %v2762 = vpack.c.b16 %v2461, %v2454
  %v2763 = vpack.c.b16 %v2462, %v2455
  %v2764 = vpack.c.b16 %v2463, %v2456
  %v2765 = vpack.c.b16 %v2464, %v2457
  %v2766 = vpack.c.b16 %v2465, %v2458
  %v2767 = vpack.c.b16 %v2466, %v2459
  %v2768 = vpack.c.b16 %v2474, %v2467
  %v2769 = vpack.c.b16 %v2475, %v2468
  %v2770 = vpack.c.b16 %v2476, %v2469
  %v2771 = vpack.c.b16 %v2477, %v2470
  %v2772 = vpack.c.b16 %v2478, %v2471
  %v2773 = vpack.c.b16 %v2479, %v2472
  %v2774 = vpack.c.b16 %v2480, %v2473
  %v2775 = vpack.c.b16 %v2488, %v2481
  %v2776 = vpack.c.b16 %v2489, %v2482
  %v2777 = vpack.c.b16 %v2490, %v2483
  %v2778 = vpack.c.b16 %v2491, %v2484
  %v2779 = vpack.c.b16 %v2492, %v2485
  %v2780 = vpack.c.b16 %v2493, %v2486
  %v2781 = vpack.c.b16 %v2494, %v2487
  %v2782 = vpack.c.b16 %v2502, %v2495
  %v2783 = vpack.c.b16 %v2503, %v2496
  %v2784 = vpack.c.b16 %v2504, %v2497
  %v2785 = vpack.c.b16 %v2505, %v2498
  %v2786 = vpack.c.b16 %v2506, %v2499
  %v2787 = vpack.c.b16 %v2507, %v2500
  %v2788 = vpack.c.b16 %v2508, %v2501
  %v2789 = vpack.c.b16 %v2516, %v2509
  %v2790 = vpack.c.b16 %v2517, %v2510
  %v2791 = vpack.c.b16 %v2518, %v2511
  %v2792 = vpack.c.b16 %v2519, %v2512
  %v2793 = vpack.c.b16 %v2520, %v2513
  %v2794 = vpack.c.b16 %v2521, %v2514
  %v2795 = vpack.c.b16 %v2522, %v2515
  %v2796 = vpack.c.b16 %v2530, %v2523
  %v2797 = vpack.c.b16 %v2531, %v2524
  %v2798 = vpack.c.b16 %v2532, %v2525
  %v2799 = vpack.c.b16 %v2533, %v2526
  %v2800 = vpack.c.b16 %v2534, %v2527
  %v2801 = vpack.c.b16 %v2535, %v2528
  %v2802 = vpack.c.b16 %v2536, %v2529
  %v2803 = vpack.c.b16 %v2544, %v2537
  %v2804 = vpack.c.b16 %v2545, %v2538
  %v2805 = vpack.c.b16 %v2546, %v2539
  %v2806 = vpack.c.b16 %v2547, %v2540
  %v2807 = vpack.c.b16 %v2548, %v2541
  %v2808 = vpack.c.b16 %v2549, %v2542
  %v2809 = vpack.c.b16 %v2550, %v2543
  %v2810 = vpack.c.b16 %v2558, %v2551
  %v2811 = vpack.c.b16 %v2559, %v2552
  %v2812 = vpack.c.b16 %v2560, %v2553
  %v2813 = vpack.c.b16 %v2561, %v2554
  %v2814 = vpack.c.b16 %v2562, %v2555
  %v2815 = vpack.c.b16 %v2563, %v2556
  %v2816 = vpack.c.b16 %v2564, %v2557
  %v2817 = vpack.c.b16 %v2572, %v2565
  %v2818 = vpack.c.b16 %v2573, %v2566
  %v2819 = vpack.c.b16 %v2574, %v2567
  %v2820 = vpack.c.b16 %v2575, %v2568
  %v2821 = vpack.c.b16 %v2576, %v2569
  %v2822 = vpack.c.b16 %v2577, %v2570
  %v2823 = vpack.c.b16 %v2578, %v2571
  %v2824 = vpack.c.b16 %v2586, %v2579
  %v2825 = vpack.c.b16 %v2587, %v2580
  %v2826 = vpack.c.b16 %v2588, %v2581
  %v2827 = vpack.c.b16 %v2589, %v2582
  %v2828 = vpack.c.b16 %v2590, %v2583
  %v2829 = vpack.c.b16 %v2591, %v2584
  %v2830 = vpack.c.b16 %v2592, %v2585
  %v2831 = vpack.c.b16 %v2600, %v2593
  %v2832 = vpack.c.b16 %v2601, %v2594
  %v2833 = vpack.c.b16 %v2602, %v2595
  %v2834 = vpack.c.b16 %v2603, %v2596
  %v2835 = vpack.c.b16 %v2604, %v2597
  %v2836 = vpack.c.b16 %v2605, %v2598
  %v2837 = vpack.c.b16 %v2606, %v2599
  %v2838 = vpack.c.b16 %v2614, %v2607
  %v2839 = vpack.c.b16 %v2615, %v2608
  %v2840 = vpack.c.b16 %v2616, %v2609
  %v2841 = vpack.c.b16 %v2617, %v2610
  %v2842 = vpack.c.b16 %v2618, %v2611
  %v2843 = vpack.c.b16 %v2619, %v2612
  %v2844 = vpack.c.b16 %v2620, %v2613
  %v2845 = vpack.c.b16 %v2628, %v2621
  %v2846 = vpack.c.b16 %v2629, %v2622
  %v2847 = vpack.c.b16 %v2630, %v2623
  %v2848 = vpack.c.b16 %v2631, %v2624
  %v2849 = vpack.c.b16 %v2632, %v2625
  %v2850 = vpack.c.b16 %v2633, %v2626
  %v2851 = vpack.c.b16 %v2634, %v2627
  %v2852 = vpack.c.b16 %v2642, %v2635
  %v2853 = vpack.c.b16 %v2643, %v2636
  %v2854 = vpack.c.b16 %v2644, %v2637
  %v2855 = vpack.c.b16 %v2645, %v2638
  %v2856 = vpack.c.b16 %v2646, %v2639
  %v2857 = vpack.c.b16 %v2647, %v2640
  %v2858 = vpack.c.b16 %v2648, %v2641
  %v2859 = vpack.c.b16 %v2656, %v2649
  %v2860 = vpack.c.b16 %v2657, %v2650
  %v2861 = vpack.c.b16 %v2658, %v2651
  %v2862 = vpack.c.b16 %v2659, %v2652
  %v2863 = vpack.c.b16 %v2660, %v2653
  %v2864 = vpack.c.b16 %v2661, %v2654
  %v2865 = vpack.c.b16 %v2662, %v2655
  %v2866 = vpack.c.b16 %v2670, %v2663
  %v2867 = vpack.c.b16 %v2671, %v2664
  %v2868 = vpack.c.b16 %v2672, %v2665
  %v2869 = vpack.c.b16 %v2673, %v2666
  %v2870 = vpack.c.b16 %v2674, %v2667
  %v2871 = vpack.c.b16 %v2675, %v2668
  %v2872 = vpack.c.b16 %v2676, %v2669
  %v2873 = vpack.c.b16 %v2684, %v2677
  %v2874 = vpack.c.b16 %v2685, %v2678
  %v2875 = vpack.c.b16 %v2686, %v2679
  %v2876 = vpack.c.b16 %v2687, %v2680
  %v2877 = vpack.c.b16 %v2688, %v2681
  %v2878 = vpack.c.b16 %v2689, %v2682
  %v2879 = vpack.c.b16 %v2690, %v2683
  %v2880 = vpack.c.b16 %v2698, %v2691
  %v2881 = vpack.c.b16 %v2699, %v2692
  %v2882 = vpack.c.b16 %v2700, %v2693
  %v2883 = vpack.c.b16 %v2701, %v2694
  %v2884 = vpack.c.b16 %v2702, %v2695
  %v2885 = vpack.c.b16 %v2703, %v2696
  %v2886 = vpack.c.b16 %v2704, %v2697
  %v2887 = vpack.c.b16 %v2712, %v2705
  %v2888 = vpack.c.b16 %v2713, %v2706
  %v2889 = vpack.c.b16 %v2714, %v2707
  %v2890 = vpack.c.b16 %v2715, %v2708
  %v2891 = vpack.c.b16 %v2716, %v2709
  %v2892 = vpack.c.b16 %v2717, %v2710
  %v2893 = vpack.c.b16 %v2718, %v2711
  %v3070 = vsel %vm1245, %v1952, 0
  %3072 = vmatpush.bf16.msra.mxu0 %v2768
  %3073 = vmatpush.bf16.msra.mxu0 %v2761
  %3074 = vmatpush.bf16.msra.mxu0 %v2754
  %3075 = vmatpush.bf16.msra.mxu0 %v2747
  %3076 = vmatpush.bf16.msra.mxu0 %v2740
  %3077 = vmatpush.bf16.msra.mxu0 %v2733
  %3078 = vmatpush.bf16.msra.mxu0 %v2726
  %3079 = vmatpush.bf16.msra.mxu0 %v2719
  %3080 = vmatmul.bf16.gmra.mxu0 %v1949
  %v3081 = vpop.f32.mrf.mxu0
  %v3082 = vadd.f32 %v2155, %v3081
  %v3083 = vpop.f32.mrf.mxu0
  %v3084 = vadd.f32 %v2155, %v3083
  %3085 = vdwg.mxu0
  %3086 = vmatpush.bf16.msra.mxu0 %v2824
  %3087 = vmatpush.bf16.msra.mxu0 %v2817
  %3088 = vmatpush.bf16.msra.mxu0 %v2810
  %3089 = vmatpush.bf16.msra.mxu0 %v2803
  %3090 = vmatpush.bf16.msra.mxu0 %v2796
  %3091 = vmatpush.bf16.msra.mxu0 %v2789
  %3092 = vmatpush.bf16.msra.mxu0 %v2782
  %3093 = vmatpush.bf16.msra.mxu0 %v2775
  %3094 = vmatmul.bf16.gmra.mxu0 %v1950
  %v3095 = vpop.f32.mrf.mxu0
  %v3096 = vadd.f32 %v3082, %v3095
  %v3097 = vpop.f32.mrf.mxu0
  %v3098 = vadd.f32 %v3084, %v3097
  %3099 = vdwg.mxu0
  %3100 = vmatpush.bf16.msra.mxu0 %v2880
  %3101 = vmatpush.bf16.msra.mxu0 %v2873
  %3102 = vmatpush.bf16.msra.mxu0 %v2866
  %3103 = vmatpush.bf16.msra.mxu0 %v2859
  %3104 = vmatpush.bf16.msra.mxu0 %v2852
  %3105 = vmatpush.bf16.msra.mxu0 %v2845
  %3106 = vmatpush.bf16.msra.mxu0 %v2838
  %3107 = vmatpush.bf16.msra.mxu0 %v2831
  %3108 = vmatmul.bf16.gmra.mxu0 %v1951
  %v3109 = vpop.f32.mrf.mxu0
  %v3110 = vadd.f32 %v3096, %v3109
  %v3111 = vpop.f32.mrf.mxu0
  %v3112 = vadd.f32 %v3098, %v3111
  %3113 = vdwg.mxu0
  %3114 = vmatpush.bf16.msra.mxu0 0
  %3115 = vmatpush.bf16.msra.mxu0 0
  %3116 = vmatpush.bf16.msra.mxu0 0
  %3117 = vmatpush.bf16.msra.mxu0 0
  %3118 = vmatpush.bf16.msra.mxu0 0
  %3119 = vmatpush.bf16.msra.mxu0 0
  %3120 = vmatpush.bf16.msra.mxu0 0
  %3121 = vmatpush.bf16.msra.mxu0 %v2887
  %3122 = vmatmul.bf16.gmra.mxu0 %v3070
  %v3123 = vpop.f32.mrf.mxu0
  %v3124 = vadd.f32 %v3110, %v3123
  %v3125 = vpop.f32.mrf.mxu0
  %v3126 = vadd.f32 %v3112, %v3125
  %3127 = vdwg.mxu0
  %3128 = vmatpush.bf16.msra.mxu0 %v2769
  %3129 = vmatpush.bf16.msra.mxu0 %v2762
  %3130 = vmatpush.bf16.msra.mxu0 %v2755
  %3131 = vmatpush.bf16.msra.mxu0 %v2748
  %3132 = vmatpush.bf16.msra.mxu0 %v2741
  %3133 = vmatpush.bf16.msra.mxu0 %v2734
  %3134 = vmatpush.bf16.msra.mxu0 %v2727
  %3135 = vmatpush.bf16.msra.mxu0 %v2720
  %3136 = vmatmul.bf16.gmra.mxu0 %v1949
  %v3137 = vpop.f32.mrf.mxu0
  %v3138 = vadd.f32 %v2156, %v3137
  %v3139 = vpop.f32.mrf.mxu0
  %v3140 = vadd.f32 %v2156, %v3139
  %3141 = vdwg.mxu0
  %3142 = vmatpush.bf16.msra.mxu0 %v2825
  %3143 = vmatpush.bf16.msra.mxu0 %v2818
  %3144 = vmatpush.bf16.msra.mxu0 %v2811
  %3145 = vmatpush.bf16.msra.mxu0 %v2804
  %3146 = vmatpush.bf16.msra.mxu0 %v2797
  %3147 = vmatpush.bf16.msra.mxu0 %v2790
  %3148 = vmatpush.bf16.msra.mxu0 %v2783
  %3149 = vmatpush.bf16.msra.mxu0 %v2776
  %3150 = vmatmul.bf16.gmra.mxu0 %v1950
  %v3151 = vpop.f32.mrf.mxu0
  %v3152 = vadd.f32 %v3138, %v3151
  %v3153 = vpop.f32.mrf.mxu0
  %v3154 = vadd.f32 %v3140, %v3153
  %3155 = vdwg.mxu0
  %3156 = vmatpush.bf16.msra.mxu0 %v2881
  %3157 = vmatpush.bf16.msra.mxu0 %v2874
  %3158 = vmatpush.bf16.msra.mxu0 %v2867
  %3159 = vmatpush.bf16.msra.mxu0 %v2860
  %3160 = vmatpush.bf16.msra.mxu0 %v2853
  %3161 = vmatpush.bf16.msra.mxu0 %v2846
  %3162 = vmatpush.bf16.msra.mxu0 %v2839
  %3163 = vmatpush.bf16.msra.mxu0 %v2832
  %3164 = vmatmul.bf16.gmra.mxu0 %v1951
  %v3165 = vpop.f32.mrf.mxu0
  %v3166 = vadd.f32 %v3152, %v3165
  %v3167 = vpop.f32.mrf.mxu0
  %v3168 = vadd.f32 %v3154, %v3167
  %3169 = vdwg.mxu0
  %3170 = vmatpush.bf16.msra.mxu0 0
  %3171 = vmatpush.bf16.msra.mxu0 0
  %3172 = vmatpush.bf16.msra.mxu0 0
  %3173 = vmatpush.bf16.msra.mxu0 0
  %3174 = vmatpush.bf16.msra.mxu0 0
  %3175 = vmatpush.bf16.msra.mxu0 0
  %3176 = vmatpush.bf16.msra.mxu0 0
  %3177 = vmatpush.bf16.msra.mxu0 %v2888
  %3178 = vmatmul.bf16.gmra.mxu0 %v3070
  %v3179 = vpop.f32.mrf.mxu0
  %v3180 = vadd.f32 %v3166, %v3179
  %v3181 = vpop.f32.mrf.mxu0
  %v3182 = vadd.f32 %v3168, %v3181
  %3183 = vdwg.mxu0
  %3184 = vmatpush.bf16.msra.mxu0 %v2770
  %3185 = vmatpush.bf16.msra.mxu0 %v2763
  %3186 = vmatpush.bf16.msra.mxu0 %v2756
  %3187 = vmatpush.bf16.msra.mxu0 %v2749
  %3188 = vmatpush.bf16.msra.mxu0 %v2742
  %3189 = vmatpush.bf16.msra.mxu0 %v2735
  %3190 = vmatpush.bf16.msra.mxu0 %v2728
  %3191 = vmatpush.bf16.msra.mxu0 %v2721
  %3192 = vmatmul.bf16.gmra.mxu0 %v1949
  %v3193 = vpop.f32.mrf.mxu0
  %v3194 = vadd.f32 %v2157, %v3193
  %v3195 = vpop.f32.mrf.mxu0
  %v3196 = vadd.f32 %v2157, %v3195
  %3197 = vdwg.mxu0
  %3198 = vmatpush.bf16.msra.mxu0 %v2826
  %3199 = vmatpush.bf16.msra.mxu0 %v2819
  %3200 = vmatpush.bf16.msra.mxu0 %v2812
  %3201 = vmatpush.bf16.msra.mxu0 %v2805
  %3202 = vmatpush.bf16.msra.mxu0 %v2798
  %3203 = vmatpush.bf16.msra.mxu0 %v2791
  %3204 = vmatpush.bf16.msra.mxu0 %v2784
  %3205 = vmatpush.bf16.msra.mxu0 %v2777
  %3206 = vmatmul.bf16.gmra.mxu0 %v1950
  %v3207 = vpop.f32.mrf.mxu0
  %v3208 = vadd.f32 %v3194, %v3207
  %v3209 = vpop.f32.mrf.mxu0
  %v3210 = vadd.f32 %v3196, %v3209
  %3211 = vdwg.mxu0
  %3212 = vmatpush.bf16.msra.mxu0 %v2882
  %3213 = vmatpush.bf16.msra.mxu0 %v2875
  %3214 = vmatpush.bf16.msra.mxu0 %v2868
  %3215 = vmatpush.bf16.msra.mxu0 %v2861
  %3216 = vmatpush.bf16.msra.mxu0 %v2854
  %3217 = vmatpush.bf16.msra.mxu0 %v2847
  %3218 = vmatpush.bf16.msra.mxu0 %v2840
  %3219 = vmatpush.bf16.msra.mxu0 %v2833
  %3220 = vmatmul.bf16.gmra.mxu0 %v1951
  %v3221 = vpop.f32.mrf.mxu0
  %v3222 = vadd.f32 %v3208, %v3221
  %v3223 = vpop.f32.mrf.mxu0
  %v3224 = vadd.f32 %v3210, %v3223
  %3225 = vdwg.mxu0
  %3226 = vmatpush.bf16.msra.mxu0 0
  %3227 = vmatpush.bf16.msra.mxu0 0
  %3228 = vmatpush.bf16.msra.mxu0 0
  %3229 = vmatpush.bf16.msra.mxu0 0
  %3230 = vmatpush.bf16.msra.mxu0 0
  %3231 = vmatpush.bf16.msra.mxu0 0
  %3232 = vmatpush.bf16.msra.mxu0 0
  %3233 = vmatpush.bf16.msra.mxu0 %v2889
  %3234 = vmatmul.bf16.gmra.mxu0 %v3070
  %v3235 = vpop.f32.mrf.mxu0
  %v3236 = vadd.f32 %v3222, %v3235
  %v3237 = vpop.f32.mrf.mxu0
  %v3238 = vadd.f32 %v3224, %v3237
  %3239 = vdwg.mxu0
  %3240 = vmatpush.bf16.msra.mxu0 %v2771
  %3241 = vmatpush.bf16.msra.mxu0 %v2764
  %3242 = vmatpush.bf16.msra.mxu0 %v2757
  %3243 = vmatpush.bf16.msra.mxu0 %v2750
  %3244 = vmatpush.bf16.msra.mxu0 %v2743
  %3245 = vmatpush.bf16.msra.mxu0 %v2736
  %3246 = vmatpush.bf16.msra.mxu0 %v2729
  %3247 = vmatpush.bf16.msra.mxu0 %v2722
  %3248 = vmatmul.bf16.gmra.mxu0 %v1949
  %v3249 = vpop.f32.mrf.mxu0
  %v3250 = vadd.f32 %v2158, %v3249
  %v3251 = vpop.f32.mrf.mxu0
  %v3252 = vadd.f32 %v2158, %v3251
  %3253 = vdwg.mxu0
  %3254 = vmatpush.bf16.msra.mxu0 %v2827
  %3255 = vmatpush.bf16.msra.mxu0 %v2820
  %3256 = vmatpush.bf16.msra.mxu0 %v2813
  %3257 = vmatpush.bf16.msra.mxu0 %v2806
  %3258 = vmatpush.bf16.msra.mxu0 %v2799
  %3259 = vmatpush.bf16.msra.mxu0 %v2792
  %3260 = vmatpush.bf16.msra.mxu0 %v2785
  %3261 = vmatpush.bf16.msra.mxu0 %v2778
  %3262 = vmatmul.bf16.gmra.mxu0 %v1950
  %v3263 = vpop.f32.mrf.mxu0
  %v3264 = vadd.f32 %v3250, %v3263
  %v3265 = vpop.f32.mrf.mxu0
  %v3266 = vadd.f32 %v3252, %v3265
  %3267 = vdwg.mxu0
  %3268 = vmatpush.bf16.msra.mxu0 %v2883
  %3269 = vmatpush.bf16.msra.mxu0 %v2876
  %3270 = vmatpush.bf16.msra.mxu0 %v2869
  %3271 = vmatpush.bf16.msra.mxu0 %v2862
  %3272 = vmatpush.bf16.msra.mxu0 %v2855
  %3273 = vmatpush.bf16.msra.mxu0 %v2848
  %3274 = vmatpush.bf16.msra.mxu0 %v2841
  %3275 = vmatpush.bf16.msra.mxu0 %v2834
  %3276 = vmatmul.bf16.gmra.mxu0 %v1951
  %v3277 = vpop.f32.mrf.mxu0
  %v3278 = vadd.f32 %v3264, %v3277
  %v3279 = vpop.f32.mrf.mxu0
  %v3280 = vadd.f32 %v3266, %v3279
  %3281 = vdwg.mxu0
  %3282 = vmatpush.bf16.msra.mxu0 0
  %3283 = vmatpush.bf16.msra.mxu0 0
  %3284 = vmatpush.bf16.msra.mxu0 0
  %3285 = vmatpush.bf16.msra.mxu0 0
  %3286 = vmatpush.bf16.msra.mxu0 0
  %3287 = vmatpush.bf16.msra.mxu0 0
  %3288 = vmatpush.bf16.msra.mxu0 0
  %3289 = vmatpush.bf16.msra.mxu0 %v2890
  %3290 = vmatmul.bf16.gmra.mxu0 %v3070
  %v3291 = vpop.f32.mrf.mxu0
  %v3292 = vadd.f32 %v3278, %v3291
  %v3293 = vpop.f32.mrf.mxu0
  %v3294 = vadd.f32 %v3280, %v3293
  %3295 = vdwg.mxu0
  %3296 = vmatpush.bf16.msra.mxu0 %v2772
  %3297 = vmatpush.bf16.msra.mxu0 %v2765
  %3298 = vmatpush.bf16.msra.mxu0 %v2758
  %3299 = vmatpush.bf16.msra.mxu0 %v2751
  %3300 = vmatpush.bf16.msra.mxu0 %v2744
  %3301 = vmatpush.bf16.msra.mxu0 %v2737
  %3302 = vmatpush.bf16.msra.mxu0 %v2730
  %3303 = vmatpush.bf16.msra.mxu0 %v2723
  %3304 = vmatmul.bf16.gmra.mxu0 %v1949
  %v3305 = vpop.f32.mrf.mxu0
  %v3306 = vadd.f32 %v2159, %v3305
  %v3307 = vpop.f32.mrf.mxu0
  %v3308 = vadd.f32 %v2159, %v3307
  %3309 = vdwg.mxu0
  %3310 = vmatpush.bf16.msra.mxu0 %v2828
  %3311 = vmatpush.bf16.msra.mxu0 %v2821
  %3312 = vmatpush.bf16.msra.mxu0 %v2814
  %3313 = vmatpush.bf16.msra.mxu0 %v2807
  %3314 = vmatpush.bf16.msra.mxu0 %v2800
  %3315 = vmatpush.bf16.msra.mxu0 %v2793
  %3316 = vmatpush.bf16.msra.mxu0 %v2786
  %3317 = vmatpush.bf16.msra.mxu0 %v2779
  %3318 = vmatmul.bf16.gmra.mxu0 %v1950
  %v3319 = vpop.f32.mrf.mxu0
  %v3320 = vadd.f32 %v3306, %v3319
  %v3321 = vpop.f32.mrf.mxu0
  %v3322 = vadd.f32 %v3308, %v3321
  %3323 = vdwg.mxu0
  %3324 = vmatpush.bf16.msra.mxu0 %v2884
  %3325 = vmatpush.bf16.msra.mxu0 %v2877
  %3326 = vmatpush.bf16.msra.mxu0 %v2870
  %3327 = vmatpush.bf16.msra.mxu0 %v2863
  %3328 = vmatpush.bf16.msra.mxu0 %v2856
  %3329 = vmatpush.bf16.msra.mxu0 %v2849
  %3330 = vmatpush.bf16.msra.mxu0 %v2842
  %3331 = vmatpush.bf16.msra.mxu0 %v2835
  %3332 = vmatmul.bf16.gmra.mxu0 %v1951
  %v3333 = vpop.f32.mrf.mxu0
  %v3334 = vadd.f32 %v3320, %v3333
  %v3335 = vpop.f32.mrf.mxu0
  %v3336 = vadd.f32 %v3322, %v3335
  %3337 = vdwg.mxu0
  %3338 = vmatpush.bf16.msra.mxu0 0
  %3339 = vmatpush.bf16.msra.mxu0 0
  %3340 = vmatpush.bf16.msra.mxu0 0
  %3341 = vmatpush.bf16.msra.mxu0 0
  %3342 = vmatpush.bf16.msra.mxu0 0
  %3343 = vmatpush.bf16.msra.mxu0 0
  %3344 = vmatpush.bf16.msra.mxu0 0
  %3345 = vmatpush.bf16.msra.mxu0 %v2891
  %3346 = vmatmul.bf16.gmra.mxu0 %v3070
  %v3347 = vpop.f32.mrf.mxu0
  %v3348 = vadd.f32 %v3334, %v3347
  %v3349 = vpop.f32.mrf.mxu0
  %v3350 = vadd.f32 %v3336, %v3349
  %3351 = vdwg.mxu0
  %3352 = vmatpush.bf16.msra.mxu0 %v2773
  %3353 = vmatpush.bf16.msra.mxu0 %v2766
  %3354 = vmatpush.bf16.msra.mxu0 %v2759
  %3355 = vmatpush.bf16.msra.mxu0 %v2752
  %3356 = vmatpush.bf16.msra.mxu0 %v2745
  %3357 = vmatpush.bf16.msra.mxu0 %v2738
  %3358 = vmatpush.bf16.msra.mxu0 %v2731
  %3359 = vmatpush.bf16.msra.mxu0 %v2724
  %3360 = vmatmul.bf16.gmra.mxu0 %v1949
  %v3361 = vpop.f32.mrf.mxu0
  %v3362 = vadd.f32 %v2160, %v3361
  %v3363 = vpop.f32.mrf.mxu0
  %v3364 = vadd.f32 %v2160, %v3363
  %3365 = vdwg.mxu0
  %3366 = vmatpush.bf16.msra.mxu0 %v2829
  %3367 = vmatpush.bf16.msra.mxu0 %v2822
  %3368 = vmatpush.bf16.msra.mxu0 %v2815
  %3369 = vmatpush.bf16.msra.mxu0 %v2808
  %3370 = vmatpush.bf16.msra.mxu0 %v2801
  %3371 = vmatpush.bf16.msra.mxu0 %v2794
  %3372 = vmatpush.bf16.msra.mxu0 %v2787
  %3373 = vmatpush.bf16.msra.mxu0 %v2780
  %3374 = vmatmul.bf16.gmra.mxu0 %v1950
  %v3375 = vpop.f32.mrf.mxu0
  %v3376 = vadd.f32 %v3362, %v3375
  %v3377 = vpop.f32.mrf.mxu0
  %v3378 = vadd.f32 %v3364, %v3377
  %3379 = vdwg.mxu0
  %3380 = vmatpush.bf16.msra.mxu0 %v2885
  %3381 = vmatpush.bf16.msra.mxu0 %v2878
  %3382 = vmatpush.bf16.msra.mxu0 %v2871
  %3383 = vmatpush.bf16.msra.mxu0 %v2864
  %3384 = vmatpush.bf16.msra.mxu0 %v2857
  %3385 = vmatpush.bf16.msra.mxu0 %v2850
  %3386 = vmatpush.bf16.msra.mxu0 %v2843
  %3387 = vmatpush.bf16.msra.mxu0 %v2836
  %3388 = vmatmul.bf16.gmra.mxu0 %v1951
  %v3389 = vpop.f32.mrf.mxu0
  %v3390 = vadd.f32 %v3376, %v3389
  %v3391 = vpop.f32.mrf.mxu0
  %v3392 = vadd.f32 %v3378, %v3391
  %3393 = vdwg.mxu0
  %3394 = vmatpush.bf16.msra.mxu0 0
  %3395 = vmatpush.bf16.msra.mxu0 0
  %3396 = vmatpush.bf16.msra.mxu0 0
  %3397 = vmatpush.bf16.msra.mxu0 0
  %3398 = vmatpush.bf16.msra.mxu0 0
  %3399 = vmatpush.bf16.msra.mxu0 0
  %3400 = vmatpush.bf16.msra.mxu0 0
  %3401 = vmatpush.bf16.msra.mxu0 %v2892
  %3402 = vmatmul.bf16.gmra.mxu0 %v3070
  %v3403 = vpop.f32.mrf.mxu0
  %v3404 = vadd.f32 %v3390, %v3403
  %v3405 = vpop.f32.mrf.mxu0
  %v3406 = vadd.f32 %v3392, %v3405
  %3407 = vdwg.mxu0
  %3408 = vmatpush.bf16.msra.mxu0 %v2774
  %3409 = vmatpush.bf16.msra.mxu0 %v2767
  %3410 = vmatpush.bf16.msra.mxu0 %v2760
  %3411 = vmatpush.bf16.msra.mxu0 %v2753
  %3412 = vmatpush.bf16.msra.mxu0 %v2746
  %3413 = vmatpush.bf16.msra.mxu0 %v2739
  %3414 = vmatpush.bf16.msra.mxu0 %v2732
  %3415 = vmatpush.bf16.msra.mxu0 %v2725
  %3416 = vmatmul.bf16.gmra.mxu0 %v1949
  %v3417 = vpop.f32.mrf.mxu0
  %v3418 = vadd.f32 %v2161, %v3417
  %v3419 = vpop.f32.mrf.mxu0
  %v3420 = vadd.f32 %v2161, %v3419
  %3421 = vdwg.mxu0
  %3422 = vmatpush.bf16.msra.mxu0 %v2830
  %3423 = vmatpush.bf16.msra.mxu0 %v2823
  %3424 = vmatpush.bf16.msra.mxu0 %v2816
  %3425 = vmatpush.bf16.msra.mxu0 %v2809
  %3426 = vmatpush.bf16.msra.mxu0 %v2802
  %3427 = vmatpush.bf16.msra.mxu0 %v2795
  %3428 = vmatpush.bf16.msra.mxu0 %v2788
  %3429 = vmatpush.bf16.msra.mxu0 %v2781
  %3430 = vmatmul.bf16.gmra.mxu0 %v1950
  %v3431 = vpop.f32.mrf.mxu0
  %v3432 = vadd.f32 %v3418, %v3431
  %v3433 = vpop.f32.mrf.mxu0
  %v3434 = vadd.f32 %v3420, %v3433
  %3435 = vdwg.mxu0
  %3436 = vmatpush.bf16.msra.mxu0 %v2886
  %3437 = vmatpush.bf16.msra.mxu0 %v2879
  %3438 = vmatpush.bf16.msra.mxu0 %v2872
  %3439 = vmatpush.bf16.msra.mxu0 %v2865
  %3440 = vmatpush.bf16.msra.mxu0 %v2858
  %3441 = vmatpush.bf16.msra.mxu0 %v2851
  %3442 = vmatpush.bf16.msra.mxu0 %v2844
  %3443 = vmatpush.bf16.msra.mxu0 %v2837
  %3444 = vmatmul.bf16.gmra.mxu0 %v1951
  %v3445 = vpop.f32.mrf.mxu0
  %v3446 = vadd.f32 %v3432, %v3445
  %v3447 = vpop.f32.mrf.mxu0
  %v3448 = vadd.f32 %v3434, %v3447
  %3449 = vdwg.mxu0
  %3450 = vmatpush.bf16.msra.mxu0 0
  %3451 = vmatpush.bf16.msra.mxu0 0
  %3452 = vmatpush.bf16.msra.mxu0 0
  %3453 = vmatpush.bf16.msra.mxu0 0
  %3454 = vmatpush.bf16.msra.mxu0 0
  %3455 = vmatpush.bf16.msra.mxu0 0
  %3456 = vmatpush.bf16.msra.mxu0 0
  %3457 = vmatpush.bf16.msra.mxu0 %v2893
  %3458 = vmatmul.bf16.gmra.mxu0 %v3070
  %v3459 = vpop.f32.mrf.mxu0
  %v3460 = vadd.f32 %v3446, %v3459
  %v3461 = vpop.f32.mrf.mxu0
  %v3462 = vadd.f32 %v3448, %v3461
  %3463 = vdwg.mxu0
  %v3464 = vxor.u32 %v3124, 2147483648
  %v3465 = vxor.u32 %v3180, 2147483648
  %v3466 = vxor.u32 %v3236, 2147483648
  %v3467 = vxor.u32 %v3292, 2147483648
  %v3468 = vxor.u32 %v3348, 2147483648
  %v3469 = vxor.u32 %v3404, 2147483648
  %v3470 = vxor.u32 %v3460, 2147483648
  %v3471 = vxor.u32 %v3126, 2147483648
  %v3472 = vxor.u32 %v3182, 2147483648
  %v3473 = vxor.u32 %v3238, 2147483648
  %v3474 = vxor.u32 %v3294, 2147483648
  %v3475 = vxor.u32 %v3350, 2147483648
  %v3476 = vxor.u32 %v3406, 2147483648
  %v3477 = vxor.u32 %v3462, 2147483648
  %v3478 = vmul.f32 %v3464, 1.442695
  %v3479 = vpow.pop %v3478
  %v3480 = vmul.f32 %v3465, 1.442695
  %v3481 = vpow.pop %v3480
  %v3482 = vmul.f32 %v3466, 1.442695
  %v3483 = vpow.pop %v3482
  %v3484 = vmul.f32 %v3467, 1.442695
  %v3485 = vpow.pop %v3484
  %v3486 = vmul.f32 %v3468, 1.442695
  %v3487 = vpow.pop %v3486
  %v3488 = vmul.f32 %v3469, 1.442695
  %v3489 = vpow.pop %v3488
  %v3490 = vmul.f32 %v3470, 1.442695
  %v3491 = vpow.pop %v3490
  %v3492 = vmul.f32 %v3471, 1.442695
  %v3493 = vpow.pop %v3492
  %v3494 = vmul.f32 %v3472, 1.442695
  %v3495 = vpow.pop %v3494
  %v3496 = vmul.f32 %v3473, 1.442695
  %v3497 = vpow.pop %v3496
  %v3498 = vmul.f32 %v3474, 1.442695
  %v3499 = vpow.pop %v3498
  %v3500 = vmul.f32 %v3475, 1.442695
  %v3501 = vpow.pop %v3500
  %v3502 = vmul.f32 %v3476, 1.442695
  %v3503 = vpow.pop %v3502
  %v3504 = vmul.f32 %v3477, 1.442695
  %v3505 = vpow.pop %v3504
  %v3506 = vadd.f32 %v3479, 1.0
  %v3507 = vadd.f32 %v3481, 1.0
  %v3508 = vadd.f32 %v3483, 1.0
  %v3509 = vadd.f32 %v3485, 1.0
  %v3510 = vadd.f32 %v3487, 1.0
  %v3511 = vadd.f32 %v3489, 1.0
  %v3512 = vadd.f32 %v3491, 1.0
  %v3513 = vadd.f32 %v3493, 1.0
  %v3514 = vadd.f32 %v3495, 1.0
  %v3515 = vadd.f32 %v3497, 1.0
  %v3516 = vadd.f32 %v3499, 1.0
  %v3517 = vadd.f32 %v3501, 1.0
  %v3518 = vadd.f32 %v3503, 1.0
  %v3519 = vadd.f32 %v3505, 1.0
  %v3520 = vrcp.pop %v3506
  %v3521 = vmul.f32 %v3506, %v3520
  %v3522 = vsub.f32 1.0, %v3521
  %v3523 = vmul.f32 %v3520, %v3522
  %v3524 = vadd.f32 %v3520, %v3523
  %vm3525 = vweird.f32 %v3506
  %vm3526 = vweird.f32 %v3520
  %vm3527 = vmor %vm3525, %vm3526
  %v3528 = vsel %vm3527, %v3520, %v3524
  %v3529 = vand.u32 2147483647, %v3506
  %vm3530 = vcmp.eq.f32.partialorder %v3529, 8.507059e+37
  %v3531 = vand.u32 %v3506, 2147483648
  %v3532 = vor.u32 1.1754944e-38, %v3531
  %v3533 = vsel %vm3530, %v3532, %v3528
  %v3534 = vmul.f32 1.0, %v3533
  %v3535 = vrcp.pop %v3507
  %v3536 = vmul.f32 %v3507, %v3535
  %v3537 = vsub.f32 1.0, %v3536
  %v3538 = vmul.f32 %v3535, %v3537
  %v3539 = vadd.f32 %v3535, %v3538
  %vm3540 = vweird.f32 %v3507
  %vm3541 = vweird.f32 %v3535
  %vm3542 = vmor %vm3540, %vm3541
  %v3543 = vsel %vm3542, %v3535, %v3539
  %v3544 = vand.u32 2147483647, %v3507
  %vm3545 = vcmp.eq.f32.partialorder %v3544, 8.507059e+37
  %v3546 = vand.u32 %v3507, 2147483648
  %v3547 = vor.u32 1.1754944e-38, %v3546
  %v3548 = vsel %vm3545, %v3547, %v3543
  %v3549 = vmul.f32 1.0, %v3548
  %v3550 = vrcp.pop %v3508
  %v3551 = vmul.f32 %v3508, %v3550
  %v3552 = vsub.f32 1.0, %v3551
  %v3553 = vmul.f32 %v3550, %v3552
  %v3554 = vadd.f32 %v3550, %v3553
  %vm3555 = vweird.f32 %v3508
  %vm3556 = vweird.f32 %v3550
  %vm3557 = vmor %vm3555, %vm3556
  %v3558 = vsel %vm3557, %v3550, %v3554
  %v3559 = vand.u32 2147483647, %v3508
  %vm3560 = vcmp.eq.f32.partialorder %v3559, 8.507059e+37
  %v3561 = vand.u32 %v3508, 2147483648
  %v3562 = vor.u32 1.1754944e-38, %v3561
  %v3563 = vsel %vm3560, %v3562, %v3558
  %v3564 = vmul.f32 1.0, %v3563
  %v3565 = vrcp.pop %v3509
  %v3566 = vmul.f32 %v3509, %v3565
  %v3567 = vsub.f32 1.0, %v3566
  %v3568 = vmul.f32 %v3565, %v3567
  %v3569 = vadd.f32 %v3565, %v3568
  %vm3570 = vweird.f32 %v3509
  %vm3571 = vweird.f32 %v3565
  %vm3572 = vmor %vm3570, %vm3571
  %v3573 = vsel %vm3572, %v3565, %v3569
  %v3574 = vand.u32 2147483647, %v3509
  %vm3575 = vcmp.eq.f32.partialorder %v3574, 8.507059e+37
  %v3576 = vand.u32 %v3509, 2147483648
  %v3577 = vor.u32 1.1754944e-38, %v3576
  %v3578 = vsel %vm3575, %v3577, %v3573
  %v3579 = vmul.f32 1.0, %v3578
  %v3580 = vrcp.pop %v3510
  %v3581 = vmul.f32 %v3510, %v3580
  %v3582 = vsub.f32 1.0, %v3581
  %v3583 = vmul.f32 %v3580, %v3582
  %v3584 = vadd.f32 %v3580, %v3583
  %vm3585 = vweird.f32 %v3510
  %vm3586 = vweird.f32 %v3580
  %vm3587 = vmor %vm3585, %vm3586
  %v3588 = vsel %vm3587, %v3580, %v3584
  %v3589 = vand.u32 2147483647, %v3510
  %vm3590 = vcmp.eq.f32.partialorder %v3589, 8.507059e+37
  %v3591 = vand.u32 %v3510, 2147483648
  %v3592 = vor.u32 1.1754944e-38, %v3591
  %v3593 = vsel %vm3590, %v3592, %v3588
  %v3594 = vmul.f32 1.0, %v3593
  %v3595 = vrcp.pop %v3511
  %v3596 = vmul.f32 %v3511, %v3595
  %v3597 = vsub.f32 1.0, %v3596
  %v3598 = vmul.f32 %v3595, %v3597
  %v3599 = vadd.f32 %v3595, %v3598
  %vm3600 = vweird.f32 %v3511
  %vm3601 = vweird.f32 %v3595
  %vm3602 = vmor %vm3600, %vm3601
  %v3603 = vsel %vm3602, %v3595, %v3599
  %v3604 = vand.u32 2147483647, %v3511
  %vm3605 = vcmp.eq.f32.partialorder %v3604, 8.507059e+37
  %v3606 = vand.u32 %v3511, 2147483648
  %v3607 = vor.u32 1.1754944e-38, %v3606
  %v3608 = vsel %vm3605, %v3607, %v3603
  %v3609 = vmul.f32 1.0, %v3608
  %v3610 = vrcp.pop %v3512
  %v3611 = vmul.f32 %v3512, %v3610
  %v3612 = vsub.f32 1.0, %v3611
  %v3613 = vmul.f32 %v3610, %v3612
  %v3614 = vadd.f32 %v3610, %v3613
  %vm3615 = vweird.f32 %v3512
  %vm3616 = vweird.f32 %v3610
  %vm3617 = vmor %vm3615, %vm3616
  %v3618 = vsel %vm3617, %v3610, %v3614
  %v3619 = vand.u32 2147483647, %v3512
  %vm3620 = vcmp.eq.f32.partialorder %v3619, 8.507059e+37
  %v3621 = vand.u32 %v3512, 2147483648
  %v3622 = vor.u32 1.1754944e-38, %v3621
  %v3623 = vsel %vm3620, %v3622, %v3618
  %v3624 = vmul.f32 1.0, %v3623
  %v3625 = vrcp.pop %v3513
  %v3626 = vmul.f32 %v3513, %v3625
  %v3627 = vsub.f32 1.0, %v3626
  %v3628 = vmul.f32 %v3625, %v3627
  %v3629 = vadd.f32 %v3625, %v3628
  %vm3630 = vweird.f32 %v3513
  %vm3631 = vweird.f32 %v3625
  %vm3632 = vmor %vm3630, %vm3631
  %v3633 = vsel %vm3632, %v3625, %v3629
  %v3634 = vand.u32 2147483647, %v3513
  %vm3635 = vcmp.eq.f32.partialorder %v3634, 8.507059e+37
  %v3636 = vand.u32 %v3513, 2147483648
  %v3637 = vor.u32 1.1754944e-38, %v3636
  %v3638 = vsel %vm3635, %v3637, %v3633
  %v3639 = vmul.f32 1.0, %v3638
  %v3640 = vrcp.pop %v3514
  %v3641 = vmul.f32 %v3514, %v3640
  %v3642 = vsub.f32 1.0, %v3641
  %v3643 = vmul.f32 %v3640, %v3642
  %v3644 = vadd.f32 %v3640, %v3643
  %vm3645 = vweird.f32 %v3514
  %vm3646 = vweird.f32 %v3640
  %vm3647 = vmor %vm3645, %vm3646
  %v3648 = vsel %vm3647, %v3640, %v3644
  %v3649 = vand.u32 2147483647, %v3514
  %vm3650 = vcmp.eq.f32.partialorder %v3649, 8.507059e+37
  %v3651 = vand.u32 %v3514, 2147483648
  %v3652 = vor.u32 1.1754944e-38, %v3651
  %v3653 = vsel %vm3650, %v3652, %v3648
  %v3654 = vmul.f32 1.0, %v3653
  %v3655 = vrcp.pop %v3515
  %v3656 = vmul.f32 %v3515, %v3655
  %v3657 = vsub.f32 1.0, %v3656
  %v3658 = vmul.f32 %v3655, %v3657
  %v3659 = vadd.f32 %v3655, %v3658
  %vm3660 = vweird.f32 %v3515
  %vm3661 = vweird.f32 %v3655
  %vm3662 = vmor %vm3660, %vm3661
  %v3663 = vsel %vm3662, %v3655, %v3659
  %v3664 = vand.u32 2147483647, %v3515
  %vm3665 = vcmp.eq.f32.partialorder %v3664, 8.507059e+37
  %v3666 = vand.u32 %v3515, 2147483648
  %v3667 = vor.u32 1.1754944e-38, %v3666
  %v3668 = vsel %vm3665, %v3667, %v3663
  %v3669 = vmul.f32 1.0, %v3668
  %v3670 = vrcp.pop %v3516
  %v3671 = vmul.f32 %v3516, %v3670
  %v3672 = vsub.f32 1.0, %v3671
  %v3673 = vmul.f32 %v3670, %v3672
  %v3674 = vadd.f32 %v3670, %v3673
  %vm3675 = vweird.f32 %v3516
  %vm3676 = vweird.f32 %v3670
  %vm3677 = vmor %vm3675, %vm3676
  %v3678 = vsel %vm3677, %v3670, %v3674
  %v3679 = vand.u32 2147483647, %v3516
  %vm3680 = vcmp.eq.f32.partialorder %v3679, 8.507059e+37
  %v3681 = vand.u32 %v3516, 2147483648
  %v3682 = vor.u32 1.1754944e-38, %v3681
  %v3683 = vsel %vm3680, %v3682, %v3678
  %v3684 = vmul.f32 1.0, %v3683
  %v3685 = vrcp.pop %v3517
  %v3686 = vmul.f32 %v3517, %v3685
  %v3687 = vsub.f32 1.0, %v3686
  %v3688 = vmul.f32 %v3685, %v3687
  %v3689 = vadd.f32 %v3685, %v3688
  %vm3690 = vweird.f32 %v3517
  %vm3691 = vweird.f32 %v3685
  %vm3692 = vmor %vm3690, %vm3691
  %v3693 = vsel %vm3692, %v3685, %v3689
  %v3694 = vand.u32 2147483647, %v3517
  %vm3695 = vcmp.eq.f32.partialorder %v3694, 8.507059e+37
  %v3696 = vand.u32 %v3517, 2147483648
  %v3697 = vor.u32 1.1754944e-38, %v3696
  %v3698 = vsel %vm3695, %v3697, %v3693
  %v3699 = vmul.f32 1.0, %v3698
  %v3700 = vrcp.pop %v3518
  %v3701 = vmul.f32 %v3518, %v3700
  %v3702 = vsub.f32 1.0, %v3701
  %v3703 = vmul.f32 %v3700, %v3702
  %v3704 = vadd.f32 %v3700, %v3703
  %vm3705 = vweird.f32 %v3518
  %vm3706 = vweird.f32 %v3700
  %vm3707 = vmor %vm3705, %vm3706
  %v3708 = vsel %vm3707, %v3700, %v3704
  %v3709 = vand.u32 2147483647, %v3518
  %vm3710 = vcmp.eq.f32.partialorder %v3709, 8.507059e+37
  %v3711 = vand.u32 %v3518, 2147483648
  %v3712 = vor.u32 1.1754944e-38, %v3711
  %v3713 = vsel %vm3710, %v3712, %v3708
  %v3714 = vmul.f32 1.0, %v3713
  %v3715 = vrcp.pop %v3519
  %v3716 = vmul.f32 %v3519, %v3715
  %v3717 = vsub.f32 1.0, %v3716
  %v3718 = vmul.f32 %v3715, %v3717
  %v3719 = vadd.f32 %v3715, %v3718
  %vm3720 = vweird.f32 %v3519
  %vm3721 = vweird.f32 %v3715
  %vm3722 = vmor %vm3720, %vm3721
  %v3723 = vsel %vm3722, %v3715, %v3719
  %v3724 = vand.u32 2147483647, %v3519
  %vm3725 = vcmp.eq.f32.partialorder %v3724, 8.507059e+37
  %v3726 = vand.u32 %v3519, 2147483648
  %v3727 = vor.u32 1.1754944e-38, %v3726
  %v3728 = vsel %vm3725, %v3727, %v3723
  %v3729 = vmul.f32 1.0, %v3728
  %v3730 = vpack.c.bf16 %v3549, %v3534
  %v3731 = vpack.c.bf16 %v3579, %v3564
  %v3732 = vpack.c.bf16 %v3609, %v3594
  %v3733 = vpack.c.bf16 %v3624, %v3624
  %v3734 = vpack.c.bf16 %v3654, %v3639
  %v3735 = vpack.c.bf16 %v3684, %v3669
  %v3736 = vpack.c.bf16 %v3714, %v3699
  %v3737 = vpack.c.bf16 %v3729, %v3729
  %3738 = vst [vmem:[%s10] sm:$0xff] %v3730
  %3739 = vst [vmem:[%s10 + $0x8] sm:$0xff] %v3731
  %3740 = vst [vmem:[%s10 + $0x10] sm:$0xff] %v3732
  %vm3741 = vcmask 125952
  %3742 = vst.msk [vmem:[%s10 + $0x18] sm:$0xf] %vm3741, %v3733
  %3743 = vst [vmem:[%s10 + $0x1c] sm:$0xff] %v3734
  %3744 = vst [vmem:[%s10 + $0x24] sm:$0xff] %v3735
  %3745 = vst [vmem:[%s10 + $0x2c] sm:$0xff] %v3736
  %3746 = vst.msk [vmem:[%s10 + $0x34] sm:$0xf] %vm3741, %v3737
  %3747 = vst [vmem:[%s11] sm:$0xff] %v1796
  %3748 = vst [vmem:[%s11 + $0x8] sm:$0xff] %v1799
  // Predicated region
  $region42: #{vae_forward.1} parent=0 // pred_check
    _
  $region43: #{vae_forward.1} parent=0 // pred_check_branch
    %3750 = sbr.rel (0) target = $region45
  $region44: #{vae_forward.1} parent=0 // pred_region
    _
  $region45: #{vae_forward.1} parent=0 // pred_fallthru
    _
  // Predicated region
  $region46: #{vae_forward.1} parent=0 // pred_check
    _
  $region47: #{vae_forward.1} parent=0 // pred_check_branch
    %3752 = sbr.rel (0) target = $region49
  $region48: #{vae_forward.1} parent=0 // pred_region
    _
  $region49: #{vae_forward.1} parent=0 // pred_fallthru
    _
  // Predicated region
  $region50: #{vae_forward.1} parent=0 // pred_check
    _
  $region51: #{vae_forward.1} parent=0 // pred_check_branch
    %3754 = sbr.rel (0) target = $region53
  $region52: #{vae_forward.1} parent=0 // pred_region
    _
  $region53: #{vae_forward.1} parent=0 // pred_fallthru
    _
  // Predicated region
  $region54: #{vae_forward.1} parent=0 // pred_check
    _
  $region55: #{vae_forward.1} parent=0 // pred_check_branch
    %3756 = sbr.rel (0) target = $region57
  $region56: #{vae_forward.1} parent=0 // pred_region
    _
  $region57: #{vae_forward.1} parent=0 // pred_fallthru
    _

</llo_original>
